<compile_context>
chip_gen: v7x
topology: tpu7x:2x2x1
jax: 0.10.0
libtpu: 0.0.40
codegen_flags: <defaults>
</compile_context>

<pallas_src>
import math
from functools import partial

import numpy as np
import jax
import jax.numpy as jnp
from jax import lax
from jax.experimental import pallas as pl
from jax.experimental.pallas import tpu as pltpu


SUBLANES_F32 = 8     # f32 sublane count of a vreg
LANES = 128          # vreg lane count


# -----------------------------------------------------------------------------
# Fused Pallas kernel: 2-layer LSTM + MDN/pen head
# -----------------------------------------------------------------------------
def fused_lstm_mdn_kernel(x_ref, wih0_ref, whh0_ref, b0_ref,
                          wih1_ref, whh1_ref, b1_ref,
                          whead_ref, bhead_ref,
                          head_ref, hn_ref, cn_ref,
                          g_buf, h0_seq, h1_seq,
                          *, T, Bp, K):
    """
    x_ref:     (T*Bp, D)    time-major, batch-padded, flattened input
    wih*_ref:  (D|H, 4H)    pre-transposed input->gates weights
    whh*_ref:  (H, 4H)      pre-transposed hidden->gates weights
    b*_ref:    (1, 4H)      combined bias (b_ih + b_hh)
    whead_ref: (H, 128)     packed [pi | mu_x | mu_y | log_sx | log_sy | rho | pen | pad]
    bhead_ref: (1, 128)
    head_ref:  (T*Bp, 128)  activated, lane-dense output slab
    hn_ref:    (2, Bp, H)   final hidden state per layer
    cn_ref:    (2, Bp, H)   final cell state per layer
    g_buf:     (T*Bp, 4H)   VMEM scratch: batched input->gate projections
    h0_seq:    (T*Bp, H)    VMEM scratch: layer-0 hidden states over time
    h1_seq:    (T*Bp, H)    VMEM scratch: layer-1 hidden states over time
    """
    f32 = jnp.float32
    H = whh0_ref.shape[0]

    def run_layer(whh_ref, gsrc_ref, hdst_ref):
        """Serial recurrence: only h @ W_hh remains on the per-step critical path."""
        whh = whh_ref[...]                       # hoisted weight load
        h = jnp.zeros((Bp, H), f32)
        c = jnp.zeros((Bp, H), f32)
        for t in range(T):                       # fully unrolled static time loop
            g = gsrc_ref[pl.ds(t * Bp, Bp), :] + jnp.dot(
                h, whh, preferred_element_type=f32)        # (Bp, 4H)
            sg = jax.nn.sigmoid(g)               # whole-vreg activations,
            tg = jnp.tanh(g)                     # then lane-select the gates
            i = sg[:, 0 * H:1 * H]               # PyTorch gate order: i, f, g, o
            f = sg[:, 1 * H:2 * H]
            gg = tg[:, 2 * H:3 * H]
            o = sg[:, 3 * H:4 * H]
            c = f * c + i * gg
            h = o * jnp.tanh(c)
            hdst_ref[pl.ds(t * Bp, Bp), :] = h
        return h, c

    # ---- layer 0: one batched input projection, then the serial recurrence ----
    g_buf[...] = jnp.dot(x_ref[...], wih0_ref[...],
                         preferred_element_type=f32) + b0_ref[...]
    h0_f, c0_f = run_layer(whh0_ref, g_buf, h0_seq)

    # ---- layer 1 (TODO(synk): inter-layer dropout p=0.3 skipped — eval mode) ----
    g_buf[...] = jnp.dot(h0_seq[...], wih1_ref[...],
                         preferred_element_type=f32) + b1_ref[...]
    h1_f, c1_f = run_layer(whh1_ref, g_buf, h1_seq)

    hn_ref[0] = h0_f
    hn_ref[1] = h1_f
    cn_ref[0] = c0_f
    cn_ref[1] = c1_f

    # ---- fused MDN + pen head on hidden states already resident in VMEM ----
    z = jnp.dot(h1_seq[...], whead_ref[...],
                preferred_element_type=f32) + bhead_ref[...]      # (T*Bp, 128)
    col = lax.broadcasted_iota(jnp.int32, z.shape, 1)

    # softmax over the pi columns [0, K)
    logits = jnp.where(col < K, z, jnp.float32(-1e30))
    m = jnp.max(logits, axis=-1, keepdims=True)
    e = jnp.exp(logits - m)
    pi_v = e * pl.reciprocal(jnp.sum(e, axis=-1, keepdims=True), approx=True)

    exp_z = jnp.exp(z)
    tanh_z = jnp.tanh(z)
    sig_z = jax.nn.sigmoid(z)

    head_ref[...] = jnp.where(
        col < K, pi_v,                          # pi (softmax)
        jnp.where(col < 3 * K, z,               # mu_x, mu_y (identity)
        jnp.where(col < 5 * K, exp_z,           # sigma_x, sigma_y (exp)
        jnp.where(col < 6 * K, tanh_z,          # rho (tanh)
                  sig_z))))                     # pen (sigmoid); pad cols discarded


# -----------------------------------------------------------------------------
# Parameter construction (deterministic, mirrors PyTorch shapes / init rules)
# -----------------------------------------------------------------------------
def init_params(key, input_dim=3, hidden_dim=32, num_mixtures=20):
    H, D, K = hidden_dim, input_dim, num_mixtures
    ks = jax.random.split(key, 16)
    s = 1.0 / math.sqrt(H)

    def u(k, shape):
        return jax.random.uniform(k, shape, jnp.float32, -s, s)

    params = dict(
        # LSTM layer 0
        w_ih0=u(ks[0], (4 * H, D)), w_hh0=u(ks[1], (4 * H, H)),
        b_ih0=u(ks[2], (4 * H,)), b_hh0=u(ks[3], (4 * H,)),
        # LSTM layer 1
        w_ih1=u(ks[4], (4 * H, H)), w_hh1=u(ks[5], (4 * H, H)),
        b_ih1=u(ks[6], (4 * H,)), b_hh1=u(ks[7], (4 * H,)),
        # mdn_layer: weight ~ N(0, 0.01), bias default then sigma/rho entries zeroed
        w_mdn=0.01 * jax.random.normal(ks[8], (K * 6, H), jnp.float32),
        b_mdn=u(ks[9], (K * 6,)),
        # pen_layer
        w_pen=u(ks[10], (1, H)), b_pen=u(ks[11], (1,)),
    )
    sigma_rho_idx = np.array(
        [i * 6 + j for i in range(K) for j in (3, 4)] + [i * 6 + 5 for i in range(K)]
    )
    params["b_mdn"] = params["b_mdn"].at[sigma_rho_idx].set(0.0)
    return params


def prep_params(params):
    """One-time weight preprocessing, kept out of the jitted hot path."""
    f32 = jnp.float32
    H = params["w_hh0"].shape[1]
    K = params["w_mdn"].shape[0] // 6
    head_w = ((6 * K + 1 + LANES - 1) // LANES) * LANES
    pad = head_w - (6 * K + 1)

    # regroup mdn columns so each attribute is contiguous, append pen + zero pad
    perm = np.concatenate([np.arange(K) * 6 + j for j in range(6)])   # numpy const
    w_head = jnp.concatenate(
        [params["w_mdn"][perm], params["w_pen"], jnp.zeros((pad, H), f32)],
        axis=0).T                                                     # (H, 128)
    b_head = jnp.concatenate(
        [params["b_mdn"][perm], params["b_pen"], jnp.zeros((pad,), f32)]
    ).reshape(1, head_w)

    return dict(
        wih0=params["w_ih0"].T.astype(f32), whh0=params["w_hh0"].T.astype(f32),
        b0=(params["b_ih0"] + params["b_hh0"]).reshape(1, 4 * H).astype(f32),
        wih1=params["w_ih1"].T.astype(f32), whh1=params["w_hh1"].T.astype(f32),
        b1=(params["b_ih1"] + params["b_hh1"]).reshape(1, 4 * H).astype(f32),
        w_head=w_head.astype(f32), b_head=b_head.astype(f32),
    )


# -----------------------------------------------------------------------------
# Jitted wrapper
# -----------------------------------------------------------------------------
@partial(jax.jit, static_argnames=("hidden_dim", "num_mixtures"))
def handwriting_mdn_forward(x, prepped, hidden_dim=32, num_mixtures=20):
    """x: (B, T, input_dim) -> (pi, mu, sigma, rho, pen_prob, (h_n, c_n))."""
    B, T, D = x.shape
    H, K = hidden_dim, num_mixtures
    f32 = jnp.float32

    # pad batch to a full f32 sublane tile, go time-major, flatten
    Bp = ((B + SUBLANES_F32 - 1) // SUBLANES_F32) * SUBLANES_F32
    x_p = jnp.zeros((Bp, T, D), f32).at[:B].set(x.astype(f32))
    x_flat = jnp.transpose(x_p, (1, 0, 2)).reshape(T * Bp, D)

    head_w = prepped["w_head"].shape[1]
    N = T * Bp

    head, h_n_p, c_n_p = pl.pallas_call(
        partial(fused_lstm_mdn_kernel, T=T, Bp=Bp, K=K),
        out_shape=(
            jax.ShapeDtypeStruct((N, head_w), f32),   # activated MDN/pen slab
            jax.ShapeDtypeStruct((2, Bp, H), f32),    # h_n (padded batch)
            jax.ShapeDtypeStruct((2, Bp, H), f32),    # c_n (padded batch)
        ),
        scratch_shapes=[
            pltpu.VMEM((N, 4 * H), f32),              # input->gate projections
            pltpu.VMEM((N, H), f32),                  # layer-0 hidden states
            pltpu.VMEM((N, H), f32),                  # layer-1 hidden states
        ],
    )(x_flat, prepped["wih0"], prepped["whh0"], prepped["b0"],
      prepped["wih1"], prepped["whh1"], prepped["b1"],
      prepped["w_head"], prepped["b_head"])

    # back to batch-first, drop batch padding, slice the packed attribute groups
    head_bt = jnp.transpose(head.reshape(T, Bp, head_w), (1, 0, 2))[:B]   # (B,T,128)
    pi = head_bt[..., 0 * K:1 * K]
    mu = jnp.stack([head_bt[..., 1 * K:2 * K], head_bt[..., 2 * K:3 * K]], axis=3)
    sigma = jnp.stack([head_bt[..., 3 * K:4 * K], head_bt[..., 4 * K:5 * K]], axis=3)
    rho = head_bt[..., 5 * K:6 * K]
    pen_prob = head_bt[..., 6 * K:6 * K + 1]
    return pi, mu, sigma, rho, pen_prob, (h_n_p[:, :B, :], c_n_p[:, :B, :])


# -----------------------------------------------------------------------------
# Pure-JAX reference (correctness spot check)
# -----------------------------------------------------------------------------
def reference_forward(x, params, hidden_dim=32, num_mixtures=20):
    B, T, D = x.shape
    H, K = hidden_dim, num_mixtures

    def lstm_layer(xs, w_ih, w_hh, b_ih, b_hh):
        def step(carry, xt):
            h, c = carry
            g = xt @ w_ih.T + h @ w_hh.T + b_ih + b_hh
            i = jax.nn.sigmoid(g[:, :H])
            f = jax.nn.sigmoid(g[:, H:2 * H])
            gg = jnp.tanh(g[:, 2 * H:3 * H])
            o = jax.nn.sigmoid(g[:, 3 * H:])
            c = f * c + i * gg
            h = o * jnp.tanh(c)
            return (h, c), h
        (hf, cf), hs = lax.scan(step, (jnp.zeros((B, H)), jnp.zeros((B, H))),
                                jnp.transpose(xs, (1, 0, 2)))
        return jnp.transpose(hs, (1, 0, 2)), hf, cf

    y0, h0f, c0f = lstm_layer(x, params["w_ih0"], params["w_hh0"],
                              params["b_ih0"], params["b_hh0"])
    y1, h1f, c1f = lstm_layer(y0, params["w_ih1"], params["w_hh1"],
                              params["b_ih1"], params["b_hh1"])

    mdn = y1 @ params["w_mdn"].T + params["b_mdn"]
    mdn = mdn.reshape(B, T, K, 6)
    pi = jax.nn.softmax(mdn[:, :, :, 0], axis=2)
    mu = jnp.stack([mdn[:, :, :, 1], mdn[:, :, :, 2]], axis=3)
    sigma = jnp.stack([jnp.exp(mdn[:, :, :, 3]), jnp.exp(mdn[:, :, :, 4])], axis=3)
    rho = jnp.tanh(mdn[:, :, :, 5])
    pen = jax.nn.sigmoid(y1 @ params["w_pen"].T + params["b_pen"])
    h_n = jnp.stack([h0f, h1f], axis=0)
    c_n = jnp.stack([c0f, c1f], axis=0)
    return pi, mu, sigma, rho, pen, (h_n, c_n)


# -----------------------------------------------------------------------------
if __name__ == "__main__":
    B, T, D, H, K = 2, 8, 3, 32, 20

    key = jax.random.PRNGKey(0)
    k_param, k_x = jax.random.split(key)
    params = init_params(k_param, input_dim=D, hidden_dim=H, num_mixtures=K)
    prepped = prep_params(params)
    x = 0.1 * jax.random.normal(k_x, (B, T, D), jnp.float32)

    out = handwriting_mdn_forward(x, prepped, hidden_dim=H, num_mixtures=K)
    out = jax.block_until_ready(out)
    pi, mu, sigma, rho, pen_prob, (h_n, c_n) = out

    ref = reference_forward(x, params, hidden_dim=H, num_mixtures=K)
    ref_flat = (ref[0], ref[1], ref[2], ref[3], ref[4], ref[5][0], ref[5][1])
    got_flat = (pi, mu, sigma, rho, pen_prob, h_n, c_n)
    for g, r in zip(got_flat, ref_flat):
        assert g.shape == r.shape, (g.shape, r.shape)
        np.testing.assert_allclose(np.asarray(g), np.asarray(r), rtol=2e-2, atol=2e-2)

    assert pi.shape == (B, T, K) and mu.shape == (B, T, K, 2)
    assert sigma.shape == (B, T, K, 2) and rho.shape == (B, T, K)
    assert pen_prob.shape == (B, T, 1)
    assert h_n.shape == (2, B, H) and c_n.shape == (2, B, H)

    print("KERNEL_OK")
</pallas_src>

<mosaic_0001>
module attributes {stable_mosaic.version = 11 : i64} {
  func.func @fused_lstm_mdn_kernel(%arg0: memref<64x3xf32, #tpu.memory_space<vmem>>, %arg1: memref<3x128xf32, #tpu.memory_space<vmem>>, %arg2: memref<32x128xf32, #tpu.memory_space<vmem>>, %arg3: memref<1x128xf32, #tpu.memory_space<vmem>>, %arg4: memref<32x128xf32, #tpu.memory_space<vmem>>, %arg5: memref<32x128xf32, #tpu.memory_space<vmem>>, %arg6: memref<1x128xf32, #tpu.memory_space<vmem>>, %arg7: memref<32x128xf32, #tpu.memory_space<vmem>>, %arg8: memref<1x128xf32, #tpu.memory_space<vmem>>, %arg9: memref<64x128xf32, #tpu.memory_space<vmem>>, %arg10: memref<2x8x32xf32, #tpu.memory_space<vmem>>, %arg11: memref<2x8x32xf32, #tpu.memory_space<vmem>>, %arg12: memref<64x128xf32, #tpu.memory_space<vmem>>, %arg13: memref<64x32xf32, #tpu.memory_space<vmem>>, %arg14: memref<64x32xf32, #tpu.memory_space<vmem>>) attributes {dimension_semantics = [], scalar_prefetch = 0 : i64, scratch_operands = 3 : i64, tpu.core_type = #tpu.core_type<tc>} {
    %c0 = arith.constant 0 : index
    %c0_0 = arith.constant 0 : index
    %0 = vector.load %arg0[%c0, %c0_0] : memref<64x3xf32, #tpu.memory_space<vmem>>, vector<64x3xf32>
    %c0_1 = arith.constant 0 : index
    %c0_2 = arith.constant 0 : index
    %1 = vector.load %arg1[%c0_1, %c0_2] : memref<3x128xf32, #tpu.memory_space<vmem>>, vector<3x128xf32>
    %cst = arith.constant dense<0.000000e+00> : vector<64x128xf32>
    %2 = tpu.matmul %0, %1, %cst {dimension_numbers = #tpu.dot_dimension_numbers<[1], [0], [0], [1], [0, 0, 1, 1], [], []>} : vector<64x3xf32>, vector<3x128xf32>, vector<64x128xf32> -> vector<64x128xf32>
    %c0_3 = arith.constant 0 : index
    %c0_4 = arith.constant 0 : index
    %3 = vector.load %arg3[%c0_3, %c0_4] : memref<1x128xf32, #tpu.memory_space<vmem>>, vector<1x128xf32>
    %4 = vector.broadcast %3 : vector<1x128xf32> to vector<64x128xf32>
    %5 = arith.addf %2, %4 : vector<64x128xf32>
    %c0_5 = arith.constant 0 : index
    %c0_6 = arith.constant 0 : index
    %6 = vector.load %arg12[%c0_5, %c0_6] : memref<64x128xf32, #tpu.memory_space<vmem>>, vector<64x128xf32>
    tpu.vector_store %arg12[%c0_5, %c0_6], %5 {strides = array<i32>} : memref<64x128xf32, #tpu.memory_space<vmem>>, vector<64x128xf32>,
    %c0_7 = arith.constant 0 : index
    %c0_8 = arith.constant 0 : index
    %7 = vector.load %arg2[%c0_7, %c0_8] : memref<32x128xf32, #tpu.memory_space<vmem>>, vector<32x128xf32>
    %cst_9 = arith.constant 0.000000e+00 : f32
    %8 = vector.broadcast %cst_9 : f32 to vector<8x32xf32>
    %cst_10 = arith.constant 0.000000e+00 : f32
    %9 = vector.broadcast %cst_10 : f32 to vector<8x32xf32>
    %c0_11 = arith.constant 0 : index
    %c0_12 = arith.constant 0 : index
    %10 = vector.load %arg12[%c0_11, %c0_12] : memref<64x128xf32, #tpu.memory_space<vmem>>, vector<8x128xf32>
    %cst_13 = arith.constant dense<0.000000e+00> : vector<8x128xf32>
    %11 = tpu.matmul %8, %7, %cst_13 {dimension_numbers = #tpu.dot_dimension_numbers<[1], [0], [0], [1], [0, 0, 1, 1], [], []>} : vector<8x32xf32>, vector<32x128xf32>, vector<8x128xf32> -> vector<8x128xf32>
    %12 = arith.addf %10, %11 : vector<8x128xf32>
    %13 = arith.negf %12 : vector<8x128xf32>
    %14 = math.exp %13 : vector<8x128xf32>
    %cst_14 = arith.constant 1.000000e+00 : f32
    %15 = vector.broadcast %cst_14 : f32 to vector<8x128xf32>
    %16 = arith.addf %15, %14 : vector<8x128xf32>
    %17 = arith.divf %15, %16 : vector<8x128xf32>
    %18 = math.tanh %12 : vector<8x128xf32>
    %19 = vector.extract_strided_slice %17 {offsets = [0, 0], sizes = [8, 32], strides = [1, 1]} : vector<8x128xf32> to vector<8x32xf32>
    %20 = vector.extract_strided_slice %17 {offsets = [0, 32], sizes = [8, 32], strides = [1, 1]} : vector<8x128xf32> to vector<8x32xf32>
    %21 = vector.extract_strided_slice %18 {offsets = [0, 64], sizes = [8, 32], strides = [1, 1]} : vector<8x128xf32> to vector<8x32xf32>
    %22 = vector.extract_strided_slice %17 {offsets = [0, 96], sizes = [8, 32], strides = [1, 1]} : vector<8x128xf32> to vector<8x32xf32>
    %23 = arith.mulf %20, %9 : vector<8x32xf32>
    %24 = arith.mulf %19, %21 : vector<8x32xf32>
    %25 = arith.addf %23, %24 : vector<8x32xf32>
    %26 = math.tanh %25 : vector<8x32xf32>
    %27 = arith.mulf %22, %26 : vector<8x32xf32>
    %c0_15 = arith.constant 0 : index
    %c0_16 = arith.constant 0 : index
    %28 = vector.load %arg13[%c0_15, %c0_16] : memref<64x32xf32, #tpu.memory_space<vmem>>, vector<8x32xf32>
    tpu.vector_store %arg13[%c0_15, %c0_16], %27 {strides = array<i32>} : memref<64x32xf32, #tpu.memory_space<vmem>>, vector<8x32xf32>,
    %c8 = arith.constant 8 : index
    %c0_17 = arith.constant 0 : index
    %29 = vector.load %arg12[%c8, %c0_17] : memref<64x128xf32, #tpu.memory_space<vmem>>, vector<8x128xf32>
    %cst_18 = arith.constant dense<0.000000e+00> : vector<8x128xf32>
    %30 = tpu.matmul %27, %7, %cst_18 {dimension_numbers = #tpu.dot_dimension_numbers<[1], [0], [0], [1], [0, 0, 1, 1], [], []>} : vector<8x32xf32>, vector<32x128xf32>, vector<8x128xf32> -> vector<8x128xf32>
    %31 = arith.addf %29, %30 : vector<8x128xf32>
    %32 = arith.negf %31 : vector<8x128xf32>
    %33 = math.exp %32 : vector<8x128xf32>
    %cst_19 = arith.constant 1.000000e+00 : f32
    %34 = vector.broadcast %cst_19 : f32 to vector<8x128xf32>
    %35 = arith.addf %34, %33 : vector<8x128xf32>
    %36 = arith.divf %34, %35 : vector<8x128xf32>
    %37 = math.tanh %31 : vector<8x128xf32>
    %38 = vector.extract_strided_slice %36 {offsets = [0, 0], sizes = [8, 32], strides = [1, 1]} : vector<8x128xf32> to vector<8x32xf32>
    %39 = vector.extract_strided_slice %36 {offsets = [0, 32], sizes = [8, 32], strides = [1, 1]} : vector<8x128xf32> to vector<8x32xf32>
    %40 = vector.extract_strided_slice %37 {offsets = [0, 64], sizes = [8, 32], strides = [1, 1]} : vector<8x128xf32> to vector<8x32xf32>
    %41 = vector.extract_strided_slice %36 {offsets = [0, 96], sizes = [8, 32], strides = [1, 1]} : vector<8x128xf32> to vector<8x32xf32>
    %42 = arith.mulf %39, %25 : vector<8x32xf32>
    %43 = arith.mulf %38, %40 : vector<8x32xf32>
    %44 = arith.addf %42, %43 : vector<8x32xf32>
    %45 = math.tanh %44 : vector<8x32xf32>
    %46 = arith.mulf %41, %45 : vector<8x32xf32>
    %c8_20 = arith.constant 8 : index
    %c0_21 = arith.constant 0 : index
    %47 = vector.load %arg13[%c8_20, %c0_21] : memref<64x32xf32, #tpu.memory_space<vmem>>, vector<8x32xf32>
    tpu.vector_store %arg13[%c8_20, %c0_21], %46 {strides = array<i32>} : memref<64x32xf32, #tpu.memory_space<vmem>>, vector<8x32xf32>,
    %c16 = arith.constant 16 : index
    %c0_22 = arith.constant 0 : index
    %48 = vector.load %arg12[%c16, %c0_22] : memref<64x128xf32, #tpu.memory_space<vmem>>, vector<8x128xf32>
    %cst_23 = arith.constant dense<0.000000e+00> : vector<8x128xf32>
    %49 = tpu.matmul %46, %7, %cst_23 {dimension_numbers = #tpu.dot_dimension_numbers<[1], [0], [0], [1], [0, 0, 1, 1], [], []>} : vector<8x32xf32>, vector<32x128xf32>, vector<8x128xf32> -> vector<8x128xf32>
    %50 = arith.addf %48, %49 : vector<8x128xf32>
    %51 = arith.negf %50 : vector<8x128xf32>
    %52 = math.exp %51 : vector<8x128xf32>
    %cst_24 = arith.constant 1.000000e+00 : f32
    %53 = vector.broadcast %cst_24 : f32 to vector<8x128xf32>
    %54 = arith.addf %53, %52 : vector<8x128xf32>
    %55 = arith.divf %53, %54 : vector<8x128xf32>
    %56 = math.tanh %50 : vector<8x128xf32>
    %57 = vector.extract_strided_slice %55 {offsets = [0, 0], sizes = [8, 32], strides = [1, 1]} : vector<8x128xf32> to vector<8x32xf32>
    %58 = vector.extract_strided_slice %55 {offsets = [0, 32], sizes = [8, 32], strides = [1, 1]} : vector<8x128xf32> to vector<8x32xf32>
    %59 = vector.extract_strided_slice %56 {offsets = [0, 64], sizes = [8, 32], strides = [1, 1]} : vector<8x128xf32> to vector<8x32xf32>
    %60 = vector.extract_strided_slice %55 {offsets = [0, 96], sizes = [8, 32], strides = [1, 1]} : vector<8x128xf32> to vector<8x32xf32>
    %61 = arith.mulf %58, %44 : vector<8x32xf32>
    %62 = arith.mulf %57, %59 : vector<8x32xf32>
    %63 = arith.addf %61, %62 : vector<8x32xf32>
    %64 = math.tanh %63 : vector<8x32xf32>
    %65 = arith.mulf %60, %64 : vector<8x32xf32>
    %c16_25 = arith.constant 16 : index
    %c0_26 = arith.constant 0 : index
    %66 = vector.load %arg13[%c16_25, %c0_26] : memref<64x32xf32, #tpu.memory_space<vmem>>, vector<8x32xf32>
    tpu.vector_store %arg13[%c16_25, %c0_26], %65 {strides = array<i32>} : memref<64x32xf32, #tpu.memory_space<vmem>>, vector<8x32xf32>,
    %c24 = arith.constant 24 : index
    %c0_27 = arith.constant 0 : index
    %67 = vector.load %arg12[%c24, %c0_27] : memref<64x128xf32, #tpu.memory_space<vmem>>, vector<8x128xf32>
    %cst_28 = arith.constant dense<0.000000e+00> : vector<8x128xf32>
    %68 = tpu.matmul %65, %7, %cst_28 {dimension_numbers = #tpu.dot_dimension_numbers<[1], [0], [0], [1], [0, 0, 1, 1], [], []>} : vector<8x32xf32>, vector<32x128xf32>, vector<8x128xf32> -> vector<8x128xf32>
    %69 = arith.addf %67, %68 : vector<8x128xf32>
    %70 = arith.negf %69 : vector<8x128xf32>
    %71 = math.exp %70 : vector<8x128xf32>
    %cst_29 = arith.constant 1.000000e+00 : f32
    %72 = vector.broadcast %cst_29 : f32 to vector<8x128xf32>
    %73 = arith.addf %72, %71 : vector<8x128xf32>
    %74 = arith.divf %72, %73 : vector<8x128xf32>
    %75 = math.tanh %69 : vector<8x128xf32>
    %76 = vector.extract_strided_slice %74 {offsets = [0, 0], sizes = [8, 32], strides = [1, 1]} : vector<8x128xf32> to vector<8x32xf32>
    %77 = vector.extract_strided_slice %74 {offsets = [0, 32], sizes = [8, 32], strides = [1, 1]} : vector<8x128xf32> to vector<8x32xf32>
    %78 = vector.extract_strided_slice %75 {offsets = [0, 64], sizes = [8, 32], strides = [1, 1]} : vector<8x128xf32> to vector<8x32xf32>
    %79 = vector.extract_strided_slice %74 {offsets = [0, 96], sizes = [8, 32], strides = [1, 1]} : vector<8x128xf32> to vector<8x32xf32>
    %80 = arith.mulf %77, %63 : vector<8x32xf32>
    %81 = arith.mulf %76, %78 : vector<8x32xf32>
    %82 = arith.addf %80, %81 : vector<8x32xf32>
    %83 = math.tanh %82 : vector<8x32xf32>
    %84 = arith.mulf %79, %83 : vector<8x32xf32>
    %c24_30 = arith.constant 24 : index
    %c0_31 = arith.constant 0 : index
    %85 = vector.load %arg13[%c24_30, %c0_31] : memref<64x32xf32, #tpu.memory_space<vmem>>, vector<8x32xf32>
    tpu.vector_store %arg13[%c24_30, %c0_31], %84 {strides = array<i32>} : memref<64x32xf32, #tpu.memory_space<vmem>>, vector<8x32xf32>,
    %c32 = arith.constant 32 : index
    %c0_32 = arith.constant 0 : index
    %86 = vector.load %arg12[%c32, %c0_32] : memref<64x128xf32, #tpu.memory_space<vmem>>, vector<8x128xf32>
    %cst_33 = arith.constant dense<0.000000e+00> : vector<8x128xf32>
    %87 = tpu.matmul %84, %7, %cst_33 {dimension_numbers = #tpu.dot_dimension_numbers<[1], [0], [0], [1], [0, 0, 1, 1], [], []>} : vector<8x32xf32>, vector<32x128xf32>, vector<8x128xf32> -> vector<8x128xf32>
    %88 = arith.addf %86, %87 : vector<8x128xf32>
    %89 = arith.negf %88 : vector<8x128xf32>
    %90 = math.exp %89 : vector<8x128xf32>
    %cst_34 = arith.constant 1.000000e+00 : f32
    %91 = vector.broadcast %cst_34 : f32 to vector<8x128xf32>
    %92 = arith.addf %91, %90 : vector<8x128xf32>
    %93 = arith.divf %91, %92 : vector<8x128xf32>
    %94 = math.tanh %88 : vector<8x128xf32>
    %95 = vector.extract_strided_slice %93 {offsets = [0, 0], sizes = [8, 32], strides = [1, 1]} : vector<8x128xf32> to vector<8x32xf32>
    %96 = vector.extract_strided_slice %93 {offsets = [0, 32], sizes = [8, 32], strides = [1, 1]} : vector<8x128xf32> to vector<8x32xf32>
    %97 = vector.extract_strided_slice %94 {offsets = [0, 64], sizes = [8, 32], strides = [1, 1]} : vector<8x128xf32> to vector<8x32xf32>
    %98 = vector.extract_strided_slice %93 {offsets = [0, 96], sizes = [8, 32], strides = [1, 1]} : vector<8x128xf32> to vector<8x32xf32>
    %99 = arith.mulf %96, %82 : vector<8x32xf32>
    %100 = arith.mulf %95, %97 : vector<8x32xf32>
    %101 = arith.addf %99, %100 : vector<8x32xf32>
    %102 = math.tanh %101 : vector<8x32xf32>
    %103 = arith.mulf %98, %102 : vector<8x32xf32>
    %c32_35 = arith.constant 32 : index
    %c0_36 = arith.constant 0 : index
    %104 = vector.load %arg13[%c32_35, %c0_36] : memref<64x32xf32, #tpu.memory_space<vmem>>, vector<8x32xf32>
    tpu.vector_store %arg13[%c32_35, %c0_36], %103 {strides = array<i32>} : memref<64x32xf32, #tpu.memory_space<vmem>>, vector<8x32xf32>,
    %c40 = arith.constant 40 : index
    %c0_37 = arith.constant 0 : index
    %105 = vector.load %arg12[%c40, %c0_37] : memref<64x128xf32, #tpu.memory_space<vmem>>, vector<8x128xf32>
    %cst_38 = arith.constant dense<0.000000e+00> : vector<8x128xf32>
    %106 = tpu.matmul %103, %7, %cst_38 {dimension_numbers = #tpu.dot_dimension_numbers<[1], [0], [0], [1], [0, 0, 1, 1], [], []>} : vector<8x32xf32>, vector<32x128xf32>, vector<8x128xf32> -> vector<8x128xf32>
    %107 = arith.addf %105, %106 : vector<8x128xf32>
    %108 = arith.negf %107 : vector<8x128xf32>
    %109 = math.exp %108 : vector<8x128xf32>
    %cst_39 = arith.constant 1.000000e+00 : f32
    %110 = vector.broadcast %cst_39 : f32 to vector<8x128xf32>
    %111 = arith.addf %110, %109 : vector<8x128xf32>
    %112 = arith.divf %110, %111 : vector<8x128xf32>
    %113 = math.tanh %107 : vector<8x128xf32>
    %114 = vector.extract_strided_slice %112 {offsets = [0, 0], sizes = [8, 32], strides = [1, 1]} : vector<8x128xf32> to vector<8x32xf32>
    %115 = vector.extract_strided_slice %112 {offsets = [0, 32], sizes = [8, 32], strides = [1, 1]} : vector<8x128xf32> to vector<8x32xf32>
    %116 = vector.extract_strided_slice %113 {offsets = [0, 64], sizes = [8, 32], strides = [1, 1]} : vector<8x128xf32> to vector<8x32xf32>
    %117 = vector.extract_strided_slice %112 {offsets = [0, 96], sizes = [8, 32], strides = [1, 1]} : vector<8x128xf32> to vector<8x32xf32>
    %118 = arith.mulf %115, %101 : vector<8x32xf32>
    %119 = arith.mulf %114, %116 : vector<8x32xf32>
    %120 = arith.addf %118, %119 : vector<8x32xf32>
    %121 = math.tanh %120 : vector<8x32xf32>
    %122 = arith.mulf %117, %121 : vector<8x32xf32>
    %c40_40 = arith.constant 40 : index
    %c0_41 = arith.constant 0 : index
    %123 = vector.load %arg13[%c40_40, %c0_41] : memref<64x32xf32, #tpu.memory_space<vmem>>, vector<8x32xf32>
    tpu.vector_store %arg13[%c40_40, %c0_41], %122 {strides = array<i32>} : memref<64x32xf32, #tpu.memory_space<vmem>>, vector<8x32xf32>,
    %c48 = arith.constant 48 : index
    %c0_42 = arith.constant 0 : index
    %124 = vector.load %arg12[%c48, %c0_42] : memref<64x128xf32, #tpu.memory_space<vmem>>, vector<8x128xf32>
    %cst_43 = arith.constant dense<0.000000e+00> : vector<8x128xf32>
    %125 = tpu.matmul %122, %7, %cst_43 {dimension_numbers = #tpu.dot_dimension_numbers<[1], [0], [0], [1], [0, 0, 1, 1], [], []>} : vector<8x32xf32>, vector<32x128xf32>, vector<8x128xf32> -> vector<8x128xf32>
    %126 = arith.addf %124, %125 : vector<8x128xf32>
    %127 = arith.negf %126 : vector<8x128xf32>
    %128 = math.exp %127 : vector<8x128xf32>
    %cst_44 = arith.constant 1.000000e+00 : f32
    %129 = vector.broadcast %cst_44 : f32 to vector<8x128xf32>
    %130 = arith.addf %129, %128 : vector<8x128xf32>
    %131 = arith.divf %129, %130 : vector<8x128xf32>
    %132 = math.tanh %126 : vector<8x128xf32>
    %133 = vector.extract_strided_slice %131 {offsets = [0, 0], sizes = [8, 32], strides = [1, 1]} : vector<8x128xf32> to vector<8x32xf32>
    %134 = vector.extract_strided_slice %131 {offsets = [0, 32], sizes = [8, 32], strides = [1, 1]} : vector<8x128xf32> to vector<8x32xf32>
    %135 = vector.extract_strided_slice %132 {offsets = [0, 64], sizes = [8, 32], strides = [1, 1]} : vector<8x128xf32> to vector<8x32xf32>
    %136 = vector.extract_strided_slice %131 {offsets = [0, 96], sizes = [8, 32], strides = [1, 1]} : vector<8x128xf32> to vector<8x32xf32>
    %137 = arith.mulf %134, %120 : vector<8x32xf32>
    %138 = arith.mulf %133, %135 : vector<8x32xf32>
    %139 = arith.addf %137, %138 : vector<8x32xf32>
    %140 = math.tanh %139 : vector<8x32xf32>
    %141 = arith.mulf %136, %140 : vector<8x32xf32>
    %c48_45 = arith.constant 48 : index
    %c0_46 = arith.constant 0 : index
    %142 = vector.load %arg13[%c48_45, %c0_46] : memref<64x32xf32, #tpu.memory_space<vmem>>, vector<8x32xf32>
    tpu.vector_store %arg13[%c48_45, %c0_46], %141 {strides = array<i32>} : memref<64x32xf32, #tpu.memory_space<vmem>>, vector<8x32xf32>,
    %c56 = arith.constant 56 : index
    %c0_47 = arith.constant 0 : index
    %143 = vector.load %arg12[%c56, %c0_47] : memref<64x128xf32, #tpu.memory_space<vmem>>, vector<8x128xf32>
    %cst_48 = arith.constant dense<0.000000e+00> : vector<8x128xf32>
    %144 = tpu.matmul %141, %7, %cst_48 {dimension_numbers = #tpu.dot_dimension_numbers<[1], [0], [0], [1], [0, 0, 1, 1], [], []>} : vector<8x32xf32>, vector<32x128xf32>, vector<8x128xf32> -> vector<8x128xf32>
    %145 = arith.addf %143, %144 : vector<8x128xf32>
    %146 = arith.negf %145 : vector<8x128xf32>
    %147 = math.exp %146 : vector<8x128xf32>
    %cst_49 = arith.constant 1.000000e+00 : f32
    %148 = vector.broadcast %cst_49 : f32 to vector<8x128xf32>
    %149 = arith.addf %148, %147 : vector<8x128xf32>
    %150 = arith.divf %148, %149 : vector<8x128xf32>
    %151 = math.tanh %145 : vector<8x128xf32>
    %152 = vector.extract_strided_slice %150 {offsets = [0, 0], sizes = [8, 32], strides = [1, 1]} : vector<8x128xf32> to vector<8x32xf32>
    %153 = vector.extract_strided_slice %150 {offsets = [0, 32], sizes = [8, 32], strides = [1, 1]} : vector<8x128xf32> to vector<8x32xf32>
    %154 = vector.extract_strided_slice %151 {offsets = [0, 64], sizes = [8, 32], strides = [1, 1]} : vector<8x128xf32> to vector<8x32xf32>
    %155 = vector.extract_strided_slice %150 {offsets = [0, 96], sizes = [8, 32], strides = [1, 1]} : vector<8x128xf32> to vector<8x32xf32>
    %156 = arith.mulf %153, %139 : vector<8x32xf32>
    %157 = arith.mulf %152, %154 : vector<8x32xf32>
    %158 = arith.addf %156, %157 : vector<8x32xf32>
    %159 = math.tanh %158 : vector<8x32xf32>
    %160 = arith.mulf %155, %159 : vector<8x32xf32>
    %c56_50 = arith.constant 56 : index
    %c0_51 = arith.constant 0 : index
    %161 = vector.load %arg13[%c56_50, %c0_51] : memref<64x32xf32, #tpu.memory_space<vmem>>, vector<8x32xf32>
    tpu.vector_store %arg13[%c56_50, %c0_51], %160 {strides = array<i32>} : memref<64x32xf32, #tpu.memory_space<vmem>>, vector<8x32xf32>,
    %c0_52 = arith.constant 0 : index
    %c0_53 = arith.constant 0 : index
    %162 = vector.load %arg13[%c0_52, %c0_53] : memref<64x32xf32, #tpu.memory_space<vmem>>, vector<64x32xf32>
    %c0_54 = arith.constant 0 : index
    %c0_55 = arith.constant 0 : index
    %163 = vector.load %arg4[%c0_54, %c0_55] : memref<32x128xf32, #tpu.memory_space<vmem>>, vector<32x128xf32>
    %cst_56 = arith.constant dense<0.000000e+00> : vector<64x128xf32>
    %164 = tpu.matmul %162, %163, %cst_56 {dimension_numbers = #tpu.dot_dimension_numbers<[1], [0], [0], [1], [0, 0, 1, 1], [], []>} : vector<64x32xf32>, vector<32x128xf32>, vector<64x128xf32> -> vector<64x128xf32>
    %c0_57 = arith.constant 0 : index
    %c0_58 = arith.constant 0 : index
    %165 = vector.load %arg6[%c0_57, %c0_58] : memref<1x128xf32, #tpu.memory_space<vmem>>, vector<1x128xf32>
    %166 = vector.broadcast %165 : vector<1x128xf32> to vector<64x128xf32>
    %167 = arith.addf %164, %166 : vector<64x128xf32>
    %c0_59 = arith.constant 0 : index
    %c0_60 = arith.constant 0 : index
    %168 = vector.load %arg12[%c0_59, %c0_60] : memref<64x128xf32, #tpu.memory_space<vmem>>, vector<64x128xf32>
    tpu.vector_store %arg12[%c0_59, %c0_60], %167 {strides = array<i32>} : memref<64x128xf32, #tpu.memory_space<vmem>>, vector<64x128xf32>,
    %c0_61 = arith.constant 0 : index
    %c0_62 = arith.constant 0 : index
    %169 = vector.load %arg5[%c0_61, %c0_62] : memref<32x128xf32, #tpu.memory_space<vmem>>, vector<32x128xf32>
    %cst_63 = arith.constant 0.000000e+00 : f32
    %170 = vector.broadcast %cst_63 : f32 to vector<8x32xf32>
    %cst_64 = arith.constant 0.000000e+00 : f32
    %171 = vector.broadcast %cst_64 : f32 to vector<8x32xf32>
    %c0_65 = arith.constant 0 : index
    %c0_66 = arith.constant 0 : index
    %172 = vector.load %arg12[%c0_65, %c0_66] : memref<64x128xf32, #tpu.memory_space<vmem>>, vector<8x128xf32>
    %cst_67 = arith.constant dense<0.000000e+00> : vector<8x128xf32>
    %173 = tpu.matmul %170, %169, %cst_67 {dimension_numbers = #tpu.dot_dimension_numbers<[1], [0], [0], [1], [0, 0, 1, 1], [], []>} : vector<8x32xf32>, vector<32x128xf32>, vector<8x128xf32> -> vector<8x128xf32>
    %174 = arith.addf %172, %173 : vector<8x128xf32>
    %175 = arith.negf %174 : vector<8x128xf32>
    %176 = math.exp %175 : vector<8x128xf32>
    %cst_68 = arith.constant 1.000000e+00 : f32
    %177 = vector.broadcast %cst_68 : f32 to vector<8x128xf32>
    %178 = arith.addf %177, %176 : vector<8x128xf32>
    %179 = arith.divf %177, %178 : vector<8x128xf32>
    %180 = math.tanh %174 : vector<8x128xf32>
    %181 = vector.extract_strided_slice %179 {offsets = [0, 0], sizes = [8, 32], strides = [1, 1]} : vector<8x128xf32> to vector<8x32xf32>
    %182 = vector.extract_strided_slice %179 {offsets = [0, 32], sizes = [8, 32], strides = [1, 1]} : vector<8x128xf32> to vector<8x32xf32>
    %183 = vector.extract_strided_slice %180 {offsets = [0, 64], sizes = [8, 32], strides = [1, 1]} : vector<8x128xf32> to vector<8x32xf32>
    %184 = vector.extract_strided_slice %179 {offsets = [0, 96], sizes = [8, 32], strides = [1, 1]} : vector<8x128xf32> to vector<8x32xf32>
    %185 = arith.mulf %182, %171 : vector<8x32xf32>
    %186 = arith.mulf %181, %183 : vector<8x32xf32>
    %187 = arith.addf %185, %186 : vector<8x32xf32>
    %188 = math.tanh %187 : vector<8x32xf32>
    %189 = arith.mulf %184, %188 : vector<8x32xf32>
    %c0_69 = arith.constant 0 : index
    %c0_70 = arith.constant 0 : index
    %190 = vector.load %arg14[%c0_69, %c0_70] : memref<64x32xf32, #tpu.memory_space<vmem>>, vector<8x32xf32>
    tpu.vector_store %arg14[%c0_69, %c0_70], %189 {strides = array<i32>} : memref<64x32xf32, #tpu.memory_space<vmem>>, vector<8x32xf32>,
    %c8_71 = arith.constant 8 : index
    %c0_72 = arith.constant 0 : index
    %191 = vector.load %arg12[%c8_71, %c0_72] : memref<64x128xf32, #tpu.memory_space<vmem>>, vector<8x128xf32>
    %cst_73 = arith.constant dense<0.000000e+00> : vector<8x128xf32>
    %192 = tpu.matmul %189, %169, %cst_73 {dimension_numbers = #tpu.dot_dimension_numbers<[1], [0], [0], [1], [0, 0, 1, 1], [], []>} : vector<8x32xf32>, vector<32x128xf32>, vector<8x128xf32> -> vector<8x128xf32>
    %193 = arith.addf %191, %192 : vector<8x128xf32>
    %194 = arith.negf %193 : vector<8x128xf32>
    %195 = math.exp %194 : vector<8x128xf32>
    %cst_74 = arith.constant 1.000000e+00 : f32
    %196 = vector.broadcast %cst_74 : f32 to vector<8x128xf32>
    %197 = arith.addf %196, %195 : vector<8x128xf32>
    %198 = arith.divf %196, %197 : vector<8x128xf32>
    %199 = math.tanh %193 : vector<8x128xf32>
    %200 = vector.extract_strided_slice %198 {offsets = [0, 0], sizes = [8, 32], strides = [1, 1]} : vector<8x128xf32> to vector<8x32xf32>
    %201 = vector.extract_strided_slice %198 {offsets = [0, 32], sizes = [8, 32], strides = [1, 1]} : vector<8x128xf32> to vector<8x32xf32>
    %202 = vector.extract_strided_slice %199 {offsets = [0, 64], sizes = [8, 32], strides = [1, 1]} : vector<8x128xf32> to vector<8x32xf32>
    %203 = vector.extract_strided_slice %198 {offsets = [0, 96], sizes = [8, 32], strides = [1, 1]} : vector<8x128xf32> to vector<8x32xf32>
    %204 = arith.mulf %201, %187 : vector<8x32xf32>
    %205 = arith.mulf %200, %202 : vector<8x32xf32>
    %206 = arith.addf %204, %205 : vector<8x32xf32>
    %207 = math.tanh %206 : vector<8x32xf32>
    %208 = arith.mulf %203, %207 : vector<8x32xf32>
    %c8_75 = arith.constant 8 : index
    %c0_76 = arith.constant 0 : index
    %209 = vector.load %arg14[%c8_75, %c0_76] : memref<64x32xf32, #tpu.memory_space<vmem>>, vector<8x32xf32>
    tpu.vector_store %arg14[%c8_75, %c0_76], %208 {strides = array<i32>} : memref<64x32xf32, #tpu.memory_space<vmem>>, vector<8x32xf32>,
    %c16_77 = arith.constant 16 : index
    %c0_78 = arith.constant 0 : index
    %210 = vector.load %arg12[%c16_77, %c0_78] : memref<64x128xf32, #tpu.memory_space<vmem>>, vector<8x128xf32>
    %cst_79 = arith.constant dense<0.000000e+00> : vector<8x128xf32>
    %211 = tpu.matmul %208, %169, %cst_79 {dimension_numbers = #tpu.dot_dimension_numbers<[1], [0], [0], [1], [0, 0, 1, 1], [], []>} : vector<8x32xf32>, vector<32x128xf32>, vector<8x128xf32> -> vector<8x128xf32>
    %212 = arith.addf %210, %211 : vector<8x128xf32>
    %213 = arith.negf %212 : vector<8x128xf32>
    %214 = math.exp %213 : vector<8x128xf32>
    %cst_80 = arith.constant 1.000000e+00 : f32
    %215 = vector.broadcast %cst_80 : f32 to vector<8x128xf32>
    %216 = arith.addf %215, %214 : vector<8x128xf32>
    %217 = arith.divf %215, %216 : vector<8x128xf32>
    %218 = math.tanh %212 : vector<8x128xf32>
    %219 = vector.extract_strided_slice %217 {offsets = [0, 0], sizes = [8, 32], strides = [1, 1]} : vector<8x128xf32> to vector<8x32xf32>
    %220 = vector.extract_strided_slice %217 {offsets = [0, 32], sizes = [8, 32], strides = [1, 1]} : vector<8x128xf32> to vector<8x32xf32>
    %221 = vector.extract_strided_slice %218 {offsets = [0, 64], sizes = [8, 32], strides = [1, 1]} : vector<8x128xf32> to vector<8x32xf32>
    %222 = vector.extract_strided_slice %217 {offsets = [0, 96], sizes = [8, 32], strides = [1, 1]} : vector<8x128xf32> to vector<8x32xf32>
    %223 = arith.mulf %220, %206 : vector<8x32xf32>
    %224 = arith.mulf %219, %221 : vector<8x32xf32>
    %225 = arith.addf %223, %224 : vector<8x32xf32>
    %226 = math.tanh %225 : vector<8x32xf32>
    %227 = arith.mulf %222, %226 : vector<8x32xf32>
    %c16_81 = arith.constant 16 : index
    %c0_82 = arith.constant 0 : index
    %228 = vector.load %arg14[%c16_81, %c0_82] : memref<64x32xf32, #tpu.memory_space<vmem>>, vector<8x32xf32>
    tpu.vector_store %arg14[%c16_81, %c0_82], %227 {strides = array<i32>} : memref<64x32xf32, #tpu.memory_space<vmem>>, vector<8x32xf32>,
    %c24_83 = arith.constant 24 : index
    %c0_84 = arith.constant 0 : index
    %229 = vector.load %arg12[%c24_83, %c0_84] : memref<64x128xf32, #tpu.memory_space<vmem>>, vector<8x128xf32>
    %cst_85 = arith.constant dense<0.000000e+00> : vector<8x128xf32>
    %230 = tpu.matmul %227, %169, %cst_85 {dimension_numbers = #tpu.dot_dimension_numbers<[1], [0], [0], [1], [0, 0, 1, 1], [], []>} : vector<8x32xf32>, vector<32x128xf32>, vector<8x128xf32> -> vector<8x128xf32>
    %231 = arith.addf %229, %230 : vector<8x128xf32>
    %232 = arith.negf %231 : vector<8x128xf32>
    %233 = math.exp %232 : vector<8x128xf32>
    %cst_86 = arith.constant 1.000000e+00 : f32
    %234 = vector.broadcast %cst_86 : f32 to vector<8x128xf32>
    %235 = arith.addf %234, %233 : vector<8x128xf32>
    %236 = arith.divf %234, %235 : vector<8x128xf32>
    %237 = math.tanh %231 : vector<8x128xf32>
    %238 = vector.extract_strided_slice %236 {offsets = [0, 0], sizes = [8, 32], strides = [1, 1]} : vector<8x128xf32> to vector<8x32xf32>
    %239 = vector.extract_strided_slice %236 {offsets = [0, 32], sizes = [8, 32], strides = [1, 1]} : vector<8x128xf32> to vector<8x32xf32>
    %240 = vector.extract_strided_slice %237 {offsets = [0, 64], sizes = [8, 32], strides = [1, 1]} : vector<8x128xf32> to vector<8x32xf32>
    %241 = vector.extract_strided_slice %236 {offsets = [0, 96], sizes = [8, 32], strides = [1, 1]} : vector<8x128xf32> to vector<8x32xf32>
    %242 = arith.mulf %239, %225 : vector<8x32xf32>
    %243 = arith.mulf %238, %240 : vector<8x32xf32>
    %244 = arith.addf %242, %243 : vector<8x32xf32>
    %245 = math.tanh %244 : vector<8x32xf32>
    %246 = arith.mulf %241, %245 : vector<8x32xf32>
    %c24_87 = arith.constant 24 : index
    %c0_88 = arith.constant 0 : index
    %247 = vector.load %arg14[%c24_87, %c0_88] : memref<64x32xf32, #tpu.memory_space<vmem>>, vector<8x32xf32>
    tpu.vector_store %arg14[%c24_87, %c0_88], %246 {strides = array<i32>} : memref<64x32xf32, #tpu.memory_space<vmem>>, vector<8x32xf32>,
    %c32_89 = arith.constant 32 : index
    %c0_90 = arith.constant 0 : index
    %248 = vector.load %arg12[%c32_89, %c0_90] : memref<64x128xf32, #tpu.memory_space<vmem>>, vector<8x128xf32>
    %cst_91 = arith.constant dense<0.000000e+00> : vector<8x128xf32>
    %249 = tpu.matmul %246, %169, %cst_91 {dimension_numbers = #tpu.dot_dimension_numbers<[1], [0], [0], [1], [0, 0, 1, 1], [], []>} : vector<8x32xf32>, vector<32x128xf32>, vector<8x128xf32> -> vector<8x128xf32>
    %250 = arith.addf %248, %249 : vector<8x128xf32>
    %251 = arith.negf %250 : vector<8x128xf32>
    %252 = math.exp %251 : vector<8x128xf32>
    %cst_92 = arith.constant 1.000000e+00 : f32
    %253 = vector.broadcast %cst_92 : f32 to vector<8x128xf32>
    %254 = arith.addf %253, %252 : vector<8x128xf32>
    %255 = arith.divf %253, %254 : vector<8x128xf32>
    %256 = math.tanh %250 : vector<8x128xf32>
    %257 = vector.extract_strided_slice %255 {offsets = [0, 0], sizes = [8, 32], strides = [1, 1]} : vector<8x128xf32> to vector<8x32xf32>
    %258 = vector.extract_strided_slice %255 {offsets = [0, 32], sizes = [8, 32], strides = [1, 1]} : vector<8x128xf32> to vector<8x32xf32>
    %259 = vector.extract_strided_slice %256 {offsets = [0, 64], sizes = [8, 32], strides = [1, 1]} : vector<8x128xf32> to vector<8x32xf32>
    %260 = vector.extract_strided_slice %255 {offsets = [0, 96], sizes = [8, 32], strides = [1, 1]} : vector<8x128xf32> to vector<8x32xf32>
    %261 = arith.mulf %258, %244 : vector<8x32xf32>
    %262 = arith.mulf %257, %259 : vector<8x32xf32>
    %263 = arith.addf %261, %262 : vector<8x32xf32>
    %264 = math.tanh %263 : vector<8x32xf32>
    %265 = arith.mulf %260, %264 : vector<8x32xf32>
    %c32_93 = arith.constant 32 : index
    %c0_94 = arith.constant 0 : index
    %266 = vector.load %arg14[%c32_93, %c0_94] : memref<64x32xf32, #tpu.memory_space<vmem>>, vector<8x32xf32>
    tpu.vector_store %arg14[%c32_93, %c0_94], %265 {strides = array<i32>} : memref<64x32xf32, #tpu.memory_space<vmem>>, vector<8x32xf32>,
    %c40_95 = arith.constant 40 : index
    %c0_96 = arith.constant 0 : index
    %267 = vector.load %arg12[%c40_95, %c0_96] : memref<64x128xf32, #tpu.memory_space<vmem>>, vector<8x128xf32>
    %cst_97 = arith.constant dense<0.000000e+00> : vector<8x128xf32>
    %268 = tpu.matmul %265, %169, %cst_97 {dimension_numbers = #tpu.dot_dimension_numbers<[1], [0], [0], [1], [0, 0, 1, 1], [], []>} : vector<8x32xf32>, vector<32x128xf32>, vector<8x128xf32> -> vector<8x128xf32>
    %269 = arith.addf %267, %268 : vector<8x128xf32>
    %270 = arith.negf %269 : vector<8x128xf32>
    %271 = math.exp %270 : vector<8x128xf32>
    %cst_98 = arith.constant 1.000000e+00 : f32
    %272 = vector.broadcast %cst_98 : f32 to vector<8x128xf32>
    %273 = arith.addf %272, %271 : vector<8x128xf32>
    %274 = arith.divf %272, %273 : vector<8x128xf32>
    %275 = math.tanh %269 : vector<8x128xf32>
    %276 = vector.extract_strided_slice %274 {offsets = [0, 0], sizes = [8, 32], strides = [1, 1]} : vector<8x128xf32> to vector<8x32xf32>
    %277 = vector.extract_strided_slice %274 {offsets = [0, 32], sizes = [8, 32], strides = [1, 1]} : vector<8x128xf32> to vector<8x32xf32>
    %278 = vector.extract_strided_slice %275 {offsets = [0, 64], sizes = [8, 32], strides = [1, 1]} : vector<8x128xf32> to vector<8x32xf32>
    %279 = vector.extract_strided_slice %274 {offsets = [0, 96], sizes = [8, 32], strides = [1, 1]} : vector<8x128xf32> to vector<8x32xf32>
    %280 = arith.mulf %277, %263 : vector<8x32xf32>
    %281 = arith.mulf %276, %278 : vector<8x32xf32>
    %282 = arith.addf %280, %281 : vector<8x32xf32>
    %283 = math.tanh %282 : vector<8x32xf32>
    %284 = arith.mulf %279, %283 : vector<8x32xf32>
    %c40_99 = arith.constant 40 : index
    %c0_100 = arith.constant 0 : index
    %285 = vector.load %arg14[%c40_99, %c0_100] : memref<64x32xf32, #tpu.memory_space<vmem>>, vector<8x32xf32>
    tpu.vector_store %arg14[%c40_99, %c0_100], %284 {strides = array<i32>} : memref<64x32xf32, #tpu.memory_space<vmem>>, vector<8x32xf32>,
    %c48_101 = arith.constant 48 : index
    %c0_102 = arith.constant 0 : index
    %286 = vector.load %arg12[%c48_101, %c0_102] : memref<64x128xf32, #tpu.memory_space<vmem>>, vector<8x128xf32>
    %cst_103 = arith.constant dense<0.000000e+00> : vector<8x128xf32>
    %287 = tpu.matmul %284, %169, %cst_103 {dimension_numbers = #tpu.dot_dimension_numbers<[1], [0], [0], [1], [0, 0, 1, 1], [], []>} : vector<8x32xf32>, vector<32x128xf32>, vector<8x128xf32> -> vector<8x128xf32>
    %288 = arith.addf %286, %287 : vector<8x128xf32>
    %289 = arith.negf %288 : vector<8x128xf32>
    %290 = math.exp %289 : vector<8x128xf32>
    %cst_104 = arith.constant 1.000000e+00 : f32
    %291 = vector.broadcast %cst_104 : f32 to vector<8x128xf32>
    %292 = arith.addf %291, %290 : vector<8x128xf32>
    %293 = arith.divf %291, %292 : vector<8x128xf32>
    %294 = math.tanh %288 : vector<8x128xf32>
    %295 = vector.extract_strided_slice %293 {offsets = [0, 0], sizes = [8, 32], strides = [1, 1]} : vector<8x128xf32> to vector<8x32xf32>
    %296 = vector.extract_strided_slice %293 {offsets = [0, 32], sizes = [8, 32], strides = [1, 1]} : vector<8x128xf32> to vector<8x32xf32>
    %297 = vector.extract_strided_slice %294 {offsets = [0, 64], sizes = [8, 32], strides = [1, 1]} : vector<8x128xf32> to vector<8x32xf32>
    %298 = vector.extract_strided_slice %293 {offsets = [0, 96], sizes = [8, 32], strides = [1, 1]} : vector<8x128xf32> to vector<8x32xf32>
    %299 = arith.mulf %296, %282 : vector<8x32xf32>
    %300 = arith.mulf %295, %297 : vector<8x32xf32>
    %301 = arith.addf %299, %300 : vector<8x32xf32>
    %302 = math.tanh %301 : vector<8x32xf32>
    %303 = arith.mulf %298, %302 : vector<8x32xf32>
    %c48_105 = arith.constant 48 : index
    %c0_106 = arith.constant 0 : index
    %304 = vector.load %arg14[%c48_105, %c0_106] : memref<64x32xf32, #tpu.memory_space<vmem>>, vector<8x32xf32>
    tpu.vector_store %arg14[%c48_105, %c0_106], %303 {strides = array<i32>} : memref<64x32xf32, #tpu.memory_space<vmem>>, vector<8x32xf32>,
    %c56_107 = arith.constant 56 : index
    %c0_108 = arith.constant 0 : index
    %305 = vector.load %arg12[%c56_107, %c0_108] : memref<64x128xf32, #tpu.memory_space<vmem>>, vector<8x128xf32>
    %cst_109 = arith.constant dense<0.000000e+00> : vector<8x128xf32>
    %306 = tpu.matmul %303, %169, %cst_109 {dimension_numbers = #tpu.dot_dimension_numbers<[1], [0], [0], [1], [0, 0, 1, 1], [], []>} : vector<8x32xf32>, vector<32x128xf32>, vector<8x128xf32> -> vector<8x128xf32>
    %307 = arith.addf %305, %306 : vector<8x128xf32>
    %308 = arith.negf %307 : vector<8x128xf32>
    %309 = math.exp %308 : vector<8x128xf32>
    %cst_110 = arith.constant 1.000000e+00 : f32
    %310 = vector.broadcast %cst_110 : f32 to vector<8x128xf32>
    %311 = arith.addf %310, %309 : vector<8x128xf32>
    %312 = arith.divf %310, %311 : vector<8x128xf32>
    %313 = math.tanh %307 : vector<8x128xf32>
    %314 = vector.extract_strided_slice %312 {offsets = [0, 0], sizes = [8, 32], strides = [1, 1]} : vector<8x128xf32> to vector<8x32xf32>
    %315 = vector.extract_strided_slice %312 {offsets = [0, 32], sizes = [8, 32], strides = [1, 1]} : vector<8x128xf32> to vector<8x32xf32>
    %316 = vector.extract_strided_slice %313 {offsets = [0, 64], sizes = [8, 32], strides = [1, 1]} : vector<8x128xf32> to vector<8x32xf32>
    %317 = vector.extract_strided_slice %312 {offsets = [0, 96], sizes = [8, 32], strides = [1, 1]} : vector<8x128xf32> to vector<8x32xf32>
    %318 = arith.mulf %315, %301 : vector<8x32xf32>
    %319 = arith.mulf %314, %316 : vector<8x32xf32>
    %320 = arith.addf %318, %319 : vector<8x32xf32>
    %321 = math.tanh %320 : vector<8x32xf32>
    %322 = arith.mulf %317, %321 : vector<8x32xf32>
    %c56_111 = arith.constant 56 : index
    %c0_112 = arith.constant 0 : index
    %323 = vector.load %arg14[%c56_111, %c0_112] : memref<64x32xf32, #tpu.memory_space<vmem>>, vector<8x32xf32>
    tpu.vector_store %arg14[%c56_111, %c0_112], %322 {strides = array<i32>} : memref<64x32xf32, #tpu.memory_space<vmem>>, vector<8x32xf32>,
    %c0_113 = arith.constant 0 : index
    %c0_114 = arith.constant 0 : index
    %c0_115 = arith.constant 0 : index
    %324 = vector.load %arg10[%c0_113, %c0_114, %c0_115] : memref<2x8x32xf32, #tpu.memory_space<vmem>>, vector<1x8x32xf32>
    %325 = vector.shape_cast %324 : vector<1x8x32xf32> to vector<8x32xf32>
    %326 = vector.shape_cast %160 : vector<8x32xf32> to vector<1x8x32xf32>
    tpu.vector_store %arg10[%c0_113, %c0_114, %c0_115], %326 {strides = array<i32>} : memref<2x8x32xf32, #tpu.memory_space<vmem>>, vector<1x8x32xf32>,
    %c1 = arith.constant 1 : index
    %c0_116 = arith.constant 0 : index
    %c0_117 = arith.constant 0 : index
    %327 = vector.load %arg10[%c1, %c0_116, %c0_117] : memref<2x8x32xf32, #tpu.memory_space<vmem>>, vector<1x8x32xf32>
    %328 = vector.shape_cast %327 : vector<1x8x32xf32> to vector<8x32xf32>
    %329 = vector.shape_cast %322 : vector<8x32xf32> to vector<1x8x32xf32>
    tpu.vector_store %arg10[%c1, %c0_116, %c0_117], %329 {strides = array<i32>} : memref<2x8x32xf32, #tpu.memory_space<vmem>>, vector<1x8x32xf32>,
    %c0_118 = arith.constant 0 : index
    %c0_119 = arith.constant 0 : index
    %c0_120 = arith.constant 0 : index
    %330 = vector.load %arg11[%c0_118, %c0_119, %c0_120] : memref<2x8x32xf32, #tpu.memory_space<vmem>>, vector<1x8x32xf32>
    %331 = vector.shape_cast %330 : vector<1x8x32xf32> to vector<8x32xf32>
    %332 = vector.shape_cast %158 : vector<8x32xf32> to vector<1x8x32xf32>
    tpu.vector_store %arg11[%c0_118, %c0_119, %c0_120], %332 {strides = array<i32>} : memref<2x8x32xf32, #tpu.memory_space<vmem>>, vector<1x8x32xf32>,
    %c1_121 = arith.constant 1 : index
    %c0_122 = arith.constant 0 : index
    %c0_123 = arith.constant 0 : index
    %333 = vector.load %arg11[%c1_121, %c0_122, %c0_123] : memref<2x8x32xf32, #tpu.memory_space<vmem>>, vector<1x8x32xf32>
    %334 = vector.shape_cast %333 : vector<1x8x32xf32> to vector<8x32xf32>
    %335 = vector.shape_cast %320 : vector<8x32xf32> to vector<1x8x32xf32>
    tpu.vector_store %arg11[%c1_121, %c0_122, %c0_123], %335 {strides = array<i32>} : memref<2x8x32xf32, #tpu.memory_space<vmem>>, vector<1x8x32xf32>,
    %c0_124 = arith.constant 0 : index
    %c0_125 = arith.constant 0 : index
    %336 = vector.load %arg14[%c0_124, %c0_125] : memref<64x32xf32, #tpu.memory_space<vmem>>, vector<64x32xf32>
    %c0_126 = arith.constant 0 : index
    %c0_127 = arith.constant 0 : index
    %337 = vector.load %arg7[%c0_126, %c0_127] : memref<32x128xf32, #tpu.memory_space<vmem>>, vector<32x128xf32>
    %cst_128 = arith.constant dense<0.000000e+00> : vector<64x128xf32>
    %338 = tpu.matmul %336, %337, %cst_128 {dimension_numbers = #tpu.dot_dimension_numbers<[1], [0], [0], [1], [0, 0, 1, 1], [], []>} : vector<64x32xf32>, vector<32x128xf32>, vector<64x128xf32> -> vector<64x128xf32>
    %c0_129 = arith.constant 0 : index
    %c0_130 = arith.constant 0 : index
    %339 = vector.load %arg8[%c0_129, %c0_130] : memref<1x128xf32, #tpu.memory_space<vmem>>, vector<1x128xf32>
    %340 = vector.broadcast %339 : vector<1x128xf32> to vector<64x128xf32>
    %341 = arith.addf %338, %340 : vector<64x128xf32>
    %342 = tpu.iota {dimensions = array<i32: 1>} : vector<64x128xi32>
    %c20_i32 = arith.constant 20 : i32
    %343 = vector.broadcast %c20_i32 : i32 to vector<64x128xi32>
    %344 = arith.cmpi slt, %342, %343 : vector<64x128xi32>
    %cst_131 = arith.constant -1.000000e+30 : f32
    %345 = vector.broadcast %cst_131 : f32 to vector<64x128xf32>
    %346 = arith.select %344, %341, %345 : vector<64x128xi1>, vector<64x128xf32>
    %cst_132 = arith.constant dense<0xFF800000> : vector<64xf32>
    %347 = vector.multi_reduction <maximumf>, %346, %cst_132 [1] : vector<64x128xf32> to vector<64xf32>
    %348 = vector.shape_cast %347 : vector<64xf32> to vector<64x1xf32>
    %349 = vector.broadcast %348 : vector<64x1xf32> to vector<64x128xf32>
    %350 = arith.subf %346, %349 : vector<64x128xf32>
    %351 = math.exp %350 : vector<64x128xf32>
    %cst_133 = arith.constant dense<0.000000e+00> : vector<64xf32>
    %352 = vector.multi_reduction <add>, %351, %cst_133 [1] : vector<64x128xf32> to vector<64xf32>
    %353 = vector.shape_cast %352 : vector<64xf32> to vector<64x1xf32>
    %354 = tpu.reciprocal %353 {approx = true} : vector<64x1xf32> -> vector<64x1xf32>
    %355 = vector.broadcast %354 : vector<64x1xf32> to vector<64x128xf32>
    %356 = arith.mulf %351, %355 : vector<64x128xf32>
    %357 = math.exp %341 : vector<64x128xf32>
    %358 = math.tanh %341 : vector<64x128xf32>
    %359 = arith.negf %341 : vector<64x128xf32>
    %360 = math.exp %359 : vector<64x128xf32>
    %cst_134 = arith.constant 1.000000e+00 : f32
    %361 = vector.broadcast %cst_134 : f32 to vector<64x128xf32>
    %362 = arith.addf %361, %360 : vector<64x128xf32>
    %363 = arith.divf %361, %362 : vector<64x128xf32>
    %c20_i32_135 = arith.constant 20 : i32
    %364 = vector.broadcast %c20_i32_135 : i32 to vector<64x128xi32>
    %365 = arith.cmpi slt, %342, %364 : vector<64x128xi32>
    %c60_i32 = arith.constant 60 : i32
    %366 = vector.broadcast %c60_i32 : i32 to vector<64x128xi32>
    %367 = arith.cmpi slt, %342, %366 : vector<64x128xi32>
    %c100_i32 = arith.constant 100 : i32
    %368 = vector.broadcast %c100_i32 : i32 to vector<64x128xi32>
    %369 = arith.cmpi slt, %342, %368 : vector<64x128xi32>
    %c120_i32 = arith.constant 120 : i32
    %370 = vector.broadcast %c120_i32 : i32 to vector<64x128xi32>
    %371 = arith.cmpi slt, %342, %370 : vector<64x128xi32>
    %372 = arith.select %371, %358, %363 : vector<64x128xi1>, vector<64x128xf32>
    %373 = arith.select %369, %357, %372 : vector<64x128xi1>, vector<64x128xf32>
    %374 = arith.select %367, %341, %373 : vector<64x128xi1>, vector<64x128xf32>
    %375 = arith.select %365, %356, %374 : vector<64x128xi1>, vector<64x128xf32>
    %c0_136 = arith.constant 0 : index
    %c0_137 = arith.constant 0 : index
    %376 = vector.load %arg9[%c0_136, %c0_137] : memref<64x128xf32, #tpu.memory_space<vmem>>, vector<64x128xf32>
    tpu.vector_store %arg9[%c0_136, %c0_137], %375 {strides = array<i32>} : memref<64x128xf32, #tpu.memory_space<vmem>>, vector<64x128xf32>,
    return
  }
}

</mosaic_0001>

<llo_original>
// kernel: handwriting_mdn_forward.1
$region0: #{handwriting_mdn_forward.1}
  #allocation0 [shape = 'u32[]', space=smem, size = 0x4, offset = 0x4, fixed_abs, tag = 'smem constant byte address 0x4 - core index']
  #allocation1 [shape = 'u32[144,128]{1,0:T(1,128)}', space=vmem, size = 0x12000, scoped, tag = 'internal scratch']
  #allocation2 [shape = 'f32[64,128]{1,0:T(8,128)}', space=vmem, size = 0x8000, scoped, tag = 'scratch operand']
  #allocation3 [shape = 'f32[64,32]{1,0:T(8,128)}', space=vmem, size = 0x8000, scoped, tag = 'scratch operand']
  #allocation4 [shape = 'f32[64,32]{1,0:T(8,128)}', space=vmem, size = 0x8000, scoped, tag = 'scratch operand']
  %s0 = inlined_call_operand.vmem [shape: f32[64,3], index: 0, kind: input, shape index: {}]
  %s1 = inlined_call_operand.vmem [shape: f32[3,128], index: 1, kind: input, shape index: {}]
  %s2 = inlined_call_operand.vmem [shape: f32[32,128], index: 2, kind: input, shape index: {}]
  %s3 = inlined_call_operand.vmem [shape: f32[1,128], index: 3, kind: input, shape index: {}]
  %s4 = inlined_call_operand.vmem [shape: f32[32,128], index: 4, kind: input, shape index: {}]
  %s5 = inlined_call_operand.vmem [shape: f32[32,128], index: 5, kind: input, shape index: {}]
  %s6 = inlined_call_operand.hbm [shape: f32[1,128], index: 6, kind: input, shape index: {}]
  %s7 = inlined_call_operand.vmem [shape: f32[32,128], index: 7, kind: input, shape index: {}]
  %s8 = inlined_call_operand.hbm [shape: f32[1,128], index: 8, kind: input, shape index: {}]
  %s9 = inlined_call_operand.vmem [shape: f32[64,128], index: 9, kind: output, shape index: {0}]
  %s10 = inlined_call_operand.vmem [shape: f32[2,8,32], index: 10, kind: output, shape index: {1}]
  %s11 = inlined_call_operand.vmem [shape: f32[2,8,32], index: 11, kind: output, shape index: {2}]
  %12 = xla_tuple %s9, %s10, %s11
  %s13 = sld [smem:[#allocation0]]
  $region70: #{handwriting_mdn_forward.1} parent=0
    _
  %s15 = ssub.s32 1, %s13
  %s16 = scalar_select 0, %s15, %s13
  $region1: #{handwriting_mdn_forward.1} parent=0
    #allocation5 [shape = 'u8[512]{0}', space=vmem, size = 0x400, scoped, tag = 'input window, operand 6, single buffered']
    #allocation6 [shape = 's32[1]{0}', space=sflag, size = 0x4, scoped, tag = 'scoped memory for handwriting_mdn_forward.1']
    #allocation7 [shape = 'u8[512]{0}', space=vmem, size = 0x400, scoped, tag = 'input window, operand 8, single buffered']
    #allocation8 [shape = 's32[1]{0}', space=sflag, size = 0x4, scoped, tag = 'scoped memory for handwriting_mdn_forward.1']
    %17 = vsyncpa [#allocation6], 0
    %18 = vsyncpa [#allocation8], 0
    // Predicated region
    $region2: #{handwriting_mdn_forward.1} parent=1 // pred_check
      _
    $region3: #{handwriting_mdn_forward.1} parent=1 // pred_check_branch
      %20 = sbr.rel (0) target = $region5
    $region4: #{handwriting_mdn_forward.1} parent=1 // pred_region
      _
    $region5: #{handwriting_mdn_forward.1} parent=1 // pred_fallthru
      _
    // Predicated region
    $region6: #{handwriting_mdn_forward.1} parent=1 // pred_check
      _
    $region7: #{handwriting_mdn_forward.1} parent=1 // pred_check_branch
      %22 = sbr.rel (0) target = $region9
    $region8: #{handwriting_mdn_forward.1} parent=1 // pred_region
      _
    $region9: #{handwriting_mdn_forward.1} parent=1 // pred_fallthru
      _
    // Predicated region
    $region10: #{handwriting_mdn_forward.1} parent=1 // pred_check
      _
    $region11: #{handwriting_mdn_forward.1} parent=1 // pred_check_branch
      %24 = sbr.rel (0) target = $region13
    $region12: #{handwriting_mdn_forward.1} parent=1 // pred_region
      _
    $region13: #{handwriting_mdn_forward.1} parent=1 // pred_fallthru
      _
    // Predicated region
    $region14: #{handwriting_mdn_forward.1} parent=1 // pred_check
      _
    $region15: #{handwriting_mdn_forward.1} parent=1 // pred_check_branch
      %26 = sbr.rel (0) target = $region17
    $region16: #{handwriting_mdn_forward.1} parent=1 // pred_region
      _
    $region17: #{handwriting_mdn_forward.1} parent=1 // pred_fallthru
      _
    // Predicated region
    $region18: #{handwriting_mdn_forward.1} parent=1 // pred_check
      _
    $region19: #{handwriting_mdn_forward.1} parent=1 // pred_check_branch
      %28 = sbr.rel (0) target = $region21
    $region20: #{handwriting_mdn_forward.1} parent=1 // pred_region
      _
    $region21: #{handwriting_mdn_forward.1} parent=1 // pred_fallthru
      _
    // Predicated region
    $region22: #{handwriting_mdn_forward.1} parent=1 // pred_check
      _
    $region23: #{handwriting_mdn_forward.1} parent=1 // pred_check_branch
      %30 = sbr.rel (0) target = $region25
    $region24: #{handwriting_mdn_forward.1} parent=1 // pred_region
      _
    $region25: #{handwriting_mdn_forward.1} parent=1 // pred_fallthru
      _
    // Predicated region
    $region26: #{handwriting_mdn_forward.1} parent=1 // pred_check
      _
    $region27: #{handwriting_mdn_forward.1} parent=1 // pred_check_branch
      %32 = sbr.rel (0) target = $region29
    $region28: #{handwriting_mdn_forward.1} parent=1 // pred_region
      %s34 = ssub.s32 16, 16
      %35 = vsyncadd [#allocation6], %s34
      %s37 = sshll.u32 [#allocation5], 4
      %s38 = int_to_ptr.vmem [resolvable:$true] %s37
      %40 = dma.hbm_to_vmem [thread:$0]  %s6, 16, %s38, [#allocation6]
    $region29: #{handwriting_mdn_forward.1} parent=1 // pred_fallthru
      _
    // Predicated region
    $region30: #{handwriting_mdn_forward.1} parent=1 // pred_check
      _
    $region31: #{handwriting_mdn_forward.1} parent=1 // pred_check_branch
      %42 = sbr.rel (0) target = $region33
    $region32: #{handwriting_mdn_forward.1} parent=1 // pred_region
      _
    $region33: #{handwriting_mdn_forward.1} parent=1 // pred_fallthru
      _
    // Predicated region
    $region34: #{handwriting_mdn_forward.1} parent=1 // pred_check
      _
    $region35: #{handwriting_mdn_forward.1} parent=1 // pred_check_branch
      %44 = sbr.rel (0) target = $region37
    $region36: #{handwriting_mdn_forward.1} parent=1 // pred_region
      %s46 = ssub.s32 16, 16
      %47 = vsyncadd [#allocation8], %s46
      %s49 = sshll.u32 [#allocation7], 4
      %s50 = int_to_ptr.vmem [resolvable:$true] %s49
      %52 = dma.hbm_to_vmem [thread:$0]  %s8, 16, %s50, [#allocation8]
    $region37: #{handwriting_mdn_forward.1} parent=1 // pred_fallthru
      _
    // Predicated region
    $region38: #{handwriting_mdn_forward.1} parent=1 // pred_check
      _
    $region39: #{handwriting_mdn_forward.1} parent=1 // pred_check_branch
      %54 = sbr.rel (0) target = $region41
    $region40: #{handwriting_mdn_forward.1} parent=1 // pred_region
      %55 = dma.done [#allocation6], 16
    $region41: #{handwriting_mdn_forward.1} parent=1 // pred_fallthru
      _
    // Predicated region
    $region42: #{handwriting_mdn_forward.1} parent=1 // pred_check
      _
    $region43: #{handwriting_mdn_forward.1} parent=1 // pred_check_branch
      %57 = sbr.rel (0) target = $region45
    $region44: #{handwriting_mdn_forward.1} parent=1 // pred_region
      %58 = dma.done [#allocation8], 16
    $region45: #{handwriting_mdn_forward.1} parent=1 // pred_fallthru
      _
    %v59 = vld [vmem:[%s0] sm:$0xff]
    %v60 = vld [vmem:[%s0 + $0x8] sm:$0xff]
    %v61 = vld [vmem:[%s0 + $0x10] sm:$0xff]
    %v62 = vld [vmem:[%s0 + $0x18] sm:$0xff]
    %v63 = vld [vmem:[%s0 + $0x20] sm:$0xff]
    %v64 = vld [vmem:[%s0 + $0x28] sm:$0xff]
    %v65 = vld [vmem:[%s0 + $0x30] sm:$0xff]
    %v66 = vld [vmem:[%s0 + $0x38] sm:$0xff]
    %v67 = vld [vmem:[%s1] sm:$0x7]
    %v68 = vld [vmem:[%s3] sm:$0x1]
    %v70 = vlaneseq
    %v71 = vshrl.u32 %v70, 7
    %v72 = vsub.s32 0, %v71
    %v73 = vrot.slane %v68, %v72
    %vm75 = vcmask 23552
    %v77 = vsel %vm75, %v59, 0
    %v80 = vsel %vm75, %v60, 0
    %v83 = vsel %vm75, %v61, 0
    %v86 = vsel %vm75, %v62, 0
    %v89 = vsel %vm75, %v63, 0
    %v92 = vsel %vm75, %v64, 0
    %v95 = vsel %vm75, %v65, 0
    %v98 = vsel %vm75, %v66, 0
    %vm100 = vcmask 1042432
    %v102 = vsel %vm100, %v67, 0
    %104 = vmatprep.subr.mxu0 0.0
    %105 = vmatpush1.msra.mxu0 %v102
    %106 = vmatprep.subr.mxu0 0.0
    %107 = vmatpush1.msra.mxu0 0.0
    %108 = vmatprep.subr.mxu0 0.0
    %109 = vmatpush1.msra.mxu0 0.0
    %110 = vmatprep.subr.mxu0 0.0
    %111 = vmatpush1.msra.mxu0 0.0
    %112 = vmatprep.subr.mxu0 0.0
    %113 = vmatpush1.msra.mxu0 0.0
    %114 = vmatprep.subr.mxu0 0.0
    %115 = vmatpush1.msra.mxu0 0.0
    %116 = vmatprep.subr.mxu0 0.0
    %117 = vmatpush1.msra.mxu0 0.0
    %118 = vmatprep.subr.mxu0 0.0
    %119 = vmatpush1.msra.mxu0 0.0
    %120 = vmatprep.subr.mxu0 0.0
    %121 = vmatpush1.msra.mxu0 0.0
    %122 = vmatprep.subr.mxu0 0.0
    %123 = vmatpush1.msra.mxu0 0.0
    %124 = vmatprep.subr.mxu0 0.0
    %125 = vmatpush1.msra.mxu0 0.0
    %126 = vmatprep.subr.mxu0 0.0
    %127 = vmatpush1.msra.mxu0 0.0
    %128 = vmatprep.subr.mxu0 0.0
    %129 = vmatpush1.msra.mxu0 0.0
    %130 = vmatprep.subr.mxu0 0.0
    %131 = vmatpush1.msra.mxu0 0.0
    %132 = vmatprep.subr.mxu0 0.0
    %133 = vmatpush1.msra.mxu0 0.0
    %134 = vmatprep.subr.mxu0 0.0
    %135 = vmatpush1.msra.mxu0 0.0
    %136 = vmatprep.subr.mxu0 0.0
    %137 = vmatpush1.msra.mxu0 0.0
    %138 = vmatprep.subr.mxu0 0.0
    %139 = vmatpush1.msra.mxu0 0.0
    %140 = vmatprep.subr.mxu0 0.0
    %141 = vmatpush1.msra.mxu0 0.0
    %142 = vmatprep.subr.mxu0 0.0
    %143 = vmatpush1.msra.mxu0 0.0
    %144 = vmatprep.subr.mxu0 0.0
    %145 = vmatpush1.msra.mxu0 0.0
    %146 = vmatprep.subr.mxu0 0.0
    %147 = vmatpush1.msra.mxu0 0.0
    %148 = vmatprep.subr.mxu0 0.0
    %149 = vmatpush1.msra.mxu0 0.0
    %150 = vmatprep.subr.mxu0 0.0
    %151 = vmatpush1.msra.mxu0 0.0
    %152 = vmatprep.subr.mxu0 0.0
    %153 = vmatpush1.msra.mxu0 0.0
    %154 = vmatprep.subr.mxu0 0.0
    %155 = vmatpush1.msra.mxu0 0.0
    %156 = vmatprep.subr.mxu0 0.0
    %157 = vmatpush1.msra.mxu0 0.0
    %158 = vmatprep.subr.mxu0 0.0
    %159 = vmatpush1.msra.mxu0 0.0
    %160 = vmatprep.subr.mxu0 0.0
    %161 = vmatpush1.msra.mxu0 0.0
    %162 = vmatprep.subr.mxu0 0.0
    %163 = vmatpush1.msra.mxu0 0.0
    %164 = vmatprep.subr.mxu0 0.0
    %165 = vmatpush1.msra.mxu0 0.0
    %166 = vmatprep.subr.mxu0 0.0
    %167 = vmatpush1.msra.mxu0 0.0
    %168 = vmatprep.mubr.f32.mxu0 0.0
    %169 = vmatmul.mubr.f32.gmra.mrb[0].mxu0 %v77
    %v170 = vpop.f32.mrb[0].mxu0
    %v171 = vadd.f32 %v73, %v170
    %v172 = vpop.f32.mrb[0].mxu0
    %173 = vmatprep.mubr.f32.mxu0 0.0
    %174 = vmatmul.mubr.f32.gmra.mrb[0].mxu0 %v80
    %v175 = vpop.f32.mrb[0].mxu0
    %v176 = vadd.f32 %v73, %v175
    %v177 = vpop.f32.mrb[0].mxu0
    %178 = vmatprep.mubr.f32.mxu0 0.0
    %179 = vmatmul.mubr.f32.gmra.mrb[0].mxu0 %v83
    %v180 = vpop.f32.mrb[0].mxu0
    %v181 = vadd.f32 %v73, %v180
    %v182 = vpop.f32.mrb[0].mxu0
    %183 = vmatprep.mubr.f32.mxu0 0.0
    %184 = vmatmul.mubr.f32.gmra.mrb[0].mxu0 %v86
    %v185 = vpop.f32.mrb[0].mxu0
    %v186 = vadd.f32 %v73, %v185
    %v187 = vpop.f32.mrb[0].mxu0
    %188 = vmatprep.mubr.f32.mxu0 0.0
    %189 = vmatmul.mubr.f32.gmra.mrb[0].mxu0 %v89
    %v190 = vpop.f32.mrb[0].mxu0
    %v191 = vadd.f32 %v73, %v190
    %v192 = vpop.f32.mrb[0].mxu0
    %193 = vmatprep.mubr.f32.mxu0 0.0
    %194 = vmatmul.mubr.f32.gmra.mrb[0].mxu0 %v92
    %v195 = vpop.f32.mrb[0].mxu0
    %v196 = vadd.f32 %v73, %v195
    %v197 = vpop.f32.mrb[0].mxu0
    %198 = vmatprep.mubr.f32.mxu0 0.0
    %199 = vmatmul.mubr.f32.gmra.mrb[0].mxu0 %v95
    %v200 = vpop.f32.mrb[0].mxu0
    %v201 = vadd.f32 %v73, %v200
    %v202 = vpop.f32.mrb[0].mxu0
    %203 = vmatprep.mubr.f32.mxu0 0.0
    %204 = vmatmul.mubr.f32.gmra.mrb[0].mxu0 %v98
    %v205 = vpop.f32.mrb[0].mxu0
    %v206 = vadd.f32 %v73, %v205
    %v207 = vpop.f32.mrb[0].mxu0
    %208 = vdwg.mxu0
    %209 = vst [vmem:[#allocation2] sm:$0xff] %v171
    %210 = vst [vmem:[#allocation2 + $0x8] sm:$0xff] %v176
    %211 = vst [vmem:[#allocation2 + $0x10] sm:$0xff] %v181
    %212 = vst [vmem:[#allocation2 + $0x18] sm:$0xff] %v186
    %213 = vst [vmem:[#allocation2 + $0x20] sm:$0xff] %v191
    %214 = vst [vmem:[#allocation2 + $0x28] sm:$0xff] %v196
    %215 = vst [vmem:[#allocation2 + $0x30] sm:$0xff] %v201
    %216 = vst [vmem:[#allocation2 + $0x38] sm:$0xff] %v206
    %v217 = vld [vmem:[%s2] sm:$0xff]
    %v218 = vld [vmem:[%s2 + $0x8] sm:$0xff]
    %v219 = vld [vmem:[%s2 + $0x10] sm:$0xff]
    %v220 = vld [vmem:[%s2 + $0x18] sm:$0xff]
    %v221 = vld [vmem:[#allocation2] sm:$0xff]
    %vm222 = vcmask 261120
    %v224 = vsel %vm222, 0.0, 0
    %226 = vmatprep.subr.mxu0 0.0
    %227 = vmatpush1.msra.mxu0 %v217
    %228 = vmatprep.subr.mxu0 0.0
    %229 = vmatpush1.msra.mxu0 %v218
    %230 = vmatprep.subr.mxu0 0.0
    %231 = vmatpush1.msra.mxu0 %v219
    %232 = vmatprep.subr.mxu0 0.0
    %233 = vmatpush1.msra.mxu0 %v220
    %234 = vmatprep.subr.mxu0 0.0
    %235 = vmatpush1.msra.mxu0 0.0
    %236 = vmatprep.subr.mxu0 0.0
    %237 = vmatpush1.msra.mxu0 0.0
    %238 = vmatprep.subr.mxu0 0.0
    %239 = vmatpush1.msra.mxu0 0.0
    %240 = vmatprep.subr.mxu0 0.0
    %241 = vmatpush1.msra.mxu0 0.0
    %242 = vmatprep.subr.mxu0 0.0
    %243 = vmatpush1.msra.mxu0 0.0
    %244 = vmatprep.subr.mxu0 0.0
    %245 = vmatpush1.msra.mxu0 0.0
    %246 = vmatprep.subr.mxu0 0.0
    %247 = vmatpush1.msra.mxu0 0.0
    %248 = vmatprep.subr.mxu0 0.0
    %249 = vmatpush1.msra.mxu0 0.0
    %250 = vmatprep.subr.mxu0 0.0
    %251 = vmatpush1.msra.mxu0 0.0
    %252 = vmatprep.subr.mxu0 0.0
    %253 = vmatpush1.msra.mxu0 0.0
    %254 = vmatprep.subr.mxu0 0.0
    %255 = vmatpush1.msra.mxu0 0.0
    %256 = vmatprep.subr.mxu0 0.0
    %257 = vmatpush1.msra.mxu0 0.0
    %258 = vmatprep.subr.mxu0 0.0
    %259 = vmatpush1.msra.mxu0 0.0
    %260 = vmatprep.subr.mxu0 0.0
    %261 = vmatpush1.msra.mxu0 0.0
    %262 = vmatprep.subr.mxu0 0.0
    %263 = vmatpush1.msra.mxu0 0.0
    %264 = vmatprep.subr.mxu0 0.0
    %265 = vmatpush1.msra.mxu0 0.0
    %266 = vmatprep.subr.mxu0 0.0
    %267 = vmatpush1.msra.mxu0 0.0
    %268 = vmatprep.subr.mxu0 0.0
    %269 = vmatpush1.msra.mxu0 0.0
    %270 = vmatprep.subr.mxu0 0.0
    %271 = vmatpush1.msra.mxu0 0.0
    %272 = vmatprep.subr.mxu0 0.0
    %273 = vmatpush1.msra.mxu0 0.0
    %274 = vmatprep.subr.mxu0 0.0
    %275 = vmatpush1.msra.mxu0 0.0
    %276 = vmatprep.subr.mxu0 0.0
    %277 = vmatpush1.msra.mxu0 0.0
    %278 = vmatprep.subr.mxu0 0.0
    %279 = vmatpush1.msra.mxu0 0.0
    %280 = vmatprep.subr.mxu0 0.0
    %281 = vmatpush1.msra.mxu0 0.0
    %282 = vmatprep.subr.mxu0 0.0
    %283 = vmatpush1.msra.mxu0 0.0
    %284 = vmatprep.subr.mxu0 0.0
    %285 = vmatpush1.msra.mxu0 0.0
    %286 = vmatprep.subr.mxu0 0.0
    %287 = vmatpush1.msra.mxu0 0.0
    %288 = vmatprep.subr.mxu0 0.0
    %289 = vmatpush1.msra.mxu0 0.0
    %290 = vmatprep.mubr.f32.mxu0 0.0
    %291 = vmatmul.mubr.f32.gmra.mrb[0].mxu0 %v224
    %v292 = vpop.f32.mrb[0].mxu0
    %v293 = vadd.f32 0.0, %v292
    %v294 = vpop.f32.mrb[0].mxu0
    %295 = vdwg.mxu0
    %v296 = vadd.f32 %v221, %v293
    %v297 = vxor.u32 %v296, 2147483648
    %v298 = vmul.f32 %v297, 1.442695
    %v299 = vpow.pop %v298
    %v300 = vadd.f32 %v299, 1.0
    %v301 = vrcp.pop %v300
    %v302 = vmul.f32 1.0, %v301
    %v303 = vtanh.pop %v296
    %v304 = vmul.f32 %v302, 0.0
    %306 = vrot.lane.b32.xlu0 %v303, 64
    %v307 = vpop.permute.xlu0 %306
    %v309 = vmul.f32 %v302, %v307
    %311 = vrot.lane.b32.xlu0 %v309, 32
    %v312 = vpop.permute.xlu0 %311
    %v314 = vadd.f32 %v304, %v312
    %v315 = vtanh.pop %v314
    %317 = vrot.lane.b32.xlu0 %v315, 64
    %v318 = vpop.permute.xlu0 %317
    %v320 = vmul.f32 %v302, %v318
    %322 = vrot.lane.b32.xlu0 %v320, 32
    %v323 = vpop.permute.xlu0 %322
    %325 = vst.msk [vmem:[#allocation3] sm:$0xff] %vm222, %v323
    %v326 = vld [vmem:[#allocation2 + $0x8] sm:$0xff]
    %v327 = vsel %vm222, %v323, 0
    %329 = vmatprep.subr.mxu0 0.0
    %330 = vmatpush1.msra.mxu0 %v217
    %331 = vmatprep.subr.mxu0 0.0
    %332 = vmatpush1.msra.mxu0 %v218
    %333 = vmatprep.subr.mxu0 0.0
    %334 = vmatpush1.msra.mxu0 %v219
    %335 = vmatprep.subr.mxu0 0.0
    %336 = vmatpush1.msra.mxu0 %v220
    %337 = vmatprep.subr.mxu0 0.0
    %338 = vmatpush1.msra.mxu0 0.0
    %339 = vmatprep.subr.mxu0 0.0
    %340 = vmatpush1.msra.mxu0 0.0
    %341 = vmatprep.subr.mxu0 0.0
    %342 = vmatpush1.msra.mxu0 0.0
    %343 = vmatprep.subr.mxu0 0.0
    %344 = vmatpush1.msra.mxu0 0.0
    %345 = vmatprep.subr.mxu0 0.0
    %346 = vmatpush1.msra.mxu0 0.0
    %347 = vmatprep.subr.mxu0 0.0
    %348 = vmatpush1.msra.mxu0 0.0
    %349 = vmatprep.subr.mxu0 0.0
    %350 = vmatpush1.msra.mxu0 0.0
    %351 = vmatprep.subr.mxu0 0.0
    %352 = vmatpush1.msra.mxu0 0.0
    %353 = vmatprep.subr.mxu0 0.0
    %354 = vmatpush1.msra.mxu0 0.0
    %355 = vmatprep.subr.mxu0 0.0
    %356 = vmatpush1.msra.mxu0 0.0
    %357 = vmatprep.subr.mxu0 0.0
    %358 = vmatpush1.msra.mxu0 0.0
    %359 = vmatprep.subr.mxu0 0.0
    %360 = vmatpush1.msra.mxu0 0.0
    %361 = vmatprep.subr.mxu0 0.0
    %362 = vmatpush1.msra.mxu0 0.0
    %363 = vmatprep.subr.mxu0 0.0
    %364 = vmatpush1.msra.mxu0 0.0
    %365 = vmatprep.subr.mxu0 0.0
    %366 = vmatpush1.msra.mxu0 0.0
    %367 = vmatprep.subr.mxu0 0.0
    %368 = vmatpush1.msra.mxu0 0.0
    %369 = vmatprep.subr.mxu0 0.0
    %370 = vmatpush1.msra.mxu0 0.0
    %371 = vmatprep.subr.mxu0 0.0
    %372 = vmatpush1.msra.mxu0 0.0
    %373 = vmatprep.subr.mxu0 0.0
    %374 = vmatpush1.msra.mxu0 0.0
    %375 = vmatprep.subr.mxu0 0.0
    %376 = vmatpush1.msra.mxu0 0.0
    %377 = vmatprep.subr.mxu0 0.0
    %378 = vmatpush1.msra.mxu0 0.0
    %379 = vmatprep.subr.mxu0 0.0
    %380 = vmatpush1.msra.mxu0 0.0
    %381 = vmatprep.subr.mxu0 0.0
    %382 = vmatpush1.msra.mxu0 0.0
    %383 = vmatprep.subr.mxu0 0.0
    %384 = vmatpush1.msra.mxu0 0.0
    %385 = vmatprep.subr.mxu0 0.0
    %386 = vmatpush1.msra.mxu0 0.0
    %387 = vmatprep.subr.mxu0 0.0
    %388 = vmatpush1.msra.mxu0 0.0
    %389 = vmatprep.subr.mxu0 0.0
    %390 = vmatpush1.msra.mxu0 0.0
    %391 = vmatprep.subr.mxu0 0.0
    %392 = vmatpush1.msra.mxu0 0.0
    %393 = vmatprep.mubr.f32.mxu0 0.0
    %394 = vmatmul.mubr.f32.gmra.mrb[0].mxu0 %v327
    %v395 = vpop.f32.mrb[0].mxu0
    %v396 = vadd.f32 0.0, %v395
    %v397 = vpop.f32.mrb[0].mxu0
    %398 = vdwg.mxu0
    %v399 = vadd.f32 %v326, %v396
    %v400 = vxor.u32 %v399, 2147483648
    %v401 = vmul.f32 %v400, 1.442695
    %v402 = vpow.pop %v401
    %v403 = vadd.f32 %v402, 1.0
    %v404 = vrcp.pop %v403
    %v405 = vmul.f32 1.0, %v404
    %v406 = vtanh.pop %v399
    %v407 = vmul.f32 %v405, %v314
    %409 = vrot.lane.b32.xlu0 %v406, 64
    %v410 = vpop.permute.xlu0 %409
    %v412 = vmul.f32 %v405, %v410
    %414 = vrot.lane.b32.xlu0 %v412, 32
    %v415 = vpop.permute.xlu0 %414
    %v417 = vadd.f32 %v407, %v415
    %v418 = vtanh.pop %v417
    %420 = vrot.lane.b32.xlu0 %v418, 64
    %v421 = vpop.permute.xlu0 %420
    %v423 = vmul.f32 %v405, %v421
    %425 = vrot.lane.b32.xlu0 %v423, 32
    %v426 = vpop.permute.xlu0 %425
    %428 = vst.msk [vmem:[#allocation3 + $0x8] sm:$0xff] %vm222, %v426
    %v429 = vld [vmem:[#allocation2 + $0x10] sm:$0xff]
    %v430 = vsel %vm222, %v426, 0
    %432 = vmatprep.subr.mxu0 0.0
    %433 = vmatpush1.msra.mxu0 %v217
    %434 = vmatprep.subr.mxu0 0.0
    %435 = vmatpush1.msra.mxu0 %v218
    %436 = vmatprep.subr.mxu0 0.0
    %437 = vmatpush1.msra.mxu0 %v219
    %438 = vmatprep.subr.mxu0 0.0
    %439 = vmatpush1.msra.mxu0 %v220
    %440 = vmatprep.subr.mxu0 0.0
    %441 = vmatpush1.msra.mxu0 0.0
    %442 = vmatprep.subr.mxu0 0.0
    %443 = vmatpush1.msra.mxu0 0.0
    %444 = vmatprep.subr.mxu0 0.0
    %445 = vmatpush1.msra.mxu0 0.0
    %446 = vmatprep.subr.mxu0 0.0
    %447 = vmatpush1.msra.mxu0 0.0
    %448 = vmatprep.subr.mxu0 0.0
    %449 = vmatpush1.msra.mxu0 0.0
    %450 = vmatprep.subr.mxu0 0.0
    %451 = vmatpush1.msra.mxu0 0.0
    %452 = vmatprep.subr.mxu0 0.0
    %453 = vmatpush1.msra.mxu0 0.0
    %454 = vmatprep.subr.mxu0 0.0
    %455 = vmatpush1.msra.mxu0 0.0
    %456 = vmatprep.subr.mxu0 0.0
    %457 = vmatpush1.msra.mxu0 0.0
    %458 = vmatprep.subr.mxu0 0.0
    %459 = vmatpush1.msra.mxu0 0.0
    %460 = vmatprep.subr.mxu0 0.0
    %461 = vmatpush1.msra.mxu0 0.0
    %462 = vmatprep.subr.mxu0 0.0
    %463 = vmatpush1.msra.mxu0 0.0
    %464 = vmatprep.subr.mxu0 0.0
    %465 = vmatpush1.msra.mxu0 0.0
    %466 = vmatprep.subr.mxu0 0.0
    %467 = vmatpush1.msra.mxu0 0.0
    %468 = vmatprep.subr.mxu0 0.0
    %469 = vmatpush1.msra.mxu0 0.0
    %470 = vmatprep.subr.mxu0 0.0
    %471 = vmatpush1.msra.mxu0 0.0
    %472 = vmatprep.subr.mxu0 0.0
    %473 = vmatpush1.msra.mxu0 0.0
    %474 = vmatprep.subr.mxu0 0.0
    %475 = vmatpush1.msra.mxu0 0.0
    %476 = vmatprep.subr.mxu0 0.0
    %477 = vmatpush1.msra.mxu0 0.0
    %478 = vmatprep.subr.mxu0 0.0
    %479 = vmatpush1.msra.mxu0 0.0
    %480 = vmatprep.subr.mxu0 0.0
    %481 = vmatpush1.msra.mxu0 0.0
    %482 = vmatprep.subr.mxu0 0.0
    %483 = vmatpush1.msra.mxu0 0.0
    %484 = vmatprep.subr.mxu0 0.0
    %485 = vmatpush1.msra.mxu0 0.0
    %486 = vmatprep.subr.mxu0 0.0
    %487 = vmatpush1.msra.mxu0 0.0
    %488 = vmatprep.subr.mxu0 0.0
    %489 = vmatpush1.msra.mxu0 0.0
    %490 = vmatprep.subr.mxu0 0.0
    %491 = vmatpush1.msra.mxu0 0.0
    %492 = vmatprep.subr.mxu0 0.0
    %493 = vmatpush1.msra.mxu0 0.0
    %494 = vmatprep.subr.mxu0 0.0
    %495 = vmatpush1.msra.mxu0 0.0
    %496 = vmatprep.mubr.f32.mxu0 0.0
    %497 = vmatmul.mubr.f32.gmra.mrb[0].mxu0 %v430
    %v498 = vpop.f32.mrb[0].mxu0
    %v499 = vadd.f32 0.0, %v498
    %v500 = vpop.f32.mrb[0].mxu0
    %501 = vdwg.mxu0
    %v502 = vadd.f32 %v429, %v499
    %v503 = vxor.u32 %v502, 2147483648
    %v504 = vmul.f32 %v503, 1.442695
    %v505 = vpow.pop %v504
    %v506 = vadd.f32 %v505, 1.0
    %v507 = vrcp.pop %v506
    %v508 = vmul.f32 1.0, %v507
    %v509 = vtanh.pop %v502
    %v510 = vmul.f32 %v508, %v417
    %512 = vrot.lane.b32.xlu0 %v509, 64
    %v513 = vpop.permute.xlu0 %512
    %v515 = vmul.f32 %v508, %v513
    %517 = vrot.lane.b32.xlu0 %v515, 32
    %v518 = vpop.permute.xlu0 %517
    %v520 = vadd.f32 %v510, %v518
    %v521 = vtanh.pop %v520
    %523 = vrot.lane.b32.xlu0 %v521, 64
    %v524 = vpop.permute.xlu0 %523
    %v526 = vmul.f32 %v508, %v524
    %528 = vrot.lane.b32.xlu0 %v526, 32
    %v529 = vpop.permute.xlu0 %528
    %531 = vst.msk [vmem:[#allocation3 + $0x10] sm:$0xff] %vm222, %v529
    %v532 = vld [vmem:[#allocation2 + $0x18] sm:$0xff]
    %v533 = vsel %vm222, %v529, 0
    %535 = vmatprep.subr.mxu0 0.0
    %536 = vmatpush1.msra.mxu0 %v217
    %537 = vmatprep.subr.mxu0 0.0
    %538 = vmatpush1.msra.mxu0 %v218
    %539 = vmatprep.subr.mxu0 0.0
    %540 = vmatpush1.msra.mxu0 %v219
    %541 = vmatprep.subr.mxu0 0.0
    %542 = vmatpush1.msra.mxu0 %v220
    %543 = vmatprep.subr.mxu0 0.0
    %544 = vmatpush1.msra.mxu0 0.0
    %545 = vmatprep.subr.mxu0 0.0
    %546 = vmatpush1.msra.mxu0 0.0
    %547 = vmatprep.subr.mxu0 0.0
    %548 = vmatpush1.msra.mxu0 0.0
    %549 = vmatprep.subr.mxu0 0.0
    %550 = vmatpush1.msra.mxu0 0.0
    %551 = vmatprep.subr.mxu0 0.0
    %552 = vmatpush1.msra.mxu0 0.0
    %553 = vmatprep.subr.mxu0 0.0
    %554 = vmatpush1.msra.mxu0 0.0
    %555 = vmatprep.subr.mxu0 0.0
    %556 = vmatpush1.msra.mxu0 0.0
    %557 = vmatprep.subr.mxu0 0.0
    %558 = vmatpush1.msra.mxu0 0.0
    %559 = vmatprep.subr.mxu0 0.0
    %560 = vmatpush1.msra.mxu0 0.0
    %561 = vmatprep.subr.mxu0 0.0
    %562 = vmatpush1.msra.mxu0 0.0
    %563 = vmatprep.subr.mxu0 0.0
    %564 = vmatpush1.msra.mxu0 0.0
    %565 = vmatprep.subr.mxu0 0.0
    %566 = vmatpush1.msra.mxu0 0.0
    %567 = vmatprep.subr.mxu0 0.0
    %568 = vmatpush1.msra.mxu0 0.0
    %569 = vmatprep.subr.mxu0 0.0
    %570 = vmatpush1.msra.mxu0 0.0
    %571 = vmatprep.subr.mxu0 0.0
    %572 = vmatpush1.msra.mxu0 0.0
    %573 = vmatprep.subr.mxu0 0.0
    %574 = vmatpush1.msra.mxu0 0.0
    %575 = vmatprep.subr.mxu0 0.0
    %576 = vmatpush1.msra.mxu0 0.0
    %577 = vmatprep.subr.mxu0 0.0
    %578 = vmatpush1.msra.mxu0 0.0
    %579 = vmatprep.subr.mxu0 0.0
    %580 = vmatpush1.msra.mxu0 0.0
    %581 = vmatprep.subr.mxu0 0.0
    %582 = vmatpush1.msra.mxu0 0.0
    %583 = vmatprep.subr.mxu0 0.0
    %584 = vmatpush1.msra.mxu0 0.0
    %585 = vmatprep.subr.mxu0 0.0
    %586 = vmatpush1.msra.mxu0 0.0
    %587 = vmatprep.subr.mxu0 0.0
    %588 = vmatpush1.msra.mxu0 0.0
    %589 = vmatprep.subr.mxu0 0.0
    %590 = vmatpush1.msra.mxu0 0.0
    %591 = vmatprep.subr.mxu0 0.0
    %592 = vmatpush1.msra.mxu0 0.0
    %593 = vmatprep.subr.mxu0 0.0
    %594 = vmatpush1.msra.mxu0 0.0
    %595 = vmatprep.subr.mxu0 0.0
    %596 = vmatpush1.msra.mxu0 0.0
    %597 = vmatprep.subr.mxu0 0.0
    %598 = vmatpush1.msra.mxu0 0.0
    %599 = vmatprep.mubr.f32.mxu0 0.0
    %600 = vmatmul.mubr.f32.gmra.mrb[0].mxu0 %v533
    %v601 = vpop.f32.mrb[0].mxu0
    %v602 = vadd.f32 0.0, %v601
    %v603 = vpop.f32.mrb[0].mxu0
    %604 = vdwg.mxu0
    %v605 = vadd.f32 %v532, %v602
    %v606 = vxor.u32 %v605, 2147483648
    %v607 = vmul.f32 %v606, 1.442695
    %v608 = vpow.pop %v607
    %v609 = vadd.f32 %v608, 1.0
    %v610 = vrcp.pop %v609
    %v611 = vmul.f32 1.0, %v610
    %v612 = vtanh.pop %v605
    %v613 = vmul.f32 %v611, %v520
    %615 = vrot.lane.b32.xlu0 %v612, 64
    %v616 = vpop.permute.xlu0 %615
    %v618 = vmul.f32 %v611, %v616
    %620 = vrot.lane.b32.xlu0 %v618, 32
    %v621 = vpop.permute.xlu0 %620
    %v623 = vadd.f32 %v613, %v621
    %v624 = vtanh.pop %v623
    %626 = vrot.lane.b32.xlu0 %v624, 64
    %v627 = vpop.permute.xlu0 %626
    %v629 = vmul.f32 %v611, %v627
    %631 = vrot.lane.b32.xlu0 %v629, 32
    %v632 = vpop.permute.xlu0 %631
    %634 = vst.msk [vmem:[#allocation3 + $0x18] sm:$0xff] %vm222, %v632
    %v635 = vld [vmem:[#allocation2 + $0x20] sm:$0xff]
    %v636 = vsel %vm222, %v632, 0
    %638 = vmatprep.subr.mxu0 0.0
    %639 = vmatpush1.msra.mxu0 %v217
    %640 = vmatprep.subr.mxu0 0.0
    %641 = vmatpush1.msra.mxu0 %v218
    %642 = vmatprep.subr.mxu0 0.0
    %643 = vmatpush1.msra.mxu0 %v219
    %644 = vmatprep.subr.mxu0 0.0
    %645 = vmatpush1.msra.mxu0 %v220
    %646 = vmatprep.subr.mxu0 0.0
    %647 = vmatpush1.msra.mxu0 0.0
    %648 = vmatprep.subr.mxu0 0.0
    %649 = vmatpush1.msra.mxu0 0.0
    %650 = vmatprep.subr.mxu0 0.0
    %651 = vmatpush1.msra.mxu0 0.0
    %652 = vmatprep.subr.mxu0 0.0
    %653 = vmatpush1.msra.mxu0 0.0
    %654 = vmatprep.subr.mxu0 0.0
    %655 = vmatpush1.msra.mxu0 0.0
    %656 = vmatprep.subr.mxu0 0.0
    %657 = vmatpush1.msra.mxu0 0.0
    %658 = vmatprep.subr.mxu0 0.0
    %659 = vmatpush1.msra.mxu0 0.0
    %660 = vmatprep.subr.mxu0 0.0
    %661 = vmatpush1.msra.mxu0 0.0
    %662 = vmatprep.subr.mxu0 0.0
    %663 = vmatpush1.msra.mxu0 0.0
    %664 = vmatprep.subr.mxu0 0.0
    %665 = vmatpush1.msra.mxu0 0.0
    %666 = vmatprep.subr.mxu0 0.0
    %667 = vmatpush1.msra.mxu0 0.0
    %668 = vmatprep.subr.mxu0 0.0
    %669 = vmatpush1.msra.mxu0 0.0
    %670 = vmatprep.subr.mxu0 0.0
    %671 = vmatpush1.msra.mxu0 0.0
    %672 = vmatprep.subr.mxu0 0.0
    %673 = vmatpush1.msra.mxu0 0.0
    %674 = vmatprep.subr.mxu0 0.0
    %675 = vmatpush1.msra.mxu0 0.0
    %676 = vmatprep.subr.mxu0 0.0
    %677 = vmatpush1.msra.mxu0 0.0
    %678 = vmatprep.subr.mxu0 0.0
    %679 = vmatpush1.msra.mxu0 0.0
    %680 = vmatprep.subr.mxu0 0.0
    %681 = vmatpush1.msra.mxu0 0.0
    %682 = vmatprep.subr.mxu0 0.0
    %683 = vmatpush1.msra.mxu0 0.0
    %684 = vmatprep.subr.mxu0 0.0
    %685 = vmatpush1.msra.mxu0 0.0
    %686 = vmatprep.subr.mxu0 0.0
    %687 = vmatpush1.msra.mxu0 0.0
    %688 = vmatprep.subr.mxu0 0.0
    %689 = vmatpush1.msra.mxu0 0.0
    %690 = vmatprep.subr.mxu0 0.0
    %691 = vmatpush1.msra.mxu0 0.0
    %692 = vmatprep.subr.mxu0 0.0
    %693 = vmatpush1.msra.mxu0 0.0
    %694 = vmatprep.subr.mxu0 0.0
    %695 = vmatpush1.msra.mxu0 0.0
    %696 = vmatprep.subr.mxu0 0.0
    %697 = vmatpush1.msra.mxu0 0.0
    %698 = vmatprep.subr.mxu0 0.0
    %699 = vmatpush1.msra.mxu0 0.0
    %700 = vmatprep.subr.mxu0 0.0
    %701 = vmatpush1.msra.mxu0 0.0
    %702 = vmatprep.mubr.f32.mxu0 0.0
    %703 = vmatmul.mubr.f32.gmra.mrb[0].mxu0 %v636
    %v704 = vpop.f32.mrb[0].mxu0
    %v705 = vadd.f32 0.0, %v704
    %v706 = vpop.f32.mrb[0].mxu0
    %707 = vdwg.mxu0
    %v708 = vadd.f32 %v635, %v705
    %v709 = vxor.u32 %v708, 2147483648
    %v710 = vmul.f32 %v709, 1.442695
    %v711 = vpow.pop %v710
    %v712 = vadd.f32 %v711, 1.0
    %v713 = vrcp.pop %v712
    %v714 = vmul.f32 1.0, %v713
    %v715 = vtanh.pop %v708
    %v716 = vmul.f32 %v714, %v623
    %718 = vrot.lane.b32.xlu0 %v715, 64
    %v719 = vpop.permute.xlu0 %718
    %v721 = vmul.f32 %v714, %v719
    %723 = vrot.lane.b32.xlu0 %v721, 32
    %v724 = vpop.permute.xlu0 %723
    %v726 = vadd.f32 %v716, %v724
    %v727 = vtanh.pop %v726
    %729 = vrot.lane.b32.xlu0 %v727, 64
    %v730 = vpop.permute.xlu0 %729
    %v732 = vmul.f32 %v714, %v730
    %734 = vrot.lane.b32.xlu0 %v732, 32
    %v735 = vpop.permute.xlu0 %734
    %737 = vst.msk [vmem:[#allocation3 + $0x20] sm:$0xff] %vm222, %v735
    %v738 = vld [vmem:[#allocation2 + $0x28] sm:$0xff]
    %v739 = vsel %vm222, %v735, 0
    %741 = vmatprep.subr.mxu0 0.0
    %742 = vmatpush1.msra.mxu0 %v217
    %743 = vmatprep.subr.mxu0 0.0
    %744 = vmatpush1.msra.mxu0 %v218
    %745 = vmatprep.subr.mxu0 0.0
    %746 = vmatpush1.msra.mxu0 %v219
    %747 = vmatprep.subr.mxu0 0.0
    %748 = vmatpush1.msra.mxu0 %v220
    %749 = vmatprep.subr.mxu0 0.0
    %750 = vmatpush1.msra.mxu0 0.0
    %751 = vmatprep.subr.mxu0 0.0
    %752 = vmatpush1.msra.mxu0 0.0
    %753 = vmatprep.subr.mxu0 0.0
    %754 = vmatpush1.msra.mxu0 0.0
    %755 = vmatprep.subr.mxu0 0.0
    %756 = vmatpush1.msra.mxu0 0.0
    %757 = vmatprep.subr.mxu0 0.0
    %758 = vmatpush1.msra.mxu0 0.0
    %759 = vmatprep.subr.mxu0 0.0
    %760 = vmatpush1.msra.mxu0 0.0
    %761 = vmatprep.subr.mxu0 0.0
    %762 = vmatpush1.msra.mxu0 0.0
    %763 = vmatprep.subr.mxu0 0.0
    %764 = vmatpush1.msra.mxu0 0.0
    %765 = vmatprep.subr.mxu0 0.0
    %766 = vmatpush1.msra.mxu0 0.0
    %767 = vmatprep.subr.mxu0 0.0
    %768 = vmatpush1.msra.mxu0 0.0
    %769 = vmatprep.subr.mxu0 0.0
    %770 = vmatpush1.msra.mxu0 0.0
    %771 = vmatprep.subr.mxu0 0.0
    %772 = vmatpush1.msra.mxu0 0.0
    %773 = vmatprep.subr.mxu0 0.0
    %774 = vmatpush1.msra.mxu0 0.0
    %775 = vmatprep.subr.mxu0 0.0
    %776 = vmatpush1.msra.mxu0 0.0
    %777 = vmatprep.subr.mxu0 0.0
    %778 = vmatpush1.msra.mxu0 0.0
    %779 = vmatprep.subr.mxu0 0.0
    %780 = vmatpush1.msra.mxu0 0.0
    %781 = vmatprep.subr.mxu0 0.0
    %782 = vmatpush1.msra.mxu0 0.0
    %783 = vmatprep.subr.mxu0 0.0
    %784 = vmatpush1.msra.mxu0 0.0
    %785 = vmatprep.subr.mxu0 0.0
    %786 = vmatpush1.msra.mxu0 0.0
    %787 = vmatprep.subr.mxu0 0.0
    %788 = vmatpush1.msra.mxu0 0.0
    %789 = vmatprep.subr.mxu0 0.0
    %790 = vmatpush1.msra.mxu0 0.0
    %791 = vmatprep.subr.mxu0 0.0
    %792 = vmatpush1.msra.mxu0 0.0
    %793 = vmatprep.subr.mxu0 0.0
    %794 = vmatpush1.msra.mxu0 0.0
    %795 = vmatprep.subr.mxu0 0.0
    %796 = vmatpush1.msra.mxu0 0.0
    %797 = vmatprep.subr.mxu0 0.0
    %798 = vmatpush1.msra.mxu0 0.0
    %799 = vmatprep.subr.mxu0 0.0
    %800 = vmatpush1.msra.mxu0 0.0
    %801 = vmatprep.subr.mxu0 0.0
    %802 = vmatpush1.msra.mxu0 0.0
    %803 = vmatprep.subr.mxu0 0.0
    %804 = vmatpush1.msra.mxu0 0.0
    %805 = vmatprep.mubr.f32.mxu0 0.0
    %806 = vmatmul.mubr.f32.gmra.mrb[0].mxu0 %v739
    %v807 = vpop.f32.mrb[0].mxu0
    %v808 = vadd.f32 0.0, %v807
    %v809 = vpop.f32.mrb[0].mxu0
    %810 = vdwg.mxu0
    %v811 = vadd.f32 %v738, %v808
    %v812 = vxor.u32 %v811, 2147483648
    %v813 = vmul.f32 %v812, 1.442695
    %v814 = vpow.pop %v813
    %v815 = vadd.f32 %v814, 1.0
    %v816 = vrcp.pop %v815
    %v817 = vmul.f32 1.0, %v816
    %v818 = vtanh.pop %v811
    %v819 = vmul.f32 %v817, %v726
    %821 = vrot.lane.b32.xlu0 %v818, 64
    %v822 = vpop.permute.xlu0 %821
    %v824 = vmul.f32 %v817, %v822
    %826 = vrot.lane.b32.xlu0 %v824, 32
    %v827 = vpop.permute.xlu0 %826
    %v829 = vadd.f32 %v819, %v827
    %v830 = vtanh.pop %v829
    %832 = vrot.lane.b32.xlu0 %v830, 64
    %v833 = vpop.permute.xlu0 %832
    %v835 = vmul.f32 %v817, %v833
    %837 = vrot.lane.b32.xlu0 %v835, 32
    %v838 = vpop.permute.xlu0 %837
    %840 = vst.msk [vmem:[#allocation3 + $0x28] sm:$0xff] %vm222, %v838
    %v841 = vld [vmem:[#allocation2 + $0x30] sm:$0xff]
    %v842 = vsel %vm222, %v838, 0
    %844 = vmatprep.subr.mxu0 0.0
    %845 = vmatpush1.msra.mxu0 %v217
    %846 = vmatprep.subr.mxu0 0.0
    %847 = vmatpush1.msra.mxu0 %v218
    %848 = vmatprep.subr.mxu0 0.0
    %849 = vmatpush1.msra.mxu0 %v219
    %850 = vmatprep.subr.mxu0 0.0
    %851 = vmatpush1.msra.mxu0 %v220
    %852 = vmatprep.subr.mxu0 0.0
    %853 = vmatpush1.msra.mxu0 0.0
    %854 = vmatprep.subr.mxu0 0.0
    %855 = vmatpush1.msra.mxu0 0.0
    %856 = vmatprep.subr.mxu0 0.0
    %857 = vmatpush1.msra.mxu0 0.0
    %858 = vmatprep.subr.mxu0 0.0
    %859 = vmatpush1.msra.mxu0 0.0
    %860 = vmatprep.subr.mxu0 0.0
    %861 = vmatpush1.msra.mxu0 0.0
    %862 = vmatprep.subr.mxu0 0.0
    %863 = vmatpush1.msra.mxu0 0.0
    %864 = vmatprep.subr.mxu0 0.0
    %865 = vmatpush1.msra.mxu0 0.0
    %866 = vmatprep.subr.mxu0 0.0
    %867 = vmatpush1.msra.mxu0 0.0
    %868 = vmatprep.subr.mxu0 0.0
    %869 = vmatpush1.msra.mxu0 0.0
    %870 = vmatprep.subr.mxu0 0.0
    %871 = vmatpush1.msra.mxu0 0.0
    %872 = vmatprep.subr.mxu0 0.0
    %873 = vmatpush1.msra.mxu0 0.0
    %874 = vmatprep.subr.mxu0 0.0
    %875 = vmatpush1.msra.mxu0 0.0
    %876 = vmatprep.subr.mxu0 0.0
    %877 = vmatpush1.msra.mxu0 0.0
    %878 = vmatprep.subr.mxu0 0.0
    %879 = vmatpush1.msra.mxu0 0.0
    %880 = vmatprep.subr.mxu0 0.0
    %881 = vmatpush1.msra.mxu0 0.0
    %882 = vmatprep.subr.mxu0 0.0
    %883 = vmatpush1.msra.mxu0 0.0
    %884 = vmatprep.subr.mxu0 0.0
    %885 = vmatpush1.msra.mxu0 0.0
    %886 = vmatprep.subr.mxu0 0.0
    %887 = vmatpush1.msra.mxu0 0.0
    %888 = vmatprep.subr.mxu0 0.0
    %889 = vmatpush1.msra.mxu0 0.0
    %890 = vmatprep.subr.mxu0 0.0
    %891 = vmatpush1.msra.mxu0 0.0
    %892 = vmatprep.subr.mxu0 0.0
    %893 = vmatpush1.msra.mxu0 0.0
    %894 = vmatprep.subr.mxu0 0.0
    %895 = vmatpush1.msra.mxu0 0.0
    %896 = vmatprep.subr.mxu0 0.0
    %897 = vmatpush1.msra.mxu0 0.0
    %898 = vmatprep.subr.mxu0 0.0
    %899 = vmatpush1.msra.mxu0 0.0
    %900 = vmatprep.subr.mxu0 0.0
    %901 = vmatpush1.msra.mxu0 0.0
    %902 = vmatprep.subr.mxu0 0.0
    %903 = vmatpush1.msra.mxu0 0.0
    %904 = vmatprep.subr.mxu0 0.0
    %905 = vmatpush1.msra.mxu0 0.0
    %906 = vmatprep.subr.mxu0 0.0
    %907 = vmatpush1.msra.mxu0 0.0
    %908 = vmatprep.mubr.f32.mxu0 0.0
    %909 = vmatmul.mubr.f32.gmra.mrb[0].mxu0 %v842
    %v910 = vpop.f32.mrb[0].mxu0
    %v911 = vadd.f32 0.0, %v910
    %v912 = vpop.f32.mrb[0].mxu0
    %913 = vdwg.mxu0
    %v914 = vadd.f32 %v841, %v911
    %v915 = vxor.u32 %v914, 2147483648
    %v916 = vmul.f32 %v915, 1.442695
    %v917 = vpow.pop %v916
    %v918 = vadd.f32 %v917, 1.0
    %v919 = vrcp.pop %v918
    %v920 = vmul.f32 1.0, %v919
    %v921 = vtanh.pop %v914
    %v922 = vmul.f32 %v920, %v829
    %924 = vrot.lane.b32.xlu0 %v921, 64
    %v925 = vpop.permute.xlu0 %924
    %v927 = vmul.f32 %v920, %v925
    %929 = vrot.lane.b32.xlu0 %v927, 32
    %v930 = vpop.permute.xlu0 %929
    %v932 = vadd.f32 %v922, %v930
    %v933 = vtanh.pop %v932
    %935 = vrot.lane.b32.xlu0 %v933, 64
    %v936 = vpop.permute.xlu0 %935
    %v938 = vmul.f32 %v920, %v936
    %940 = vrot.lane.b32.xlu0 %v938, 32
    %v941 = vpop.permute.xlu0 %940
    %943 = vst.msk [vmem:[#allocation3 + $0x30] sm:$0xff] %vm222, %v941
    %v944 = vld [vmem:[#allocation2 + $0x38] sm:$0xff]
    %v945 = vsel %vm222, %v941, 0
    %947 = vmatprep.subr.mxu0 0.0
    %948 = vmatpush1.msra.mxu0 %v217
    %949 = vmatprep.subr.mxu0 0.0
    %950 = vmatpush1.msra.mxu0 %v218
    %951 = vmatprep.subr.mxu0 0.0
    %952 = vmatpush1.msra.mxu0 %v219
    %953 = vmatprep.subr.mxu0 0.0
    %954 = vmatpush1.msra.mxu0 %v220
    %955 = vmatprep.subr.mxu0 0.0
    %956 = vmatpush1.msra.mxu0 0.0
    %957 = vmatprep.subr.mxu0 0.0
    %958 = vmatpush1.msra.mxu0 0.0
    %959 = vmatprep.subr.mxu0 0.0
    %960 = vmatpush1.msra.mxu0 0.0
    %961 = vmatprep.subr.mxu0 0.0
    %962 = vmatpush1.msra.mxu0 0.0
    %963 = vmatprep.subr.mxu0 0.0
    %964 = vmatpush1.msra.mxu0 0.0
    %965 = vmatprep.subr.mxu0 0.0
    %966 = vmatpush1.msra.mxu0 0.0
    %967 = vmatprep.subr.mxu0 0.0
    %968 = vmatpush1.msra.mxu0 0.0
    %969 = vmatprep.subr.mxu0 0.0
    %970 = vmatpush1.msra.mxu0 0.0
    %971 = vmatprep.subr.mxu0 0.0
    %972 = vmatpush1.msra.mxu0 0.0
    %973 = vmatprep.subr.mxu0 0.0
    %974 = vmatpush1.msra.mxu0 0.0
    %975 = vmatprep.subr.mxu0 0.0
    %976 = vmatpush1.msra.mxu0 0.0
    %977 = vmatprep.subr.mxu0 0.0
    %978 = vmatpush1.msra.mxu0 0.0
    %979 = vmatprep.subr.mxu0 0.0
    %980 = vmatpush1.msra.mxu0 0.0
    %981 = vmatprep.subr.mxu0 0.0
    %982 = vmatpush1.msra.mxu0 0.0
    %983 = vmatprep.subr.mxu0 0.0
    %984 = vmatpush1.msra.mxu0 0.0
    %985 = vmatprep.subr.mxu0 0.0
    %986 = vmatpush1.msra.mxu0 0.0
    %987 = vmatprep.subr.mxu0 0.0
    %988 = vmatpush1.msra.mxu0 0.0
    %989 = vmatprep.subr.mxu0 0.0
    %990 = vmatpush1.msra.mxu0 0.0
    %991 = vmatprep.subr.mxu0 0.0
    %992 = vmatpush1.msra.mxu0 0.0
    %993 = vmatprep.subr.mxu0 0.0
    %994 = vmatpush1.msra.mxu0 0.0
    %995 = vmatprep.subr.mxu0 0.0
    %996 = vmatpush1.msra.mxu0 0.0
    %997 = vmatprep.subr.mxu0 0.0
    %998 = vmatpush1.msra.mxu0 0.0
    %999 = vmatprep.subr.mxu0 0.0
    %1000 = vmatpush1.msra.mxu0 0.0
    %1001 = vmatprep.subr.mxu0 0.0
    %1002 = vmatpush1.msra.mxu0 0.0
    %1003 = vmatprep.subr.mxu0 0.0
    %1004 = vmatpush1.msra.mxu0 0.0
    %1005 = vmatprep.subr.mxu0 0.0
    %1006 = vmatpush1.msra.mxu0 0.0
    %1007 = vmatprep.subr.mxu0 0.0
    %1008 = vmatpush1.msra.mxu0 0.0
    %1009 = vmatprep.subr.mxu0 0.0
    %1010 = vmatpush1.msra.mxu0 0.0
    %1011 = vmatprep.mubr.f32.mxu0 0.0
    %1012 = vmatmul.mubr.f32.gmra.mrb[0].mxu0 %v945
    %v1013 = vpop.f32.mrb[0].mxu0
    %v1014 = vadd.f32 0.0, %v1013
    %v1015 = vpop.f32.mrb[0].mxu0
    %1016 = vdwg.mxu0
    %v1017 = vadd.f32 %v944, %v1014
    %v1018 = vxor.u32 %v1017, 2147483648
    %v1019 = vmul.f32 %v1018, 1.442695
    %v1020 = vpow.pop %v1019
    %v1021 = vadd.f32 %v1020, 1.0
    %v1022 = vrcp.pop %v1021
    %v1023 = vmul.f32 1.0, %v1022
    %v1024 = vtanh.pop %v1017
    %v1025 = vmul.f32 %v1023, %v932
    %1027 = vrot.lane.b32.xlu0 %v1024, 64
    %v1028 = vpop.permute.xlu0 %1027
    %v1030 = vmul.f32 %v1023, %v1028
    %1032 = vrot.lane.b32.xlu0 %v1030, 32
    %v1033 = vpop.permute.xlu0 %1032
    %v1035 = vadd.f32 %v1025, %v1033
    %v1036 = vtanh.pop %v1035
    %1038 = vrot.lane.b32.xlu0 %v1036, 64
    %v1039 = vpop.permute.xlu0 %1038
    %v1041 = vmul.f32 %v1023, %v1039
    %1043 = vrot.lane.b32.xlu0 %v1041, 32
    %v1044 = vpop.permute.xlu0 %1043
    %1046 = vst.msk [vmem:[#allocation3 + $0x38] sm:$0xff] %vm222, %v1044
    %v1047 = vld [vmem:[#allocation3] sm:$0xff]
    %v1048 = vld [vmem:[#allocation3 + $0x8] sm:$0xff]
    %v1049 = vld [vmem:[#allocation3 + $0x10] sm:$0xff]
    %v1050 = vld [vmem:[#allocation3 + $0x18] sm:$0xff]
    %v1051 = vld [vmem:[#allocation3 + $0x20] sm:$0xff]
    %v1052 = vld [vmem:[#allocation3 + $0x28] sm:$0xff]
    %v1053 = vld [vmem:[#allocation3 + $0x30] sm:$0xff]
    %v1054 = vld [vmem:[#allocation3 + $0x38] sm:$0xff]
    %v1055 = vld [vmem:[%s4] sm:$0xff]
    %v1056 = vld [vmem:[%s4 + $0x8] sm:$0xff]
    %v1057 = vld [vmem:[%s4 + $0x10] sm:$0xff]
    %v1058 = vld [vmem:[%s4 + $0x18] sm:$0xff]
    %v1059 = vld [vmem:[#allocation5] sm:$0x1]
    %v1061 = vlaneseq
    %v1062 = vshrl.u32 %v1061, 7
    %v1063 = vsub.s32 0, %v1062
    %v1064 = vrot.slane %v1059, %v1063
    %v1067 = vsel %vm222, %v1047, 0
    %v1070 = vsel %vm222, %v1048, 0
    %v1073 = vsel %vm222, %v1049, 0
    %v1076 = vsel %vm222, %v1050, 0
    %v1079 = vsel %vm222, %v1051, 0
    %v1082 = vsel %vm222, %v1052, 0
    %v1085 = vsel %vm222, %v1053, 0
    %v1088 = vsel %vm222, %v1054, 0
    %1090 = vmatprep.subr.mxu0 0.0
    %1091 = vmatpush1.msra.mxu0 %v1055
    %1092 = vmatprep.subr.mxu0 0.0
    %1093 = vmatpush1.msra.mxu0 %v1056
    %1094 = vmatprep.subr.mxu0 0.0
    %1095 = vmatpush1.msra.mxu0 %v1057
    %1096 = vmatprep.subr.mxu0 0.0
    %1097 = vmatpush1.msra.mxu0 %v1058
    %1098 = vmatprep.subr.mxu0 0.0
    %1099 = vmatpush1.msra.mxu0 0.0
    %1100 = vmatprep.subr.mxu0 0.0
    %1101 = vmatpush1.msra.mxu0 0.0
    %1102 = vmatprep.subr.mxu0 0.0
    %1103 = vmatpush1.msra.mxu0 0.0
    %1104 = vmatprep.subr.mxu0 0.0
    %1105 = vmatpush1.msra.mxu0 0.0
    %1106 = vmatprep.subr.mxu0 0.0
    %1107 = vmatpush1.msra.mxu0 0.0
    %1108 = vmatprep.subr.mxu0 0.0
    %1109 = vmatpush1.msra.mxu0 0.0
    %1110 = vmatprep.subr.mxu0 0.0
    %1111 = vmatpush1.msra.mxu0 0.0
    %1112 = vmatprep.subr.mxu0 0.0
    %1113 = vmatpush1.msra.mxu0 0.0
    %1114 = vmatprep.subr.mxu0 0.0
    %1115 = vmatpush1.msra.mxu0 0.0
    %1116 = vmatprep.subr.mxu0 0.0
    %1117 = vmatpush1.msra.mxu0 0.0
    %1118 = vmatprep.subr.mxu0 0.0
    %1119 = vmatpush1.msra.mxu0 0.0
    %1120 = vmatprep.subr.mxu0 0.0
    %1121 = vmatpush1.msra.mxu0 0.0
    %1122 = vmatprep.subr.mxu0 0.0
    %1123 = vmatpush1.msra.mxu0 0.0
    %1124 = vmatprep.subr.mxu0 0.0
    %1125 = vmatpush1.msra.mxu0 0.0
    %1126 = vmatprep.subr.mxu0 0.0
    %1127 = vmatpush1.msra.mxu0 0.0
    %1128 = vmatprep.subr.mxu0 0.0
    %1129 = vmatpush1.msra.mxu0 0.0
    %1130 = vmatprep.subr.mxu0 0.0
    %1131 = vmatpush1.msra.mxu0 0.0
    %1132 = vmatprep.subr.mxu0 0.0
    %1133 = vmatpush1.msra.mxu0 0.0
    %1134 = vmatprep.subr.mxu0 0.0
    %1135 = vmatpush1.msra.mxu0 0.0
    %1136 = vmatprep.subr.mxu0 0.0
    %1137 = vmatpush1.msra.mxu0 0.0
    %1138 = vmatprep.subr.mxu0 0.0
    %1139 = vmatpush1.msra.mxu0 0.0
    %1140 = vmatprep.subr.mxu0 0.0
    %1141 = vmatpush1.msra.mxu0 0.0
    %1142 = vmatprep.subr.mxu0 0.0
    %1143 = vmatpush1.msra.mxu0 0.0
    %1144 = vmatprep.subr.mxu0 0.0
    %1145 = vmatpush1.msra.mxu0 0.0
    %1146 = vmatprep.subr.mxu0 0.0
    %1147 = vmatpush1.msra.mxu0 0.0
    %1148 = vmatprep.subr.mxu0 0.0
    %1149 = vmatpush1.msra.mxu0 0.0
    %1150 = vmatprep.subr.mxu0 0.0
    %1151 = vmatpush1.msra.mxu0 0.0
    %1152 = vmatprep.subr.mxu0 0.0
    %1153 = vmatpush1.msra.mxu0 0.0
    %1154 = vmatprep.mubr.f32.mxu0 0.0
    %1155 = vmatmul.mubr.f32.gmra.mrb[0].mxu0 %v1067
    %v1156 = vpop.f32.mrb[0].mxu0
    %v1157 = vadd.f32 %v1064, %v1156
    %v1158 = vpop.f32.mrb[0].mxu0
    %1159 = vmatprep.mubr.f32.mxu0 0.0
    %1160 = vmatmul.mubr.f32.gmra.mrb[0].mxu0 %v1070
    %v1161 = vpop.f32.mrb[0].mxu0
    %v1162 = vadd.f32 %v1064, %v1161
    %v1163 = vpop.f32.mrb[0].mxu0
    %1164 = vmatprep.mubr.f32.mxu0 0.0
    %1165 = vmatmul.mubr.f32.gmra.mrb[0].mxu0 %v1073
    %v1166 = vpop.f32.mrb[0].mxu0
    %v1167 = vadd.f32 %v1064, %v1166
    %v1168 = vpop.f32.mrb[0].mxu0
    %1169 = vmatprep.mubr.f32.mxu0 0.0
    %1170 = vmatmul.mubr.f32.gmra.mrb[0].mxu0 %v1076
    %v1171 = vpop.f32.mrb[0].mxu0
    %v1172 = vadd.f32 %v1064, %v1171
    %v1173 = vpop.f32.mrb[0].mxu0
    %1174 = vmatprep.mubr.f32.mxu0 0.0
    %1175 = vmatmul.mubr.f32.gmra.mrb[0].mxu0 %v1079
    %v1176 = vpop.f32.mrb[0].mxu0
    %v1177 = vadd.f32 %v1064, %v1176
    %v1178 = vpop.f32.mrb[0].mxu0
    %1179 = vmatprep.mubr.f32.mxu0 0.0
    %1180 = vmatmul.mubr.f32.gmra.mrb[0].mxu0 %v1082
    %v1181 = vpop.f32.mrb[0].mxu0
    %v1182 = vadd.f32 %v1064, %v1181
    %v1183 = vpop.f32.mrb[0].mxu0
    %1184 = vmatprep.mubr.f32.mxu0 0.0
    %1185 = vmatmul.mubr.f32.gmra.mrb[0].mxu0 %v1085
    %v1186 = vpop.f32.mrb[0].mxu0
    %v1187 = vadd.f32 %v1064, %v1186
    %v1188 = vpop.f32.mrb[0].mxu0
    %1189 = vmatprep.mubr.f32.mxu0 0.0
    %1190 = vmatmul.mubr.f32.gmra.mrb[0].mxu0 %v1088
    %v1191 = vpop.f32.mrb[0].mxu0
    %v1192 = vadd.f32 %v1064, %v1191
    %v1193 = vpop.f32.mrb[0].mxu0
    %1194 = vdwg.mxu0
    %1195 = vst [vmem:[#allocation2] sm:$0xff] %v1157
    %1196 = vst [vmem:[#allocation2 + $0x8] sm:$0xff] %v1162
    %1197 = vst [vmem:[#allocation2 + $0x10] sm:$0xff] %v1167
    %1198 = vst [vmem:[#allocation2 + $0x18] sm:$0xff] %v1172
    %1199 = vst [vmem:[#allocation2 + $0x20] sm:$0xff] %v1177
    %1200 = vst [vmem:[#allocation2 + $0x28] sm:$0xff] %v1182
    %1201 = vst [vmem:[#allocation2 + $0x30] sm:$0xff] %v1187
    %1202 = vst [vmem:[#allocation2 + $0x38] sm:$0xff] %v1192
    %v1203 = vld [vmem:[%s5] sm:$0xff]
    %v1204 = vld [vmem:[%s5 + $0x8] sm:$0xff]
    %v1205 = vld [vmem:[%s5 + $0x10] sm:$0xff]
    %v1206 = vld [vmem:[%s5 + $0x18] sm:$0xff]
    %v1207 = vld [vmem:[#allocation2] sm:$0xff]
    %1208 = vmatprep.subr.mxu0 0.0
    %1209 = vmatpush1.msra.mxu0 %v1203
    %1210 = vmatprep.subr.mxu0 0.0
    %1211 = vmatpush1.msra.mxu0 %v1204
    %1212 = vmatprep.subr.mxu0 0.0
    %1213 = vmatpush1.msra.mxu0 %v1205
    %1214 = vmatprep.subr.mxu0 0.0
    %1215 = vmatpush1.msra.mxu0 %v1206
    %1216 = vmatprep.subr.mxu0 0.0
    %1217 = vmatpush1.msra.mxu0 0.0
    %1218 = vmatprep.subr.mxu0 0.0
    %1219 = vmatpush1.msra.mxu0 0.0
    %1220 = vmatprep.subr.mxu0 0.0
    %1221 = vmatpush1.msra.mxu0 0.0
    %1222 = vmatprep.subr.mxu0 0.0
    %1223 = vmatpush1.msra.mxu0 0.0
    %1224 = vmatprep.subr.mxu0 0.0
    %1225 = vmatpush1.msra.mxu0 0.0
    %1226 = vmatprep.subr.mxu0 0.0
    %1227 = vmatpush1.msra.mxu0 0.0
    %1228 = vmatprep.subr.mxu0 0.0
    %1229 = vmatpush1.msra.mxu0 0.0
    %1230 = vmatprep.subr.mxu0 0.0
    %1231 = vmatpush1.msra.mxu0 0.0
    %1232 = vmatprep.subr.mxu0 0.0
    %1233 = vmatpush1.msra.mxu0 0.0
    %1234 = vmatprep.subr.mxu0 0.0
    %1235 = vmatpush1.msra.mxu0 0.0
    %1236 = vmatprep.subr.mxu0 0.0
    %1237 = vmatpush1.msra.mxu0 0.0
    %1238 = vmatprep.subr.mxu0 0.0
    %1239 = vmatpush1.msra.mxu0 0.0
    %1240 = vmatprep.subr.mxu0 0.0
    %1241 = vmatpush1.msra.mxu0 0.0
    %1242 = vmatprep.subr.mxu0 0.0
    %1243 = vmatpush1.msra.mxu0 0.0
    %1244 = vmatprep.subr.mxu0 0.0
    %1245 = vmatpush1.msra.mxu0 0.0
    %1246 = vmatprep.subr.mxu0 0.0
    %1247 = vmatpush1.msra.mxu0 0.0
    %1248 = vmatprep.subr.mxu0 0.0
    %1249 = vmatpush1.msra.mxu0 0.0
    %1250 = vmatprep.subr.mxu0 0.0
    %1251 = vmatpush1.msra.mxu0 0.0
    %1252 = vmatprep.subr.mxu0 0.0
    %1253 = vmatpush1.msra.mxu0 0.0
    %1254 = vmatprep.subr.mxu0 0.0
    %1255 = vmatpush1.msra.mxu0 0.0
    %1256 = vmatprep.subr.mxu0 0.0
    %1257 = vmatpush1.msra.mxu0 0.0
    %1258 = vmatprep.subr.mxu0 0.0
    %1259 = vmatpush1.msra.mxu0 0.0
    %1260 = vmatprep.subr.mxu0 0.0
    %1261 = vmatpush1.msra.mxu0 0.0
    %1262 = vmatprep.subr.mxu0 0.0
    %1263 = vmatpush1.msra.mxu0 0.0
    %1264 = vmatprep.subr.mxu0 0.0
    %1265 = vmatpush1.msra.mxu0 0.0
    %1266 = vmatprep.subr.mxu0 0.0
    %1267 = vmatpush1.msra.mxu0 0.0
    %1268 = vmatprep.subr.mxu0 0.0
    %1269 = vmatpush1.msra.mxu0 0.0
    %1270 = vmatprep.subr.mxu0 0.0
    %1271 = vmatpush1.msra.mxu0 0.0
    %1272 = vmatprep.mubr.f32.mxu0 0.0
    %1273 = vmatmul.mubr.f32.gmra.mrb[0].mxu0 %v224
    %v1274 = vpop.f32.mrb[0].mxu0
    %v1275 = vadd.f32 0.0, %v1274
    %v1276 = vpop.f32.mrb[0].mxu0
    %1277 = vdwg.mxu0
    %v1278 = vadd.f32 %v1207, %v1275
    %v1279 = vxor.u32 %v1278, 2147483648
    %v1280 = vmul.f32 %v1279, 1.442695
    %v1281 = vpow.pop %v1280
    %v1282 = vadd.f32 %v1281, 1.0
    %v1283 = vrcp.pop %v1282
    %v1284 = vmul.f32 1.0, %v1283
    %v1285 = vtanh.pop %v1278
    %v1286 = vmul.f32 %v1284, 0.0
    %1288 = vrot.lane.b32.xlu0 %v1285, 64
    %v1289 = vpop.permute.xlu0 %1288
    %v1291 = vmul.f32 %v1284, %v1289
    %1293 = vrot.lane.b32.xlu0 %v1291, 32
    %v1294 = vpop.permute.xlu0 %1293
    %v1296 = vadd.f32 %v1286, %v1294
    %v1297 = vtanh.pop %v1296
    %1299 = vrot.lane.b32.xlu0 %v1297, 64
    %v1300 = vpop.permute.xlu0 %1299
    %v1302 = vmul.f32 %v1284, %v1300
    %1304 = vrot.lane.b32.xlu0 %v1302, 32
    %v1305 = vpop.permute.xlu0 %1304
    %1307 = vst.msk [vmem:[#allocation4] sm:$0xff] %vm222, %v1305
    %v1308 = vld [vmem:[#allocation2 + $0x8] sm:$0xff]
    %v1309 = vsel %vm222, %v1305, 0
    %1311 = vmatprep.subr.mxu0 0.0
    %1312 = vmatpush1.msra.mxu0 %v1203
    %1313 = vmatprep.subr.mxu0 0.0
    %1314 = vmatpush1.msra.mxu0 %v1204
    %1315 = vmatprep.subr.mxu0 0.0
    %1316 = vmatpush1.msra.mxu0 %v1205
    %1317 = vmatprep.subr.mxu0 0.0
    %1318 = vmatpush1.msra.mxu0 %v1206
    %1319 = vmatprep.subr.mxu0 0.0
    %1320 = vmatpush1.msra.mxu0 0.0
    %1321 = vmatprep.subr.mxu0 0.0
    %1322 = vmatpush1.msra.mxu0 0.0
    %1323 = vmatprep.subr.mxu0 0.0
    %1324 = vmatpush1.msra.mxu0 0.0
    %1325 = vmatprep.subr.mxu0 0.0
    %1326 = vmatpush1.msra.mxu0 0.0
    %1327 = vmatprep.subr.mxu0 0.0
    %1328 = vmatpush1.msra.mxu0 0.0
    %1329 = vmatprep.subr.mxu0 0.0
    %1330 = vmatpush1.msra.mxu0 0.0
    %1331 = vmatprep.subr.mxu0 0.0
    %1332 = vmatpush1.msra.mxu0 0.0
    %1333 = vmatprep.subr.mxu0 0.0
    %1334 = vmatpush1.msra.mxu0 0.0
    %1335 = vmatprep.subr.mxu0 0.0
    %1336 = vmatpush1.msra.mxu0 0.0
    %1337 = vmatprep.subr.mxu0 0.0
    %1338 = vmatpush1.msra.mxu0 0.0
    %1339 = vmatprep.subr.mxu0 0.0
    %1340 = vmatpush1.msra.mxu0 0.0
    %1341 = vmatprep.subr.mxu0 0.0
    %1342 = vmatpush1.msra.mxu0 0.0
    %1343 = vmatprep.subr.mxu0 0.0
    %1344 = vmatpush1.msra.mxu0 0.0
    %1345 = vmatprep.subr.mxu0 0.0
    %1346 = vmatpush1.msra.mxu0 0.0
    %1347 = vmatprep.subr.mxu0 0.0
    %1348 = vmatpush1.msra.mxu0 0.0
    %1349 = vmatprep.subr.mxu0 0.0
    %1350 = vmatpush1.msra.mxu0 0.0
    %1351 = vmatprep.subr.mxu0 0.0
    %1352 = vmatpush1.msra.mxu0 0.0
    %1353 = vmatprep.subr.mxu0 0.0
    %1354 = vmatpush1.msra.mxu0 0.0
    %1355 = vmatprep.subr.mxu0 0.0
    %1356 = vmatpush1.msra.mxu0 0.0
    %1357 = vmatprep.subr.mxu0 0.0
    %1358 = vmatpush1.msra.mxu0 0.0
    %1359 = vmatprep.subr.mxu0 0.0
    %1360 = vmatpush1.msra.mxu0 0.0
    %1361 = vmatprep.subr.mxu0 0.0
    %1362 = vmatpush1.msra.mxu0 0.0
    %1363 = vmatprep.subr.mxu0 0.0
    %1364 = vmatpush1.msra.mxu0 0.0
    %1365 = vmatprep.subr.mxu0 0.0
    %1366 = vmatpush1.msra.mxu0 0.0
    %1367 = vmatprep.subr.mxu0 0.0
    %1368 = vmatpush1.msra.mxu0 0.0
    %1369 = vmatprep.subr.mxu0 0.0
    %1370 = vmatpush1.msra.mxu0 0.0
    %1371 = vmatprep.subr.mxu0 0.0
    %1372 = vmatpush1.msra.mxu0 0.0
    %1373 = vmatprep.subr.mxu0 0.0
    %1374 = vmatpush1.msra.mxu0 0.0
    %1375 = vmatprep.mubr.f32.mxu0 0.0
    %1376 = vmatmul.mubr.f32.gmra.mrb[0].mxu0 %v1309
    %v1377 = vpop.f32.mrb[0].mxu0
    %v1378 = vadd.f32 0.0, %v1377
    %v1379 = vpop.f32.mrb[0].mxu0
    %1380 = vdwg.mxu0
    %v1381 = vadd.f32 %v1308, %v1378
    %v1382 = vxor.u32 %v1381, 2147483648
    %v1383 = vmul.f32 %v1382, 1.442695
    %v1384 = vpow.pop %v1383
    %v1385 = vadd.f32 %v1384, 1.0
    %v1386 = vrcp.pop %v1385
    %v1387 = vmul.f32 1.0, %v1386
    %v1388 = vtanh.pop %v1381
    %v1389 = vmul.f32 %v1387, %v1296
    %1391 = vrot.lane.b32.xlu0 %v1388, 64
    %v1392 = vpop.permute.xlu0 %1391
    %v1394 = vmul.f32 %v1387, %v1392
    %1396 = vrot.lane.b32.xlu0 %v1394, 32
    %v1397 = vpop.permute.xlu0 %1396
    %v1399 = vadd.f32 %v1389, %v1397
    %v1400 = vtanh.pop %v1399
    %1402 = vrot.lane.b32.xlu0 %v1400, 64
    %v1403 = vpop.permute.xlu0 %1402
    %v1405 = vmul.f32 %v1387, %v1403
    %1407 = vrot.lane.b32.xlu0 %v1405, 32
    %v1408 = vpop.permute.xlu0 %1407
    %1410 = vst.msk [vmem:[#allocation4 + $0x8] sm:$0xff] %vm222, %v1408
    %v1411 = vld [vmem:[#allocation2 + $0x10] sm:$0xff]
    %v1412 = vsel %vm222, %v1408, 0
    %1414 = vmatprep.subr.mxu0 0.0
    %1415 = vmatpush1.msra.mxu0 %v1203
    %1416 = vmatprep.subr.mxu0 0.0
    %1417 = vmatpush1.msra.mxu0 %v1204
    %1418 = vmatprep.subr.mxu0 0.0
    %1419 = vmatpush1.msra.mxu0 %v1205
    %1420 = vmatprep.subr.mxu0 0.0
    %1421 = vmatpush1.msra.mxu0 %v1206
    %1422 = vmatprep.subr.mxu0 0.0
    %1423 = vmatpush1.msra.mxu0 0.0
    %1424 = vmatprep.subr.mxu0 0.0
    %1425 = vmatpush1.msra.mxu0 0.0
    %1426 = vmatprep.subr.mxu0 0.0
    %1427 = vmatpush1.msra.mxu0 0.0
    %1428 = vmatprep.subr.mxu0 0.0
    %1429 = vmatpush1.msra.mxu0 0.0
    %1430 = vmatprep.subr.mxu0 0.0
    %1431 = vmatpush1.msra.mxu0 0.0
    %1432 = vmatprep.subr.mxu0 0.0
    %1433 = vmatpush1.msra.mxu0 0.0
    %1434 = vmatprep.subr.mxu0 0.0
    %1435 = vmatpush1.msra.mxu0 0.0
    %1436 = vmatprep.subr.mxu0 0.0
    %1437 = vmatpush1.msra.mxu0 0.0
    %1438 = vmatprep.subr.mxu0 0.0
    %1439 = vmatpush1.msra.mxu0 0.0
    %1440 = vmatprep.subr.mxu0 0.0
    %1441 = vmatpush1.msra.mxu0 0.0
    %1442 = vmatprep.subr.mxu0 0.0
    %1443 = vmatpush1.msra.mxu0 0.0
    %1444 = vmatprep.subr.mxu0 0.0
    %1445 = vmatpush1.msra.mxu0 0.0
    %1446 = vmatprep.subr.mxu0 0.0
    %1447 = vmatpush1.msra.mxu0 0.0
    %1448 = vmatprep.subr.mxu0 0.0
    %1449 = vmatpush1.msra.mxu0 0.0
    %1450 = vmatprep.subr.mxu0 0.0
    %1451 = vmatpush1.msra.mxu0 0.0
    %1452 = vmatprep.subr.mxu0 0.0
    %1453 = vmatpush1.msra.mxu0 0.0
    %1454 = vmatprep.subr.mxu0 0.0
    %1455 = vmatpush1.msra.mxu0 0.0
    %1456 = vmatprep.subr.mxu0 0.0
    %1457 = vmatpush1.msra.mxu0 0.0
    %1458 = vmatprep.subr.mxu0 0.0
    %1459 = vmatpush1.msra.mxu0 0.0
    %1460 = vmatprep.subr.mxu0 0.0
    %1461 = vmatpush1.msra.mxu0 0.0
    %1462 = vmatprep.subr.mxu0 0.0
    %1463 = vmatpush1.msra.mxu0 0.0
    %1464 = vmatprep.subr.mxu0 0.0
    %1465 = vmatpush1.msra.mxu0 0.0
    %1466 = vmatprep.subr.mxu0 0.0
    %1467 = vmatpush1.msra.mxu0 0.0
    %1468 = vmatprep.subr.mxu0 0.0
    %1469 = vmatpush1.msra.mxu0 0.0
    %1470 = vmatprep.subr.mxu0 0.0
    %1471 = vmatpush1.msra.mxu0 0.0
    %1472 = vmatprep.subr.mxu0 0.0
    %1473 = vmatpush1.msra.mxu0 0.0
    %1474 = vmatprep.subr.mxu0 0.0
    %1475 = vmatpush1.msra.mxu0 0.0
    %1476 = vmatprep.subr.mxu0 0.0
    %1477 = vmatpush1.msra.mxu0 0.0
    %1478 = vmatprep.mubr.f32.mxu0 0.0
    %1479 = vmatmul.mubr.f32.gmra.mrb[0].mxu0 %v1412
    %v1480 = vpop.f32.mrb[0].mxu0
    %v1481 = vadd.f32 0.0, %v1480
    %v1482 = vpop.f32.mrb[0].mxu0
    %1483 = vdwg.mxu0
    %v1484 = vadd.f32 %v1411, %v1481
    %v1485 = vxor.u32 %v1484, 2147483648
    %v1486 = vmul.f32 %v1485, 1.442695
    %v1487 = vpow.pop %v1486
    %v1488 = vadd.f32 %v1487, 1.0
    %v1489 = vrcp.pop %v1488
    %v1490 = vmul.f32 1.0, %v1489
    %v1491 = vtanh.pop %v1484
    %v1492 = vmul.f32 %v1490, %v1399
    %1494 = vrot.lane.b32.xlu0 %v1491, 64
    %v1495 = vpop.permute.xlu0 %1494
    %v1497 = vmul.f32 %v1490, %v1495
    %1499 = vrot.lane.b32.xlu0 %v1497, 32
    %v1500 = vpop.permute.xlu0 %1499
    %v1502 = vadd.f32 %v1492, %v1500
    %v1503 = vtanh.pop %v1502
    %1505 = vrot.lane.b32.xlu0 %v1503, 64
    %v1506 = vpop.permute.xlu0 %1505
    %v1508 = vmul.f32 %v1490, %v1506
    %1510 = vrot.lane.b32.xlu0 %v1508, 32
    %v1511 = vpop.permute.xlu0 %1510
    %1513 = vst.msk [vmem:[#allocation4 + $0x10] sm:$0xff] %vm222, %v1511
    %v1514 = vld [vmem:[#allocation2 + $0x18] sm:$0xff]
    %v1515 = vsel %vm222, %v1511, 0
    %1517 = vmatprep.subr.mxu0 0.0
    %1518 = vmatpush1.msra.mxu0 %v1203
    %1519 = vmatprep.subr.mxu0 0.0
    %1520 = vmatpush1.msra.mxu0 %v1204
    %1521 = vmatprep.subr.mxu0 0.0
    %1522 = vmatpush1.msra.mxu0 %v1205
    %1523 = vmatprep.subr.mxu0 0.0
    %1524 = vmatpush1.msra.mxu0 %v1206
    %1525 = vmatprep.subr.mxu0 0.0
    %1526 = vmatpush1.msra.mxu0 0.0
    %1527 = vmatprep.subr.mxu0 0.0
    %1528 = vmatpush1.msra.mxu0 0.0
    %1529 = vmatprep.subr.mxu0 0.0
    %1530 = vmatpush1.msra.mxu0 0.0
    %1531 = vmatprep.subr.mxu0 0.0
    %1532 = vmatpush1.msra.mxu0 0.0
    %1533 = vmatprep.subr.mxu0 0.0
    %1534 = vmatpush1.msra.mxu0 0.0
    %1535 = vmatprep.subr.mxu0 0.0
    %1536 = vmatpush1.msra.mxu0 0.0
    %1537 = vmatprep.subr.mxu0 0.0
    %1538 = vmatpush1.msra.mxu0 0.0
    %1539 = vmatprep.subr.mxu0 0.0
    %1540 = vmatpush1.msra.mxu0 0.0
    %1541 = vmatprep.subr.mxu0 0.0
    %1542 = vmatpush1.msra.mxu0 0.0
    %1543 = vmatprep.subr.mxu0 0.0
    %1544 = vmatpush1.msra.mxu0 0.0
    %1545 = vmatprep.subr.mxu0 0.0
    %1546 = vmatpush1.msra.mxu0 0.0
    %1547 = vmatprep.subr.mxu0 0.0
    %1548 = vmatpush1.msra.mxu0 0.0
    %1549 = vmatprep.subr.mxu0 0.0
    %1550 = vmatpush1.msra.mxu0 0.0
    %1551 = vmatprep.subr.mxu0 0.0
    %1552 = vmatpush1.msra.mxu0 0.0
    %1553 = vmatprep.subr.mxu0 0.0
    %1554 = vmatpush1.msra.mxu0 0.0
    %1555 = vmatprep.subr.mxu0 0.0
    %1556 = vmatpush1.msra.mxu0 0.0
    %1557 = vmatprep.subr.mxu0 0.0
    %1558 = vmatpush1.msra.mxu0 0.0
    %1559 = vmatprep.subr.mxu0 0.0
    %1560 = vmatpush1.msra.mxu0 0.0
    %1561 = vmatprep.subr.mxu0 0.0
    %1562 = vmatpush1.msra.mxu0 0.0
    %1563 = vmatprep.subr.mxu0 0.0
    %1564 = vmatpush1.msra.mxu0 0.0
    %1565 = vmatprep.subr.mxu0 0.0
    %1566 = vmatpush1.msra.mxu0 0.0
    %1567 = vmatprep.subr.mxu0 0.0
    %1568 = vmatpush1.msra.mxu0 0.0
    %1569 = vmatprep.subr.mxu0 0.0
    %1570 = vmatpush1.msra.mxu0 0.0
    %1571 = vmatprep.subr.mxu0 0.0
    %1572 = vmatpush1.msra.mxu0 0.0
    %1573 = vmatprep.subr.mxu0 0.0
    %1574 = vmatpush1.msra.mxu0 0.0
    %1575 = vmatprep.subr.mxu0 0.0
    %1576 = vmatpush1.msra.mxu0 0.0
    %1577 = vmatprep.subr.mxu0 0.0
    %1578 = vmatpush1.msra.mxu0 0.0
    %1579 = vmatprep.subr.mxu0 0.0
    %1580 = vmatpush1.msra.mxu0 0.0
    %1581 = vmatprep.mubr.f32.mxu0 0.0
    %1582 = vmatmul.mubr.f32.gmra.mrb[0].mxu0 %v1515
    %v1583 = vpop.f32.mrb[0].mxu0
    %v1584 = vadd.f32 0.0, %v1583
    %v1585 = vpop.f32.mrb[0].mxu0
    %1586 = vdwg.mxu0
    %v1587 = vadd.f32 %v1514, %v1584
    %v1588 = vxor.u32 %v1587, 2147483648
    %v1589 = vmul.f32 %v1588, 1.442695
    %v1590 = vpow.pop %v1589
    %v1591 = vadd.f32 %v1590, 1.0
    %v1592 = vrcp.pop %v1591
    %v1593 = vmul.f32 1.0, %v1592
    %v1594 = vtanh.pop %v1587
    %v1595 = vmul.f32 %v1593, %v1502
    %1597 = vrot.lane.b32.xlu0 %v1594, 64
    %v1598 = vpop.permute.xlu0 %1597
    %v1600 = vmul.f32 %v1593, %v1598
    %1602 = vrot.lane.b32.xlu0 %v1600, 32
    %v1603 = vpop.permute.xlu0 %1602
    %v1605 = vadd.f32 %v1595, %v1603
    %v1606 = vtanh.pop %v1605
    %1608 = vrot.lane.b32.xlu0 %v1606, 64
    %v1609 = vpop.permute.xlu0 %1608
    %v1611 = vmul.f32 %v1593, %v1609
    %1613 = vrot.lane.b32.xlu0 %v1611, 32
    %v1614 = vpop.permute.xlu0 %1613
    %1616 = vst.msk [vmem:[#allocation4 + $0x18] sm:$0xff] %vm222, %v1614
    %v1617 = vld [vmem:[#allocation2 + $0x20] sm:$0xff]
    %v1618 = vsel %vm222, %v1614, 0
    %1620 = vmatprep.subr.mxu0 0.0
    %1621 = vmatpush1.msra.mxu0 %v1203
    %1622 = vmatprep.subr.mxu0 0.0
    %1623 = vmatpush1.msra.mxu0 %v1204
    %1624 = vmatprep.subr.mxu0 0.0
    %1625 = vmatpush1.msra.mxu0 %v1205
    %1626 = vmatprep.subr.mxu0 0.0
    %1627 = vmatpush1.msra.mxu0 %v1206
    %1628 = vmatprep.subr.mxu0 0.0
    %1629 = vmatpush1.msra.mxu0 0.0
    %1630 = vmatprep.subr.mxu0 0.0
    %1631 = vmatpush1.msra.mxu0 0.0
    %1632 = vmatprep.subr.mxu0 0.0
    %1633 = vmatpush1.msra.mxu0 0.0
    %1634 = vmatprep.subr.mxu0 0.0
    %1635 = vmatpush1.msra.mxu0 0.0
    %1636 = vmatprep.subr.mxu0 0.0
    %1637 = vmatpush1.msra.mxu0 0.0
    %1638 = vmatprep.subr.mxu0 0.0
    %1639 = vmatpush1.msra.mxu0 0.0
    %1640 = vmatprep.subr.mxu0 0.0
    %1641 = vmatpush1.msra.mxu0 0.0
    %1642 = vmatprep.subr.mxu0 0.0
    %1643 = vmatpush1.msra.mxu0 0.0
    %1644 = vmatprep.subr.mxu0 0.0
    %1645 = vmatpush1.msra.mxu0 0.0
    %1646 = vmatprep.subr.mxu0 0.0
    %1647 = vmatpush1.msra.mxu0 0.0
    %1648 = vmatprep.subr.mxu0 0.0
    %1649 = vmatpush1.msra.mxu0 0.0
    %1650 = vmatprep.subr.mxu0 0.0
    %1651 = vmatpush1.msra.mxu0 0.0
    %1652 = vmatprep.subr.mxu0 0.0
    %1653 = vmatpush1.msra.mxu0 0.0
    %1654 = vmatprep.subr.mxu0 0.0
    %1655 = vmatpush1.msra.mxu0 0.0
    %1656 = vmatprep.subr.mxu0 0.0
    %1657 = vmatpush1.msra.mxu0 0.0
    %1658 = vmatprep.subr.mxu0 0.0
    %1659 = vmatpush1.msra.mxu0 0.0
    %1660 = vmatprep.subr.mxu0 0.0
    %1661 = vmatpush1.msra.mxu0 0.0
    %1662 = vmatprep.subr.mxu0 0.0
    %1663 = vmatpush1.msra.mxu0 0.0
    %1664 = vmatprep.subr.mxu0 0.0
    %1665 = vmatpush1.msra.mxu0 0.0
    %1666 = vmatprep.subr.mxu0 0.0
    %1667 = vmatpush1.msra.mxu0 0.0
    %1668 = vmatprep.subr.mxu0 0.0
    %1669 = vmatpush1.msra.mxu0 0.0
    %1670 = vmatprep.subr.mxu0 0.0
    %1671 = vmatpush1.msra.mxu0 0.0
    %1672 = vmatprep.subr.mxu0 0.0
    %1673 = vmatpush1.msra.mxu0 0.0
    %1674 = vmatprep.subr.mxu0 0.0
    %1675 = vmatpush1.msra.mxu0 0.0
    %1676 = vmatprep.subr.mxu0 0.0
    %1677 = vmatpush1.msra.mxu0 0.0
    %1678 = vmatprep.subr.mxu0 0.0
    %1679 = vmatpush1.msra.mxu0 0.0
    %1680 = vmatprep.subr.mxu0 0.0
    %1681 = vmatpush1.msra.mxu0 0.0
    %1682 = vmatprep.subr.mxu0 0.0
    %1683 = vmatpush1.msra.mxu0 0.0
    %1684 = vmatprep.mubr.f32.mxu0 0.0
    %1685 = vmatmul.mubr.f32.gmra.mrb[0].mxu0 %v1618
    %v1686 = vpop.f32.mrb[0].mxu0
    %v1687 = vadd.f32 0.0, %v1686
    %v1688 = vpop.f32.mrb[0].mxu0
    %1689 = vdwg.mxu0
    %v1690 = vadd.f32 %v1617, %v1687
    %v1691 = vxor.u32 %v1690, 2147483648
    %v1692 = vmul.f32 %v1691, 1.442695
    %v1693 = vpow.pop %v1692
    %v1694 = vadd.f32 %v1693, 1.0
    %v1695 = vrcp.pop %v1694
    %v1696 = vmul.f32 1.0, %v1695
    %v1697 = vtanh.pop %v1690
    %v1698 = vmul.f32 %v1696, %v1605
    %1700 = vrot.lane.b32.xlu0 %v1697, 64
    %v1701 = vpop.permute.xlu0 %1700
    %v1703 = vmul.f32 %v1696, %v1701
    %1705 = vrot.lane.b32.xlu0 %v1703, 32
    %v1706 = vpop.permute.xlu0 %1705
    %v1708 = vadd.f32 %v1698, %v1706
    %v1709 = vtanh.pop %v1708
    %1711 = vrot.lane.b32.xlu0 %v1709, 64
    %v1712 = vpop.permute.xlu0 %1711
    %v1714 = vmul.f32 %v1696, %v1712
    %1716 = vrot.lane.b32.xlu0 %v1714, 32
    %v1717 = vpop.permute.xlu0 %1716
    %1719 = vst.msk [vmem:[#allocation4 + $0x20] sm:$0xff] %vm222, %v1717
    %v1720 = vld [vmem:[#allocation2 + $0x28] sm:$0xff]
    %v1721 = vsel %vm222, %v1717, 0
    %1723 = vmatprep.subr.mxu0 0.0
    %1724 = vmatpush1.msra.mxu0 %v1203
    %1725 = vmatprep.subr.mxu0 0.0
    %1726 = vmatpush1.msra.mxu0 %v1204
    %1727 = vmatprep.subr.mxu0 0.0
    %1728 = vmatpush1.msra.mxu0 %v1205
    %1729 = vmatprep.subr.mxu0 0.0
    %1730 = vmatpush1.msra.mxu0 %v1206
    %1731 = vmatprep.subr.mxu0 0.0
    %1732 = vmatpush1.msra.mxu0 0.0
    %1733 = vmatprep.subr.mxu0 0.0
    %1734 = vmatpush1.msra.mxu0 0.0
    %1735 = vmatprep.subr.mxu0 0.0
    %1736 = vmatpush1.msra.mxu0 0.0
    %1737 = vmatprep.subr.mxu0 0.0
    %1738 = vmatpush1.msra.mxu0 0.0
    %1739 = vmatprep.subr.mxu0 0.0
    %1740 = vmatpush1.msra.mxu0 0.0
    %1741 = vmatprep.subr.mxu0 0.0
    %1742 = vmatpush1.msra.mxu0 0.0
    %1743 = vmatprep.subr.mxu0 0.0
    %1744 = vmatpush1.msra.mxu0 0.0
    %1745 = vmatprep.subr.mxu0 0.0
    %1746 = vmatpush1.msra.mxu0 0.0
    %1747 = vmatprep.subr.mxu0 0.0
    %1748 = vmatpush1.msra.mxu0 0.0
    %1749 = vmatprep.subr.mxu0 0.0
    %1750 = vmatpush1.msra.mxu0 0.0
    %1751 = vmatprep.subr.mxu0 0.0
    %1752 = vmatpush1.msra.mxu0 0.0
    %1753 = vmatprep.subr.mxu0 0.0
    %1754 = vmatpush1.msra.mxu0 0.0
    %1755 = vmatprep.subr.mxu0 0.0
    %1756 = vmatpush1.msra.mxu0 0.0
    %1757 = vmatprep.subr.mxu0 0.0
    %1758 = vmatpush1.msra.mxu0 0.0
    %1759 = vmatprep.subr.mxu0 0.0
    %1760 = vmatpush1.msra.mxu0 0.0
    %1761 = vmatprep.subr.mxu0 0.0
    %1762 = vmatpush1.msra.mxu0 0.0
    %1763 = vmatprep.subr.mxu0 0.0
    %1764 = vmatpush1.msra.mxu0 0.0
    %1765 = vmatprep.subr.mxu0 0.0
    %1766 = vmatpush1.msra.mxu0 0.0
    %1767 = vmatprep.subr.mxu0 0.0
    %1768 = vmatpush1.msra.mxu0 0.0
    %1769 = vmatprep.subr.mxu0 0.0
    %1770 = vmatpush1.msra.mxu0 0.0
    %1771 = vmatprep.subr.mxu0 0.0
    %1772 = vmatpush1.msra.mxu0 0.0
    %1773 = vmatprep.subr.mxu0 0.0
    %1774 = vmatpush1.msra.mxu0 0.0
    %1775 = vmatprep.subr.mxu0 0.0
    %1776 = vmatpush1.msra.mxu0 0.0
    %1777 = vmatprep.subr.mxu0 0.0
    %1778 = vmatpush1.msra.mxu0 0.0
    %1779 = vmatprep.subr.mxu0 0.0
    %1780 = vmatpush1.msra.mxu0 0.0
    %1781 = vmatprep.subr.mxu0 0.0
    %1782 = vmatpush1.msra.mxu0 0.0
    %1783 = vmatprep.subr.mxu0 0.0
    %1784 = vmatpush1.msra.mxu0 0.0
    %1785 = vmatprep.subr.mxu0 0.0
    %1786 = vmatpush1.msra.mxu0 0.0
    %1787 = vmatprep.mubr.f32.mxu0 0.0
    %1788 = vmatmul.mubr.f32.gmra.mrb[0].mxu0 %v1721
    %v1789 = vpop.f32.mrb[0].mxu0
    %v1790 = vadd.f32 0.0, %v1789
    %v1791 = vpop.f32.mrb[0].mxu0
    %1792 = vdwg.mxu0
    %v1793 = vadd.f32 %v1720, %v1790
    %v1794 = vxor.u32 %v1793, 2147483648
    %v1795 = vmul.f32 %v1794, 1.442695
    %v1796 = vpow.pop %v1795
    %v1797 = vadd.f32 %v1796, 1.0
    %v1798 = vrcp.pop %v1797
    %v1799 = vmul.f32 1.0, %v1798
    %v1800 = vtanh.pop %v1793
    %v1801 = vmul.f32 %v1799, %v1708
    %1803 = vrot.lane.b32.xlu0 %v1800, 64
    %v1804 = vpop.permute.xlu0 %1803
    %v1806 = vmul.f32 %v1799, %v1804
    %1808 = vrot.lane.b32.xlu0 %v1806, 32
    %v1809 = vpop.permute.xlu0 %1808
    %v1811 = vadd.f32 %v1801, %v1809
    %v1812 = vtanh.pop %v1811
    %1814 = vrot.lane.b32.xlu0 %v1812, 64
    %v1815 = vpop.permute.xlu0 %1814
    %v1817 = vmul.f32 %v1799, %v1815
    %1819 = vrot.lane.b32.xlu0 %v1817, 32
    %v1820 = vpop.permute.xlu0 %1819
    %1822 = vst.msk [vmem:[#allocation4 + $0x28] sm:$0xff] %vm222, %v1820
    %v1823 = vld [vmem:[#allocation2 + $0x30] sm:$0xff]
    %v1824 = vsel %vm222, %v1820, 0
    %1826 = vmatprep.subr.mxu0 0.0
    %1827 = vmatpush1.msra.mxu0 %v1203
    %1828 = vmatprep.subr.mxu0 0.0
    %1829 = vmatpush1.msra.mxu0 %v1204
    %1830 = vmatprep.subr.mxu0 0.0
    %1831 = vmatpush1.msra.mxu0 %v1205
    %1832 = vmatprep.subr.mxu0 0.0
    %1833 = vmatpush1.msra.mxu0 %v1206
    %1834 = vmatprep.subr.mxu0 0.0
    %1835 = vmatpush1.msra.mxu0 0.0
    %1836 = vmatprep.subr.mxu0 0.0
    %1837 = vmatpush1.msra.mxu0 0.0
    %1838 = vmatprep.subr.mxu0 0.0
    %1839 = vmatpush1.msra.mxu0 0.0
    %1840 = vmatprep.subr.mxu0 0.0
    %1841 = vmatpush1.msra.mxu0 0.0
    %1842 = vmatprep.subr.mxu0 0.0
    %1843 = vmatpush1.msra.mxu0 0.0
    %1844 = vmatprep.subr.mxu0 0.0
    %1845 = vmatpush1.msra.mxu0 0.0
    %1846 = vmatprep.subr.mxu0 0.0
    %1847 = vmatpush1.msra.mxu0 0.0
    %1848 = vmatprep.subr.mxu0 0.0
    %1849 = vmatpush1.msra.mxu0 0.0
    %1850 = vmatprep.subr.mxu0 0.0
    %1851 = vmatpush1.msra.mxu0 0.0
    %1852 = vmatprep.subr.mxu0 0.0
    %1853 = vmatpush1.msra.mxu0 0.0
    %1854 = vmatprep.subr.mxu0 0.0
    %1855 = vmatpush1.msra.mxu0 0.0
    %1856 = vmatprep.subr.mxu0 0.0
    %1857 = vmatpush1.msra.mxu0 0.0
    %1858 = vmatprep.subr.mxu0 0.0
    %1859 = vmatpush1.msra.mxu0 0.0
    %1860 = vmatprep.subr.mxu0 0.0
    %1861 = vmatpush1.msra.mxu0 0.0
    %1862 = vmatprep.subr.mxu0 0.0
    %1863 = vmatpush1.msra.mxu0 0.0
    %1864 = vmatprep.subr.mxu0 0.0
    %1865 = vmatpush1.msra.mxu0 0.0
    %1866 = vmatprep.subr.mxu0 0.0
    %1867 = vmatpush1.msra.mxu0 0.0
    %1868 = vmatprep.subr.mxu0 0.0
    %1869 = vmatpush1.msra.mxu0 0.0
    %1870 = vmatprep.subr.mxu0 0.0
    %1871 = vmatpush1.msra.mxu0 0.0
    %1872 = vmatprep.subr.mxu0 0.0
    %1873 = vmatpush1.msra.mxu0 0.0
    %1874 = vmatprep.subr.mxu0 0.0
    %1875 = vmatpush1.msra.mxu0 0.0
    %1876 = vmatprep.subr.mxu0 0.0
    %1877 = vmatpush1.msra.mxu0 0.0
    %1878 = vmatprep.subr.mxu0 0.0
    %1879 = vmatpush1.msra.mxu0 0.0
    %1880 = vmatprep.subr.mxu0 0.0
    %1881 = vmatpush1.msra.mxu0 0.0
    %1882 = vmatprep.subr.mxu0 0.0
    %1883 = vmatpush1.msra.mxu0 0.0
    %1884 = vmatprep.subr.mxu0 0.0
    %1885 = vmatpush1.msra.mxu0 0.0
    %1886 = vmatprep.subr.mxu0 0.0
    %1887 = vmatpush1.msra.mxu0 0.0
    %1888 = vmatprep.subr.mxu0 0.0
    %1889 = vmatpush1.msra.mxu0 0.0
    %1890 = vmatprep.mubr.f32.mxu0 0.0
    %1891 = vmatmul.mubr.f32.gmra.mrb[0].mxu0 %v1824
    %v1892 = vpop.f32.mrb[0].mxu0
    %v1893 = vadd.f32 0.0, %v1892
    %v1894 = vpop.f32.mrb[0].mxu0
    %1895 = vdwg.mxu0
    %v1896 = vadd.f32 %v1823, %v1893
    %v1897 = vxor.u32 %v1896, 2147483648
    %v1898 = vmul.f32 %v1897, 1.442695
    %v1899 = vpow.pop %v1898
    %v1900 = vadd.f32 %v1899, 1.0
    %v1901 = vrcp.pop %v1900
    %v1902 = vmul.f32 1.0, %v1901
    %v1903 = vtanh.pop %v1896
    %v1904 = vmul.f32 %v1902, %v1811
    %1906 = vrot.lane.b32.xlu0 %v1903, 64
    %v1907 = vpop.permute.xlu0 %1906
    %v1909 = vmul.f32 %v1902, %v1907
    %1911 = vrot.lane.b32.xlu0 %v1909, 32
    %v1912 = vpop.permute.xlu0 %1911
    %v1914 = vadd.f32 %v1904, %v1912
    %v1915 = vtanh.pop %v1914
    %1917 = vrot.lane.b32.xlu0 %v1915, 64
    %v1918 = vpop.permute.xlu0 %1917
    %v1920 = vmul.f32 %v1902, %v1918
    %1922 = vrot.lane.b32.xlu0 %v1920, 32
    %v1923 = vpop.permute.xlu0 %1922
    %1925 = vst.msk [vmem:[#allocation4 + $0x30] sm:$0xff] %vm222, %v1923
    %v1926 = vld [vmem:[#allocation2 + $0x38] sm:$0xff]
    %v1927 = vsel %vm222, %v1923, 0
    %1929 = vmatprep.subr.mxu0 0.0
    %1930 = vmatpush1.msra.mxu0 %v1203
    %1931 = vmatprep.subr.mxu0 0.0
    %1932 = vmatpush1.msra.mxu0 %v1204
    %1933 = vmatprep.subr.mxu0 0.0
    %1934 = vmatpush1.msra.mxu0 %v1205
    %1935 = vmatprep.subr.mxu0 0.0
    %1936 = vmatpush1.msra.mxu0 %v1206
    %1937 = vmatprep.subr.mxu0 0.0
    %1938 = vmatpush1.msra.mxu0 0.0
    %1939 = vmatprep.subr.mxu0 0.0
    %1940 = vmatpush1.msra.mxu0 0.0
    %1941 = vmatprep.subr.mxu0 0.0
    %1942 = vmatpush1.msra.mxu0 0.0
    %1943 = vmatprep.subr.mxu0 0.0
    %1944 = vmatpush1.msra.mxu0 0.0
    %1945 = vmatprep.subr.mxu0 0.0
    %1946 = vmatpush1.msra.mxu0 0.0
    %1947 = vmatprep.subr.mxu0 0.0
    %1948 = vmatpush1.msra.mxu0 0.0
    %1949 = vmatprep.subr.mxu0 0.0
    %1950 = vmatpush1.msra.mxu0 0.0
    %1951 = vmatprep.subr.mxu0 0.0
    %1952 = vmatpush1.msra.mxu0 0.0
    %1953 = vmatprep.subr.mxu0 0.0
    %1954 = vmatpush1.msra.mxu0 0.0
    %1955 = vmatprep.subr.mxu0 0.0
    %1956 = vmatpush1.msra.mxu0 0.0
    %1957 = vmatprep.subr.mxu0 0.0
    %1958 = vmatpush1.msra.mxu0 0.0
    %1959 = vmatprep.subr.mxu0 0.0
    %1960 = vmatpush1.msra.mxu0 0.0
    %1961 = vmatprep.subr.mxu0 0.0
    %1962 = vmatpush1.msra.mxu0 0.0
    %1963 = vmatprep.subr.mxu0 0.0
    %1964 = vmatpush1.msra.mxu0 0.0
    %1965 = vmatprep.subr.mxu0 0.0
    %1966 = vmatpush1.msra.mxu0 0.0
    %1967 = vmatprep.subr.mxu0 0.0
    %1968 = vmatpush1.msra.mxu0 0.0
    %1969 = vmatprep.subr.mxu0 0.0
    %1970 = vmatpush1.msra.mxu0 0.0
    %1971 = vmatprep.subr.mxu0 0.0
    %1972 = vmatpush1.msra.mxu0 0.0
    %1973 = vmatprep.subr.mxu0 0.0
    %1974 = vmatpush1.msra.mxu0 0.0
    %1975 = vmatprep.subr.mxu0 0.0
    %1976 = vmatpush1.msra.mxu0 0.0
    %1977 = vmatprep.subr.mxu0 0.0
    %1978 = vmatpush1.msra.mxu0 0.0
    %1979 = vmatprep.subr.mxu0 0.0
    %1980 = vmatpush1.msra.mxu0 0.0
    %1981 = vmatprep.subr.mxu0 0.0
    %1982 = vmatpush1.msra.mxu0 0.0
    %1983 = vmatprep.subr.mxu0 0.0
    %1984 = vmatpush1.msra.mxu0 0.0
    %1985 = vmatprep.subr.mxu0 0.0
    %1986 = vmatpush1.msra.mxu0 0.0
    %1987 = vmatprep.subr.mxu0 0.0
    %1988 = vmatpush1.msra.mxu0 0.0
    %1989 = vmatprep.subr.mxu0 0.0
    %1990 = vmatpush1.msra.mxu0 0.0
    %1991 = vmatprep.subr.mxu0 0.0
    %1992 = vmatpush1.msra.mxu0 0.0
    %1993 = vmatprep.mubr.f32.mxu0 0.0
    %1994 = vmatmul.mubr.f32.gmra.mrb[0].mxu0 %v1927
    %v1995 = vpop.f32.mrb[0].mxu0
    %v1996 = vadd.f32 0.0, %v1995
    %v1997 = vpop.f32.mrb[0].mxu0
    %1998 = vdwg.mxu0
    %v1999 = vadd.f32 %v1926, %v1996
    %v2000 = vxor.u32 %v1999, 2147483648
    %v2001 = vmul.f32 %v2000, 1.442695
    %v2002 = vpow.pop %v2001
    %v2003 = vadd.f32 %v2002, 1.0
    %v2004 = vrcp.pop %v2003
    %v2005 = vmul.f32 1.0, %v2004
    %v2006 = vtanh.pop %v1999
    %v2007 = vmul.f32 %v2005, %v1914
    %2009 = vrot.lane.b32.xlu0 %v2006, 64
    %v2010 = vpop.permute.xlu0 %2009
    %v2012 = vmul.f32 %v2005, %v2010
    %2014 = vrot.lane.b32.xlu0 %v2012, 32
    %v2015 = vpop.permute.xlu0 %2014
    %v2017 = vadd.f32 %v2007, %v2015
    %v2018 = vtanh.pop %v2017
    %2020 = vrot.lane.b32.xlu0 %v2018, 64
    %v2021 = vpop.permute.xlu0 %2020
    %v2023 = vmul.f32 %v2005, %v2021
    %2025 = vrot.lane.b32.xlu0 %v2023, 32
    %v2026 = vpop.permute.xlu0 %2025
    %2028 = vst.msk [vmem:[#allocation4 + $0x38] sm:$0xff] %vm222, %v2026
    %2029 = vst.msk [vmem:[%s10] sm:$0xff] %vm222, %v1044
    %s2030 = scalar_lea.vmem %s10, 8
    %2031 = vst.msk [vmem:[%s2030] sm:$0xff] %vm222, %v2026
    %2033 = vrot.lane.b32.xlu0 %v1035, 96
    %v2034 = vpop.permute.xlu0 %2033
    %2036 = vst.msk [vmem:[%s11] sm:$0xff] %vm222, %v2034
    %2038 = vrot.lane.b32.xlu0 %v2017, 96
    %v2039 = vpop.permute.xlu0 %2038
    %s2041 = scalar_lea.vmem %s11, 8
    %2042 = vst.msk [vmem:[%s2041] sm:$0xff] %vm222, %v2039
    %v2043 = vld [vmem:[#allocation4] sm:$0xff]
    %v2044 = vld [vmem:[#allocation4 + $0x8] sm:$0xff]
    %v2045 = vld [vmem:[#allocation4 + $0x10] sm:$0xff]
    %v2046 = vld [vmem:[#allocation4 + $0x18] sm:$0xff]
    %v2047 = vld [vmem:[#allocation4 + $0x20] sm:$0xff]
    %v2048 = vld [vmem:[#allocation4 + $0x28] sm:$0xff]
    %v2049 = vld [vmem:[#allocation4 + $0x30] sm:$0xff]
    %v2050 = vld [vmem:[#allocation4 + $0x38] sm:$0xff]
    %v2051 = vld [vmem:[%s7] sm:$0xff]
    %v2052 = vld [vmem:[%s7 + $0x8] sm:$0xff]
    %v2053 = vld [vmem:[%s7 + $0x10] sm:$0xff]
    %v2054 = vld [vmem:[%s7 + $0x18] sm:$0xff]
    %v2055 = vld [vmem:[#allocation7] sm:$0x1]
    %v2057 = vlaneseq
    %v2058 = vshrl.u32 %v2057, 7
    %v2059 = vsub.s32 0, %v2058
    %v2060 = vrot.slane %v2055, %v2059
    %v2063 = vsel %vm222, %v2043, 0
    %v2066 = vsel %vm222, %v2044, 0
    %v2069 = vsel %vm222, %v2045, 0
    %v2072 = vsel %vm222, %v2046, 0
    %v2075 = vsel %vm222, %v2047, 0
    %v2078 = vsel %vm222, %v2048, 0
    %v2081 = vsel %vm222, %v2049, 0
    %v2084 = vsel %vm222, %v2050, 0
    %2086 = vmatprep.subr.mxu0 0.0
    %2087 = vmatpush1.msra.mxu0 %v2051
    %2088 = vmatprep.subr.mxu0 0.0
    %2089 = vmatpush1.msra.mxu0 %v2052
    %2090 = vmatprep.subr.mxu0 0.0
    %2091 = vmatpush1.msra.mxu0 %v2053
    %2092 = vmatprep.subr.mxu0 0.0
    %2093 = vmatpush1.msra.mxu0 %v2054
    %2094 = vmatprep.subr.mxu0 0.0
    %2095 = vmatpush1.msra.mxu0 0.0
    %2096 = vmatprep.subr.mxu0 0.0
    %2097 = vmatpush1.msra.mxu0 0.0
    %2098 = vmatprep.subr.mxu0 0.0
    %2099 = vmatpush1.msra.mxu0 0.0
    %2100 = vmatprep.subr.mxu0 0.0
    %2101 = vmatpush1.msra.mxu0 0.0
    %2102 = vmatprep.subr.mxu0 0.0
    %2103 = vmatpush1.msra.mxu0 0.0
    %2104 = vmatprep.subr.mxu0 0.0
    %2105 = vmatpush1.msra.mxu0 0.0
    %2106 = vmatprep.subr.mxu0 0.0
    %2107 = vmatpush1.msra.mxu0 0.0
    %2108 = vmatprep.subr.mxu0 0.0
    %2109 = vmatpush1.msra.mxu0 0.0
    %2110 = vmatprep.subr.mxu0 0.0
    %2111 = vmatpush1.msra.mxu0 0.0
    %2112 = vmatprep.subr.mxu0 0.0
    %2113 = vmatpush1.msra.mxu0 0.0
    %2114 = vmatprep.subr.mxu0 0.0
    %2115 = vmatpush1.msra.mxu0 0.0
    %2116 = vmatprep.subr.mxu0 0.0
    %2117 = vmatpush1.msra.mxu0 0.0
    %2118 = vmatprep.subr.mxu0 0.0
    %2119 = vmatpush1.msra.mxu0 0.0
    %2120 = vmatprep.subr.mxu0 0.0
    %2121 = vmatpush1.msra.mxu0 0.0
    %2122 = vmatprep.subr.mxu0 0.0
    %2123 = vmatpush1.msra.mxu0 0.0
    %2124 = vmatprep.subr.mxu0 0.0
    %2125 = vmatpush1.msra.mxu0 0.0
    %2126 = vmatprep.subr.mxu0 0.0
    %2127 = vmatpush1.msra.mxu0 0.0
    %2128 = vmatprep.subr.mxu0 0.0
    %2129 = vmatpush1.msra.mxu0 0.0
    %2130 = vmatprep.subr.mxu0 0.0
    %2131 = vmatpush1.msra.mxu0 0.0
    %2132 = vmatprep.subr.mxu0 0.0
    %2133 = vmatpush1.msra.mxu0 0.0
    %2134 = vmatprep.subr.mxu0 0.0
    %2135 = vmatpush1.msra.mxu0 0.0
    %2136 = vmatprep.subr.mxu0 0.0
    %2137 = vmatpush1.msra.mxu0 0.0
    %2138 = vmatprep.subr.mxu0 0.0
    %2139 = vmatpush1.msra.mxu0 0.0
    %2140 = vmatprep.subr.mxu0 0.0
    %2141 = vmatpush1.msra.mxu0 0.0
    %2142 = vmatprep.subr.mxu0 0.0
    %2143 = vmatpush1.msra.mxu0 0.0
    %2144 = vmatprep.subr.mxu0 0.0
    %2145 = vmatpush1.msra.mxu0 0.0
    %2146 = vmatprep.subr.mxu0 0.0
    %2147 = vmatpush1.msra.mxu0 0.0
    %2148 = vmatprep.subr.mxu0 0.0
    %2149 = vmatpush1.msra.mxu0 0.0
    %2150 = vmatprep.mubr.f32.mxu0 0.0
    %2151 = vmatmul.mubr.f32.gmra.mrb[0].mxu0 %v2063
    %v2152 = vpop.f32.mrb[0].mxu0
    %v2153 = vadd.f32 %v2060, %v2152
    %v2154 = vpop.f32.mrb[0].mxu0
    %2155 = vmatprep.mubr.f32.mxu0 0.0
    %2156 = vmatmul.mubr.f32.gmra.mrb[0].mxu0 %v2066
    %v2157 = vpop.f32.mrb[0].mxu0
    %v2158 = vadd.f32 %v2060, %v2157
    %v2159 = vpop.f32.mrb[0].mxu0
    %2160 = vmatprep.mubr.f32.mxu0 0.0
    %2161 = vmatmul.mubr.f32.gmra.mrb[0].mxu0 %v2069
    %v2162 = vpop.f32.mrb[0].mxu0
    %v2163 = vadd.f32 %v2060, %v2162
    %v2164 = vpop.f32.mrb[0].mxu0
    %2165 = vmatprep.mubr.f32.mxu0 0.0
    %2166 = vmatmul.mubr.f32.gmra.mrb[0].mxu0 %v2072
    %v2167 = vpop.f32.mrb[0].mxu0
    %v2168 = vadd.f32 %v2060, %v2167
    %v2169 = vpop.f32.mrb[0].mxu0
    %2170 = vmatprep.mubr.f32.mxu0 0.0
    %2171 = vmatmul.mubr.f32.gmra.mrb[0].mxu0 %v2075
    %v2172 = vpop.f32.mrb[0].mxu0
    %v2173 = vadd.f32 %v2060, %v2172
    %v2174 = vpop.f32.mrb[0].mxu0
    %2175 = vmatprep.mubr.f32.mxu0 0.0
    %2176 = vmatmul.mubr.f32.gmra.mrb[0].mxu0 %v2078
    %v2177 = vpop.f32.mrb[0].mxu0
    %v2178 = vadd.f32 %v2060, %v2177
    %v2179 = vpop.f32.mrb[0].mxu0
    %2180 = vmatprep.mubr.f32.mxu0 0.0
    %2181 = vmatmul.mubr.f32.gmra.mrb[0].mxu0 %v2081
    %v2182 = vpop.f32.mrb[0].mxu0
    %v2183 = vadd.f32 %v2060, %v2182
    %v2184 = vpop.f32.mrb[0].mxu0
    %2185 = vmatprep.mubr.f32.mxu0 0.0
    %2186 = vmatmul.mubr.f32.gmra.mrb[0].mxu0 %v2084
    %v2187 = vpop.f32.mrb[0].mxu0
    %v2188 = vadd.f32 %v2060, %v2187
    %v2189 = vpop.f32.mrb[0].mxu0
    %2190 = vdwg.mxu0
    %v2191 = vlaneseq
    %v2192 = vand.u32 %v2191, 127
    %vm2193 = vcmp.lt.s32.totalorder %v2192, 20
    %v2194 = vsel %vm2193, %v2153, -1e+30
    %v2195 = vsel %vm2193, %v2158, -1e+30
    %v2196 = vsel %vm2193, %v2163, -1e+30
    %v2197 = vsel %vm2193, %v2168, -1e+30
    %v2198 = vsel %vm2193, %v2173, -1e+30
    %v2199 = vsel %vm2193, %v2178, -1e+30
    %v2200 = vsel %vm2193, %v2183, -1e+30
    %v2201 = vsel %vm2193, %v2188, -1e+30
    %2202 = vmax.xlane.f32.xlu0 %v2194
    %v2203 = vpop.xlane.xlu0 %2202
    %2204 = vmax.xlane.f32.xlu0 %v2195
    %v2205 = vpop.xlane.xlu0 %2204
    %2206 = vmax.xlane.f32.xlu0 %v2196
    %v2207 = vpop.xlane.xlu0 %2206
    %2208 = vmax.xlane.f32.xlu0 %v2197
    %v2209 = vpop.xlane.xlu0 %2208
    %2210 = vmax.xlane.f32.xlu0 %v2198
    %v2211 = vpop.xlane.xlu0 %2210
    %2212 = vmax.xlane.f32.xlu0 %v2199
    %v2213 = vpop.xlane.xlu0 %2212
    %2214 = vmax.xlane.f32.xlu0 %v2200
    %v2215 = vpop.xlane.xlu0 %2214
    %2216 = vmax.xlane.f32.xlu0 %v2201
    %v2217 = vpop.xlane.xlu0 %2216
    %v2218 = vsub.f32 %v2194, %v2203
    %v2219 = vsub.f32 %v2195, %v2205
    %v2220 = vsub.f32 %v2196, %v2207
    %v2221 = vsub.f32 %v2197, %v2209
    %v2222 = vsub.f32 %v2198, %v2211
    %v2223 = vsub.f32 %v2199, %v2213
    %v2224 = vsub.f32 %v2200, %v2215
    %v2225 = vsub.f32 %v2201, %v2217
    %v2226 = vmul.f32 %v2218, 1.442695
    %v2227 = vpow.pop %v2226
    %v2228 = vmul.f32 %v2219, 1.442695
    %v2229 = vpow.pop %v2228
    %v2230 = vmul.f32 %v2220, 1.442695
    %v2231 = vpow.pop %v2230
    %v2232 = vmul.f32 %v2221, 1.442695
    %v2233 = vpow.pop %v2232
    %v2234 = vmul.f32 %v2222, 1.442695
    %v2235 = vpow.pop %v2234
    %v2236 = vmul.f32 %v2223, 1.442695
    %v2237 = vpow.pop %v2236
    %v2238 = vmul.f32 %v2224, 1.442695
    %v2239 = vpow.pop %v2238
    %v2240 = vmul.f32 %v2225, 1.442695
    %v2241 = vpow.pop %v2240
    %2242 = vadd.xlane.f32.xlu0 %v2227
    %v2243 = vpop.xlane.xlu0 %2242
    %2244 = vadd.xlane.f32.xlu0 %v2229
    %v2245 = vpop.xlane.xlu0 %2244
    %2246 = vadd.xlane.f32.xlu0 %v2231
    %v2247 = vpop.xlane.xlu0 %2246
    %2248 = vadd.xlane.f32.xlu0 %v2233
    %v2249 = vpop.xlane.xlu0 %2248
    %2250 = vadd.xlane.f32.xlu0 %v2235
    %v2251 = vpop.xlane.xlu0 %2250
    %2252 = vadd.xlane.f32.xlu0 %v2237
    %v2253 = vpop.xlane.xlu0 %2252
    %2254 = vadd.xlane.f32.xlu0 %v2239
    %v2255 = vpop.xlane.xlu0 %2254
    %2256 = vadd.xlane.f32.xlu0 %v2241
    %v2257 = vpop.xlane.xlu0 %2256
    %v2258 = vrcp.pop %v2243
    %v2259 = vrcp.pop %v2245
    %v2260 = vrcp.pop %v2247
    %v2261 = vrcp.pop %v2249
    %v2262 = vrcp.pop %v2251
    %v2263 = vrcp.pop %v2253
    %v2264 = vrcp.pop %v2255
    %v2265 = vrcp.pop %v2257
    %v2266 = vmul.f32 %v2227, %v2258
    %v2267 = vmul.f32 %v2229, %v2259
    %v2268 = vmul.f32 %v2231, %v2260
    %v2269 = vmul.f32 %v2233, %v2261
    %v2270 = vmul.f32 %v2235, %v2262
    %v2271 = vmul.f32 %v2237, %v2263
    %v2272 = vmul.f32 %v2239, %v2264
    %v2273 = vmul.f32 %v2241, %v2265
    %v2274 = vmul.f32 %v2153, 1.442695
    %v2275 = vpow.pop %v2274
    %v2276 = vmul.f32 %v2158, 1.442695
    %v2277 = vpow.pop %v2276
    %v2278 = vmul.f32 %v2163, 1.442695
    %v2279 = vpow.pop %v2278
    %v2280 = vmul.f32 %v2168, 1.442695
    %v2281 = vpow.pop %v2280
    %v2282 = vmul.f32 %v2173, 1.442695
    %v2283 = vpow.pop %v2282
    %v2284 = vmul.f32 %v2178, 1.442695
    %v2285 = vpow.pop %v2284
    %v2286 = vmul.f32 %v2183, 1.442695
    %v2287 = vpow.pop %v2286
    %v2288 = vmul.f32 %v2188, 1.442695
    %v2289 = vpow.pop %v2288
    %v2290 = vtanh.pop %v2153
    %v2291 = vtanh.pop %v2158
    %v2292 = vtanh.pop %v2163
    %v2293 = vtanh.pop %v2168
    %v2294 = vtanh.pop %v2173
    %v2295 = vtanh.pop %v2178
    %v2296 = vtanh.pop %v2183
    %v2297 = vtanh.pop %v2188
    %v2298 = vxor.u32 %v2153, 2147483648
    %v2299 = vxor.u32 %v2158, 2147483648
    %v2300 = vxor.u32 %v2163, 2147483648
    %v2301 = vxor.u32 %v2168, 2147483648
    %v2302 = vxor.u32 %v2173, 2147483648
    %v2303 = vxor.u32 %v2178, 2147483648
    %v2304 = vxor.u32 %v2183, 2147483648
    %v2305 = vxor.u32 %v2188, 2147483648
    %v2306 = vmul.f32 %v2298, 1.442695
    %v2307 = vpow.pop %v2306
    %v2308 = vmul.f32 %v2299, 1.442695
    %v2309 = vpow.pop %v2308
    %v2310 = vmul.f32 %v2300, 1.442695
    %v2311 = vpow.pop %v2310
    %v2312 = vmul.f32 %v2301, 1.442695
    %v2313 = vpow.pop %v2312
    %v2314 = vmul.f32 %v2302, 1.442695
    %v2315 = vpow.pop %v2314
    %v2316 = vmul.f32 %v2303, 1.442695
    %v2317 = vpow.pop %v2316
    %v2318 = vmul.f32 %v2304, 1.442695
    %v2319 = vpow.pop %v2318
    %v2320 = vmul.f32 %v2305, 1.442695
    %v2321 = vpow.pop %v2320
    %v2322 = vadd.f32 %v2307, 1.0
    %v2323 = vadd.f32 %v2309, 1.0
    %v2324 = vadd.f32 %v2311, 1.0
    %v2325 = vadd.f32 %v2313, 1.0
    %v2326 = vadd.f32 %v2315, 1.0
    %v2327 = vadd.f32 %v2317, 1.0
    %v2328 = vadd.f32 %v2319, 1.0
    %v2329 = vadd.f32 %v2321, 1.0
    %v2330 = vrcp.pop %v2322
    %v2331 = vmul.f32 1.0, %v2330
    %v2332 = vrcp.pop %v2323
    %v2333 = vmul.f32 1.0, %v2332
    %v2334 = vrcp.pop %v2324
    %v2335 = vmul.f32 1.0, %v2334
    %v2336 = vrcp.pop %v2325
    %v2337 = vmul.f32 1.0, %v2336
    %v2338 = vrcp.pop %v2326
    %v2339 = vmul.f32 1.0, %v2338
    %v2340 = vrcp.pop %v2327
    %v2341 = vmul.f32 1.0, %v2340
    %v2342 = vrcp.pop %v2328
    %v2343 = vmul.f32 1.0, %v2342
    %v2344 = vrcp.pop %v2329
    %v2345 = vmul.f32 1.0, %v2344
    %vm2346 = vcmp.lt.s32.totalorder %v2192, 60
    %vm2347 = vcmp.lt.s32.totalorder %v2192, 100
    %vm2348 = vcmp.lt.s32.totalorder %v2192, 120
    %v2349 = vsel %vm2348, %v2290, %v2331
    %v2350 = vsel %vm2348, %v2291, %v2333
    %v2351 = vsel %vm2348, %v2292, %v2335
    %v2352 = vsel %vm2348, %v2293, %v2337
    %v2353 = vsel %vm2348, %v2294, %v2339
    %v2354 = vsel %vm2348, %v2295, %v2341
    %v2355 = vsel %vm2348, %v2296, %v2343
    %v2356 = vsel %vm2348, %v2297, %v2345
    %v2357 = vsel %vm2347, %v2275, %v2349
    %v2358 = vsel %vm2347, %v2277, %v2350
    %v2359 = vsel %vm2347, %v2279, %v2351
    %v2360 = vsel %vm2347, %v2281, %v2352
    %v2361 = vsel %vm2347, %v2283, %v2353
    %v2362 = vsel %vm2347, %v2285, %v2354
    %v2363 = vsel %vm2347, %v2287, %v2355
    %v2364 = vsel %vm2347, %v2289, %v2356
    %v2365 = vsel %vm2346, %v2153, %v2357
    %v2366 = vsel %vm2346, %v2158, %v2358
    %v2367 = vsel %vm2346, %v2163, %v2359
    %v2368 = vsel %vm2346, %v2168, %v2360
    %v2369 = vsel %vm2346, %v2173, %v2361
    %v2370 = vsel %vm2346, %v2178, %v2362
    %v2371 = vsel %vm2346, %v2183, %v2363
    %v2372 = vsel %vm2346, %v2188, %v2364
    %v2373 = vsel %vm2193, %v2266, %v2365
    %v2374 = vsel %vm2193, %v2267, %v2366
    %v2375 = vsel %vm2193, %v2268, %v2367
    %v2376 = vsel %vm2193, %v2269, %v2368
    %v2377 = vsel %vm2193, %v2270, %v2369
    %v2378 = vsel %vm2193, %v2271, %v2370
    %v2379 = vsel %vm2193, %v2272, %v2371
    %v2380 = vsel %vm2193, %v2273, %v2372
    %2381 = vst [vmem:[%s9] sm:$0xff] %v2373
    %2382 = vst [vmem:[%s9 + $0x8] sm:$0xff] %v2374
    %2383 = vst [vmem:[%s9 + $0x10] sm:$0xff] %v2375
    %2384 = vst [vmem:[%s9 + $0x18] sm:$0xff] %v2376
    %2385 = vst [vmem:[%s9 + $0x20] sm:$0xff] %v2377
    %2386 = vst [vmem:[%s9 + $0x28] sm:$0xff] %v2378
    %2387 = vst [vmem:[%s9 + $0x30] sm:$0xff] %v2379
    %2388 = vst [vmem:[%s9 + $0x38] sm:$0xff] %v2380
    // Predicated region
    $region46: #{handwriting_mdn_forward.1} parent=1 // pred_check
      _
    $region47: #{handwriting_mdn_forward.1} parent=1 // pred_check_branch
      %2390 = sbr.rel (0) target = $region49
    $region48: #{handwriting_mdn_forward.1} parent=1 // pred_region
      _
    $region49: #{handwriting_mdn_forward.1} parent=1 // pred_fallthru
      _
    // Predicated region
    $region50: #{handwriting_mdn_forward.1} parent=1 // pred_check
      _
    $region51: #{handwriting_mdn_forward.1} parent=1 // pred_check_branch
      %2392 = sbr.rel (0) target = $region53
    $region52: #{handwriting_mdn_forward.1} parent=1 // pred_region
      _
    $region53: #{handwriting_mdn_forward.1} parent=1 // pred_fallthru
      _
    // Predicated region
    $region54: #{handwriting_mdn_forward.1} parent=1 // pred_check
      _
    $region55: #{handwriting_mdn_forward.1} parent=1 // pred_check_branch
      %2394 = sbr.rel (0) target = $region57
    $region56: #{handwriting_mdn_forward.1} parent=1 // pred_region
      _
    $region57: #{handwriting_mdn_forward.1} parent=1 // pred_fallthru
      _
    // Predicated region
    $region58: #{handwriting_mdn_forward.1} parent=1 // pred_check
      _
    $region59: #{handwriting_mdn_forward.1} parent=1 // pred_check_branch
      %2396 = sbr.rel (0) target = $region61
    $region60: #{handwriting_mdn_forward.1} parent=1 // pred_region
      _
    $region61: #{handwriting_mdn_forward.1} parent=1 // pred_fallthru
      _
    // Predicated region
    $region62: #{handwriting_mdn_forward.1} parent=1 // pred_check
      _
    $region63: #{handwriting_mdn_forward.1} parent=1 // pred_check_branch
      %2398 = sbr.rel (0) target = $region65
    $region64: #{handwriting_mdn_forward.1} parent=1 // pred_region
      _
    $region65: #{handwriting_mdn_forward.1} parent=1 // pred_fallthru
      _
    // Predicated region
    $region66: #{handwriting_mdn_forward.1} parent=1 // pred_check
      _
    $region67: #{handwriting_mdn_forward.1} parent=1 // pred_check_branch
      %2400 = sbr.rel (0) target = $region69
    $region68: #{handwriting_mdn_forward.1} parent=1 // pred_region
      _
    $region69: #{handwriting_mdn_forward.1} parent=1 // pred_fallthru
      _
    %2401 = vsyncpa [#allocation6], 1
    %2402 = vsyncpa [#allocation8], 1

</llo_original>
